<compile_context>
chip_gen: v5e
topology: v5e:2x2
jax: 0.10.0
libtpu: 0.0.40
codegen_flags: <defaults>
</compile_context>

<pallas_src>
import functools
import numpy as np
import jax
import jax.numpy as jnp
from jax.experimental import pallas as pl
from jax.experimental.pallas import tpu as pltpu

_INV_LN10 = np.float32(1.0 / np.log(10.0))


# ----------------------------------------------------------------------------
# Parameter construction (plain numpy / JAX glue, deterministic)
# ----------------------------------------------------------------------------
def make_sinc_filters(out_channels=16, kernel_size=33, sample_rate=16000.0,
                      min_low_hz=50.0, min_band_hz=50.0):
    """Canonical SincConv_fast filterbank (Ravanelli & Bengio), mel init."""
    def to_mel(hz):
        return 2595.0 * np.log10(1.0 + hz / 700.0)

    def to_hz(mel):
        return 700.0 * (10.0 ** (mel / 2595.0) - 1.0)

    low_hz = 30.0
    high_hz = sample_rate / 2.0 - (min_low_hz + min_band_hz)
    mel = np.linspace(to_mel(low_hz), to_mel(high_hz), out_channels + 1)
    hz = to_hz(mel)
    low_hz_ = hz[:-1][:, None]
    band_hz_ = np.diff(hz)[:, None]

    n_lin = np.linspace(0, (kernel_size / 2) - 1, num=int(kernel_size / 2))
    window_ = 0.54 - 0.46 * np.cos(2.0 * np.pi * n_lin / kernel_size)
    n_half = (kernel_size - 1) / 2.0
    n_ = 2.0 * np.pi * np.arange(-n_half, 0.0)[None, :] / sample_rate

    low = min_low_hz + np.abs(low_hz_)
    high = np.clip(low + min_band_hz + np.abs(band_hz_), min_low_hz, sample_rate / 2.0)
    band = (high - low)[:, 0]

    f_low = low @ n_
    f_high = high @ n_
    bp_left = ((np.sin(f_high) - np.sin(f_low)) / (n_ / 2.0)) * window_
    bp_center = 2.0 * band[:, None]
    bp_right = np.flip(bp_left, axis=1)
    band_pass = np.concatenate([bp_left, bp_center, bp_right], axis=1)
    band_pass = band_pass / (2.0 * band[:, None])
    return jnp.asarray(band_pass.astype(np.float32))      # (out_channels, kernel_size)


def bn_affine(key, channels, eps=1e-5):
    """Fold eval-mode BatchNorm1d params into per-channel scale/shift, shape (C,1)."""
    k1, k2, k3, k4 = jax.random.split(key, 4)
    gamma = 1.0 + 0.1 * jax.random.normal(k1, (channels,), dtype=jnp.float32)
    beta = 0.1 * jax.random.normal(k2, (channels,), dtype=jnp.float32)
    mean = 0.1 * jax.random.normal(k3, (channels,), dtype=jnp.float32)
    var = 1.0 + 0.1 * jax.random.uniform(k4, (channels,), dtype=jnp.float32)
    scale = gamma / jnp.sqrt(var + eps)
    shift = beta - mean * scale
    return scale.reshape(channels, 1), shift.reshape(channels, 1)


def make_ds_params(key, cin, cout, k):
    kd, kbd, kp, kbp, kbn = jax.random.split(key, 5)
    wd = 0.3 * jax.random.normal(kd, (cin, k), dtype=jnp.float32)     # depthwise weight
    bd = 0.05 * jax.random.normal(kbd, (cin, 1), dtype=jnp.float32)   # depthwise bias
    wp = 0.2 * jax.random.normal(kp, (cout, cin), dtype=jnp.float32)  # 1x1 conv weight
    bp = 0.05 * jax.random.normal(kbp, (cout, 1), dtype=jnp.float32)  # 1x1 conv bias
    sc, sh = bn_affine(kbn, cout)
    return wd, bd, wp, bp, sc, sh


def _phase_split_1ch(x, s):
    """(B, 1, L) -> (B, S, ceil(L/S)) with out[b, q, m] = x[b, 0, S*m + q].

    Cheap wrapper-side XLA reshape/transpose so every in-kernel time access is a
    unit-stride slice of one phase row.
    """
    b, c, length = x.shape
    assert c == 1
    lm = -(-length // s)
    pad = lm * s - length
    if pad:
        x = jnp.pad(x, ((0, 0), (0, 0), (0, pad)))
    return x[:, 0, :].reshape(b, lm, s).transpose(0, 2, 1)


# ----------------------------------------------------------------------------
# Fused Pallas kernel: sinc layer + two depthwise/pointwise layers, one batch
# element per grid step.
# ----------------------------------------------------------------------------
def _fused_sincnet_kernel(
        xph_ref,                                   # (S, Lm)  phase-split input
        w2_ref, bn0s_ref, bn0b_ref,                # (P0*C0, R0), (P0*C0, 1) x2
        wd1_ref, bd1_ref, wp1_ref, bp1_ref, bn1s_ref, bn1b_ref,
        wd2_ref, bd2_ref, wp2_ref, bp2_ref, bn2s_ref, bn2b_ref,
        o_ref,                                     # (C2, Ly2)
        t_ref, y0_ref, dw1_ref, u1_ref, y1_ref, d2_ref, u2_ref,   # VMEM scratch
        *, P0, NB0, s1, P1, NB1, s2, P2):
    S = xph_ref.shape[0]
    R0, Ly0 = t_ref.shape
    C0 = y0_ref.shape[0]
    K1 = wd1_ref.shape[1]
    C1, Ly1 = y1_ref.shape
    K2 = wd2_ref.shape[1]
    Ly2 = o_ref.shape[1]
    W0 = Ly0 // NB0                    # y0 phase-block width
    M1 = Ly1 // NB1                    # y1 phase-block width

    # ---- Layer 0: SincConv1d -> LogAbs -> BatchNorm1d -> AvgPool1d(P0) ------
    # im2col:  T[r, W0*ss + m] = x[r + P0*ss + S*m]   (columns NB0-phase-blocked
    # so the layer-0 output lands directly in the layout layer 1 needs).
    # Built from maximal unit-stride runs: <=S sublanes x W0 lanes per copy.
    for ss in range(NB0):
        base = P0 * ss
        r = 0
        while r < R0:
            off = r + base
            m0, s0 = off // S, off % S
            n = min(R0 - r, S - s0)
            t_ref[r:r + n, W0 * ss:W0 * ss + W0] = xph_ref[s0:s0 + n, m0:m0 + W0]
            r += n

    # One MXU dot for all pool phases: w2 row block p is the filterbank shifted
    # by p, so (w2 @ T)[p*C0+c, col] = conv(x)[c, P0*j0(col) + p].
    z = jnp.dot(w2_ref[...], t_ref[...], preferred_element_type=jnp.float32)
    z = jnp.log(jnp.abs(z) + 1.0) * _INV_LN10      # LogAbs: log10(|x| + 1)
    z = z * bn0s_ref[...] + bn0b_ref[...]          # BatchNorm1d (eval, folded)
    acc0 = z[0:C0, :]
    for p in range(1, P0):                         # AvgPool1d(P0): half-row adds
        acc0 = acc0 + z[p * C0:(p + 1) * C0, :]
    y0_ref[...] = acc0 * (1.0 / P0)
    # y0_ref[c, W0*ss + m] == layer-0 output at time NB0*m + ss.

    # ---- Layer 1: depthwise(K1, stride s1) -> 1x1 -> ReLU -> BN -> AvgPool(P1)
    # dw1 column (Ly1*p1 + M1*q2 + m) holds the depthwise output at
    # t1 = P1*(NB1*m + q2) + p1 ; each tap reads y0 at NB0*m + idx (unit stride).
    for p1 in range(P1):
        for q2 in range(NB1):
            acc = jnp.zeros((C0, M1), jnp.float32)
            for k1 in range(K1):
                idx = s1 * (P1 * q2 + p1) + k1
                ss, m0 = idx % NB0, idx // NB0
                acc = acc + wd1_ref[:, k1:k1 + 1] * \
                    y0_ref[:, W0 * ss + m0:W0 * ss + m0 + M1]
            col = Ly1 * p1 + M1 * q2
            dw1_ref[:, col:col + M1] = acc
    dw1 = dw1_ref[...] + bd1_ref[...]                               # depthwise bias
    u = jnp.dot(wp1_ref[...], dw1, preferred_element_type=jnp.float32) + bp1_ref[...]
    u = jnp.maximum(u, 0.0)                                         # ReLU
    u1_ref[...] = u * bn1s_ref[...] + bn1b_ref[...]                 # BatchNorm1d
    acc1 = u1_ref[:, 0:Ly1]
    for p in range(1, P1):                                          # AvgPool1d(P1)
        acc1 = acc1 + u1_ref[:, p * Ly1:(p + 1) * Ly1]
    y1_ref[...] = acc1 * (1.0 / P1)
    # y1_ref[o, M1*q2 + m] == layer-1 output at time NB1*m + q2.

    # ---- Layer 2: depthwise(K2, stride s2) -> 1x1 -> ReLU -> BN -> AvgPool(P2)
    for p2 in range(P2):
        acc = jnp.zeros((C1, Ly2), jnp.float32)
        for k2 in range(K2):
            idx = s2 * p2 + k2
            q, m0 = idx % NB1, idx // NB1
            acc = acc + wd2_ref[:, k2:k2 + 1] * \
                y1_ref[:, M1 * q + m0:M1 * q + m0 + Ly2]
        d2_ref[:, Ly2 * p2:Ly2 * p2 + Ly2] = acc
    d2 = d2_ref[...] + bd2_ref[...]
    v = jnp.dot(wp2_ref[...], d2, preferred_element_type=jnp.float32) + bp2_ref[...]
    v = jnp.maximum(v, 0.0)
    u2_ref[...] = v * bn2s_ref[...] + bn2b_ref[...]
    acc2 = u2_ref[:, 0:Ly2]
    for p in range(1, P2):
        acc2 = acc2 + u2_ref[:, p * Ly2:(p + 1) * Ly2]
    o_ref[...] = acc2 * (1.0 / P2)


# ----------------------------------------------------------------------------
# Wrapper (phase-split, stacked filterbank, pallas_call plumbing)
# ----------------------------------------------------------------------------
def sincnet_fused_forward(x, w_sinc, bn0_s, bn0_b, layer1, layer2, *,
                          pool0=2, pool1=2, pool2=2, stride1=2, stride2=1):
    """Fused forward of _Layer(sinc) -> _Layer(ds, stride1) -> _Layer(ds, stride2)."""
    B, cin, L0 = x.shape
    assert cin == 1, "SincConv1d expects a single input channel"
    C0, K0 = w_sinc.shape
    wd1, bd1, wp1, bp1, bn1_s, bn1_b = layer1
    wd2, bd2, wp2, bp2, bn2_s, bn2_b = layer2
    C1, K1 = wp1.shape[0], wd1.shape[1]
    C2, K2 = wp2.shape[0], wd2.shape[1]
    assert wd1.shape[0] == C0 and wp1.shape[1] == C0
    assert wd2.shape[0] == C1 and wp2.shape[1] == C1
    P0, P1, P2, s1, s2 = pool0, pool1, pool2, stride1, stride2

    # Output lengths of each _Layer (PyTorch conv / AvgPool floor semantics).
    Ly0 = (L0 - K0 + 1) // P0
    Ly1 = ((Ly0 - K1) // s1 + 1) // P1
    Ly2 = ((Ly1 - K2) // s2 + 1) // P2

    # Phase-blocking factors so that every tap read in the kernel is unit-stride.
    NB1 = s2 * P2                  # y1 column-block factor (layer-2 access stride)
    NB0 = s1 * P1 * NB1            # y0 column-block factor (layer-1 access stride)
    S = P0 * NB0                   # input phase-split factor (sinc conv stride 1)
    R0 = K0 + P0 - 1               # im2col rows: filter tap + layer-0 pool phase
    assert Ly0 % NB0 == 0 and Ly1 % NB1 == 0, \
        "time extents must tile the phase blocks for this fused kernel"
    W0, M1 = Ly0 // NB0, Ly1 // NB1

    xph = _phase_split_1ch(x, S)                                   # (B, S, Lm)
    Lm = xph.shape[-1]
    # In-bounds conditions for the unit-stride block reads inside the kernel.
    assert (R0 - 1 + P0 * (NB0 - 1)) // S + W0 <= Lm
    assert (s1 * (P1 * (NB1 - 1) + (P1 - 1)) + K1 - 1) // NB0 + M1 <= W0
    assert (s2 * (P2 - 1) + K2 - 1) // NB1 + Ly2 <= M1

    # Stack the sinc filterbank per pool phase:  w2[p*C0+c, p:p+K0] = w_sinc[c].
    w2 = jnp.zeros((P0 * C0, R0), jnp.float32)
    for p in range(P0):
        w2 = w2.at[p * C0:(p + 1) * C0, p:p + K0].set(w_sinc)
    bn0_s2 = jnp.tile(bn0_s, (P0, 1))
    bn0_b2 = jnp.tile(bn0_b, (P0, 1))

    kernel = functools.partial(_fused_sincnet_kernel, P0=P0, NB0=NB0, s1=s1,
                               P1=P1, NB1=NB1, s2=s2, P2=P2)
    const = lambda b: (0, 0)
    return pl.pallas_call(
        kernel,
        out_shape=jax.ShapeDtypeStruct((B, C2, Ly2), jnp.float32),
        grid=(B,),
        in_specs=[
            pl.BlockSpec((None, S, Lm), lambda b: (b, 0, 0)),      # phase-split x
            pl.BlockSpec((P0 * C0, R0), const),                    # stacked sinc filters
            pl.BlockSpec((P0 * C0, 1), const),                     # bn0 scale (tiled)
            pl.BlockSpec((P0 * C0, 1), const),                     # bn0 shift (tiled)
            pl.BlockSpec((C0, K1), const),                         # wd1
            pl.BlockSpec((C0, 1), const),                          # bd1
            pl.BlockSpec((C1, C0), const),                         # wp1
            pl.BlockSpec((C1, 1), const),                          # bp1
            pl.BlockSpec((C1, 1), const),                          # bn1 scale
            pl.BlockSpec((C1, 1), const),                          # bn1 shift
            pl.BlockSpec((C1, K2), const),                         # wd2
            pl.BlockSpec((C1, 1), const),                          # bd2
            pl.BlockSpec((C2, C1), const),                         # wp2
            pl.BlockSpec((C2, 1), const),                          # bp2
            pl.BlockSpec((C2, 1), const),                          # bn2 scale
            pl.BlockSpec((C2, 1), const),                          # bn2 shift
        ],
        out_specs=pl.BlockSpec((None, C2, Ly2), lambda b: (b, 0, 0)),
        scratch_shapes=[
            pltpu.VMEM((R0, Ly0), jnp.float32),        # layer-0 im2col T
            pltpu.VMEM((C0, Ly0), jnp.float32),        # y0  (NB0-phase-blocked cols)
            pltpu.VMEM((C0, P1 * Ly1), jnp.float32),   # layer-1 depthwise output
            pltpu.VMEM((C1, P1 * Ly1), jnp.float32),   # layer-1 pre-pool activations
            pltpu.VMEM((C1, Ly1), jnp.float32),        # y1  (NB1-phase-blocked cols)
            pltpu.VMEM((C1, P2 * Ly2), jnp.float32),   # layer-2 depthwise output
            pltpu.VMEM((C2, P2 * Ly2), jnp.float32),   # layer-2 pre-pool activations
        ],
        compiler_params=pltpu.CompilerParams(
            dimension_semantics=("parallel",),   # 1 batch element per TC on v7x
        ),
    )(xph, w2, bn0_s2, bn0_b2, wd1, bd1, wp1, bp1, bn1_s, bn1_b,
      wd2, bd2, wp2, bp2, bn2_s, bn2_b)


# ----------------------------------------------------------------------------
# Pure-JAX references (per-_Layer, for the numerical sanity check)
# ----------------------------------------------------------------------------
def ref_sinc_layer(x, w, sc, sh, *, pool):
    B, _, Lin = x.shape
    Cout, K = w.shape
    Lc = Lin - K + 1
    acc = jnp.zeros((B, Cout, Lc), jnp.float32)
    for k in range(K):
        acc = acc + w[:, k][None, :, None] * x[:, 0:1, k:k + Lc]
    y = jnp.log10(jnp.abs(acc) + 1.0)
    y = y * sc[None] + sh[None]
    Lp = Lc // pool
    return y[:, :, :pool * Lp].reshape(B, Cout, Lp, pool).mean(-1)


def ref_ds_layer(x, wd, bd, wp, bp, sc, sh, *, stride, pool):
    B, Cin, Lin = x.shape
    Cout = wp.shape[0]
    K = wd.shape[1]
    Ld = (Lin - K) // stride + 1
    acc = jnp.zeros((B, Cin, Ld), jnp.float32)
    for k in range(K):
        acc = acc + wd[:, k][None, :, None] * x[:, :, k:k + stride * (Ld - 1) + 1:stride]
    acc = acc + bd[None]
    u = jnp.einsum("oc,bcl->bol", wp, acc) + bp[None]
    u = jnp.maximum(u, 0.0)
    u = u * sc[None] + sh[None]
    Lp = Ld // pool
    return u[:, :, :pool * Lp].reshape(B, Cout, Lp, pool).mean(-1)


# ----------------------------------------------------------------------------
# Main
# ----------------------------------------------------------------------------
if __name__ == "__main__":
    key = jax.random.PRNGKey(0)
    k_x, k_bn0, k_l1, k_l2 = jax.random.split(key, 4)

    # Small shapes: batch=2, 1 input channel, 288 time samples.
    B, L0 = 2, 288
    x = 0.1 * jax.random.normal(k_x, (B, 1, L0), dtype=jnp.float32)

    # _Layer(use_sinc=True):  SincConv1d(16, K=33) -> LogAbs -> BN -> AvgPool(2)
    w_sinc = make_sinc_filters(out_channels=16, kernel_size=33)
    bn0_s, bn0_b = bn_affine(k_bn0, 16)
    # _Layer(use_sinc=False): depthwise(16, K=9, stride=2) -> 1x1(16->32) -> ReLU -> BN -> AvgPool(2)
    l1 = make_ds_params(k_l1, 16, 32, 9)
    # _Layer(use_sinc=False): depthwise(32, K=5, stride=1) -> 1x1(32->32) -> ReLU -> BN -> AvgPool(2)
    l2 = make_ds_params(k_l2, 32, 32, 5)

    y = sincnet_fused_forward(x, w_sinc, bn0_s, bn0_b, l1, l2,
                              pool0=2, pool1=2, pool2=2, stride1=2, stride2=1)
    y = jax.block_until_ready(y)                                    # (2, 32, 13)

    # Numerical sanity check against plain-JAX per-layer references.
    r0 = ref_sinc_layer(x, w_sinc, bn0_s, bn0_b, pool=2)             # (2, 16, 128)
    r1 = ref_ds_layer(r0, *l1, stride=2, pool=2)                     # (2, 32, 30)
    r2 = ref_ds_layer(r1, *l2, stride=1, pool=2)                     # (2, 32, 13)
    np.testing.assert_allclose(np.asarray(y), np.asarray(r2), rtol=2e-4, atol=2e-4)

    assert y.shape == (B, 32, 13)
    assert bool(jnp.all(jnp.isfinite(y)))
    print("KERNEL_OK")
</pallas_src>

<mosaic_0001>
module attributes {stable_mosaic.version = 11 : i64} {
  func.func @_fused_sincnet_kernel(%arg0: i32, %arg1: memref<1x16x18xf32, #tpu.memory_space<vmem>>, %arg2: memref<32x34xf32, #tpu.memory_space<vmem>>, %arg3: memref<32x1xf32, #tpu.memory_space<vmem>>, %arg4: memref<32x1xf32, #tpu.memory_space<vmem>>, %arg5: memref<16x9xf32, #tpu.memory_space<vmem>>, %arg6: memref<16x1xf32, #tpu.memory_space<vmem>>, %arg7: memref<32x16xf32, #tpu.memory_space<vmem>>, %arg8: memref<32x1xf32, #tpu.memory_space<vmem>>, %arg9: memref<32x1xf32, #tpu.memory_space<vmem>>, %arg10: memref<32x1xf32, #tpu.memory_space<vmem>>, %arg11: memref<32x5xf32, #tpu.memory_space<vmem>>, %arg12: memref<32x1xf32, #tpu.memory_space<vmem>>, %arg13: memref<32x32xf32, #tpu.memory_space<vmem>>, %arg14: memref<32x1xf32, #tpu.memory_space<vmem>>, %arg15: memref<32x1xf32, #tpu.memory_space<vmem>>, %arg16: memref<32x1xf32, #tpu.memory_space<vmem>>, %arg17: memref<1x32x13xf32, #tpu.memory_space<vmem>>, %arg18: memref<34x128xf32, #tpu.memory_space<vmem>>, %arg19: memref<16x128xf32, #tpu.memory_space<vmem>>, %arg20: memref<16x60xf32, #tpu.memory_space<vmem>>, %arg21: memref<32x60xf32, #tpu.memory_space<vmem>>, %arg22: memref<32x30xf32, #tpu.memory_space<vmem>>, %arg23: memref<32x26xf32, #tpu.memory_space<vmem>>, %arg24: memref<32x26xf32, #tpu.memory_space<vmem>>) attributes {dimension_semantics = [#tpu.dimension_semantics<parallel>], iteration_bounds = array<i64: 2>, scalar_prefetch = 0 : i64, scratch_operands = 7 : i64, tpu.core_type = #tpu.core_type<tc>, window_params = [{transform_indices = @transform_0, window_bounds = array<i64: 1, 16, 18>}, {pipeline_mode = #tpu.pipeline_mode<synchronous>, transform_indices = @transform_1, window_bounds = array<i64: 32, 34>}, {pipeline_mode = #tpu.pipeline_mode<synchronous>, transform_indices = @transform_2, window_bounds = array<i64: 32, 1>}, {pipeline_mode = #tpu.pipeline_mode<synchronous>, transform_indices = @transform_3, window_bounds = array<i64: 32, 1>}, {pipeline_mode = #tpu.pipeline_mode<synchronous>, transform_indices = @transform_4, window_bounds = array<i64: 16, 9>}, {pipeline_mode = #tpu.pipeline_mode<synchronous>, transform_indices = @transform_5, window_bounds = array<i64: 16, 1>}, {pipeline_mode = #tpu.pipeline_mode<synchronous>, transform_indices = @transform_6, window_bounds = array<i64: 32, 16>}, {pipeline_mode = #tpu.pipeline_mode<synchronous>, transform_indices = @transform_7, window_bounds = array<i64: 32, 1>}, {pipeline_mode = #tpu.pipeline_mode<synchronous>, transform_indices = @transform_8, window_bounds = array<i64: 32, 1>}, {pipeline_mode = #tpu.pipeline_mode<synchronous>, transform_indices = @transform_9, window_bounds = array<i64: 32, 1>}, {pipeline_mode = #tpu.pipeline_mode<synchronous>, transform_indices = @transform_10, window_bounds = array<i64: 32, 5>}, {pipeline_mode = #tpu.pipeline_mode<synchronous>, transform_indices = @transform_11, window_bounds = array<i64: 32, 1>}, {pipeline_mode = #tpu.pipeline_mode<synchronous>, transform_indices = @transform_12, window_bounds = array<i64: 32, 32>}, {pipeline_mode = #tpu.pipeline_mode<synchronous>, transform_indices = @transform_13, window_bounds = array<i64: 32, 1>}, {pipeline_mode = #tpu.pipeline_mode<synchronous>, transform_indices = @transform_14, window_bounds = array<i64: 32, 1>}, {pipeline_mode = #tpu.pipeline_mode<synchronous>, transform_indices = @transform_15, window_bounds = array<i64: 32, 1>}, {transform_indices = @transform_16, window_bounds = array<i64: 1, 32, 13>}]} {
    %c0 = arith.constant 0 : index
    %c0_0 = arith.constant 0 : index
    %c0_1 = arith.constant 0 : index
    %0 = vector.load %arg1[%c0, %c0_0, %c0_1] : memref<1x16x18xf32, #tpu.memory_space<vmem>>, vector<1x16x16xf32>
    %1 = vector.shape_cast %0 : vector<1x16x16xf32> to vector<16x16xf32>
    %c0_2 = arith.constant 0 : index
    %c0_3 = arith.constant 0 : index
    %2 = vector.load %arg18[%c0_2, %c0_3] : memref<34x128xf32, #tpu.memory_space<vmem>>, vector<16x16xf32>
    tpu.vector_store %arg18[%c0_2, %c0_3], %1 {strides = array<i32>} : memref<34x128xf32, #tpu.memory_space<vmem>>, vector<16x16xf32>,
    %c0_4 = arith.constant 0 : index
    %c0_5 = arith.constant 0 : index
    %c1 = arith.constant 1 : index
    %3 = vector.load %arg1[%c0_4, %c0_5, %c1] : memref<1x16x18xf32, #tpu.memory_space<vmem>>, vector<1x16x16xf32>
    %4 = vector.shape_cast %3 : vector<1x16x16xf32> to vector<16x16xf32>
    %c16 = arith.constant 16 : index
    %c0_6 = arith.constant 0 : index
    %5 = vector.load %arg18[%c16, %c0_6] : memref<34x128xf32, #tpu.memory_space<vmem>>, vector<16x16xf32>
    tpu.vector_store %arg18[%c16, %c0_6], %4 {strides = array<i32>} : memref<34x128xf32, #tpu.memory_space<vmem>>, vector<16x16xf32>,
    %c0_7 = arith.constant 0 : index
    %c0_8 = arith.constant 0 : index
    %c2 = arith.constant 2 : index
    %6 = vector.load %arg1[%c0_7, %c0_8, %c2] : memref<1x16x18xf32, #tpu.memory_space<vmem>>, vector<1x2x16xf32>
    %7 = vector.shape_cast %6 : vector<1x2x16xf32> to vector<2x16xf32>
    %c32 = arith.constant 32 : index
    %c0_9 = arith.constant 0 : index
    %8 = vector.load %arg18[%c32, %c0_9] : memref<34x128xf32, #tpu.memory_space<vmem>>, vector<2x16xf32>
    tpu.vector_store %arg18[%c32, %c0_9], %7 {strides = array<i32>} : memref<34x128xf32, #tpu.memory_space<vmem>>, vector<2x16xf32>,
    %c0_10 = arith.constant 0 : index
    %c2_11 = arith.constant 2 : index
    %c0_12 = arith.constant 0 : index
    %9 = vector.load %arg1[%c0_10, %c2_11, %c0_12] : memref<1x16x18xf32, #tpu.memory_space<vmem>>, vector<1x14x16xf32>
    %10 = vector.shape_cast %9 : vector<1x14x16xf32> to vector<14x16xf32>
    %c0_13 = arith.constant 0 : index
    %c16_14 = arith.constant 16 : index
    %11 = vector.load %arg18[%c0_13, %c16_14] : memref<34x128xf32, #tpu.memory_space<vmem>>, vector<14x16xf32>
    tpu.vector_store %arg18[%c0_13, %c16_14], %10 {strides = array<i32>} : memref<34x128xf32, #tpu.memory_space<vmem>>, vector<14x16xf32>,
    %c0_15 = arith.constant 0 : index
    %c0_16 = arith.constant 0 : index
    %c1_17 = arith.constant 1 : index
    %12 = vector.load %arg1[%c0_15, %c0_16, %c1_17] : memref<1x16x18xf32, #tpu.memory_space<vmem>>, vector<1x16x16xf32>
    %13 = vector.shape_cast %12 : vector<1x16x16xf32> to vector<16x16xf32>
    %c14 = arith.constant 14 : index
    %c16_18 = arith.constant 16 : index
    %14 = vector.load %arg18[%c14, %c16_18] : memref<34x128xf32, #tpu.memory_space<vmem>>, vector<16x16xf32>
    tpu.vector_store %arg18[%c14, %c16_18], %13 {strides = array<i32>} : memref<34x128xf32, #tpu.memory_space<vmem>>, vector<16x16xf32>,
    %c0_19 = arith.constant 0 : index
    %c0_20 = arith.constant 0 : index
    %c2_21 = arith.constant 2 : index
    %15 = vector.load %arg1[%c0_19, %c0_20, %c2_21] : memref<1x16x18xf32, #tpu.memory_space<vmem>>, vector<1x4x16xf32>
    %16 = vector.shape_cast %15 : vector<1x4x16xf32> to vector<4x16xf32>
    %c30 = arith.constant 30 : index
    %c16_22 = arith.constant 16 : index
    %17 = vector.load %arg18[%c30, %c16_22] : memref<34x128xf32, #tpu.memory_space<vmem>>, vector<4x16xf32>
    tpu.vector_store %arg18[%c30, %c16_22], %16 {strides = array<i32>} : memref<34x128xf32, #tpu.memory_space<vmem>>, vector<4x16xf32>,
    %c0_23 = arith.constant 0 : index
    %c4 = arith.constant 4 : index
    %c0_24 = arith.constant 0 : index
    %18 = vector.load %arg1[%c0_23, %c4, %c0_24] : memref<1x16x18xf32, #tpu.memory_space<vmem>>, vector<1x12x16xf32>
    %19 = vector.shape_cast %18 : vector<1x12x16xf32> to vector<12x16xf32>
    %c0_25 = arith.constant 0 : index
    %c32_26 = arith.constant 32 : index
    %20 = vector.load %arg18[%c0_25, %c32_26] : memref<34x128xf32, #tpu.memory_space<vmem>>, vector<12x16xf32>
    tpu.vector_store %arg18[%c0_25, %c32_26], %19 {strides = array<i32>} : memref<34x128xf32, #tpu.memory_space<vmem>>, vector<12x16xf32>,
    %c0_27 = arith.constant 0 : index
    %c0_28 = arith.constant 0 : index
    %c1_29 = arith.constant 1 : index
    %21 = vector.load %arg1[%c0_27, %c0_28, %c1_29] : memref<1x16x18xf32, #tpu.memory_space<vmem>>, vector<1x16x16xf32>
    %22 = vector.shape_cast %21 : vector<1x16x16xf32> to vector<16x16xf32>
    %c12 = arith.constant 12 : index
    %c32_30 = arith.constant 32 : index
    %23 = vector.load %arg18[%c12, %c32_30] : memref<34x128xf32, #tpu.memory_space<vmem>>, vector<16x16xf32>
    tpu.vector_store %arg18[%c12, %c32_30], %22 {strides = array<i32>} : memref<34x128xf32, #tpu.memory_space<vmem>>, vector<16x16xf32>,
    %c0_31 = arith.constant 0 : index
    %c0_32 = arith.constant 0 : index
    %c2_33 = arith.constant 2 : index
    %24 = vector.load %arg1[%c0_31, %c0_32, %c2_33] : memref<1x16x18xf32, #tpu.memory_space<vmem>>, vector<1x6x16xf32>
    %25 = vector.shape_cast %24 : vector<1x6x16xf32> to vector<6x16xf32>
    %c28 = arith.constant 28 : index
    %c32_34 = arith.constant 32 : index
    %26 = vector.load %arg18[%c28, %c32_34] : memref<34x128xf32, #tpu.memory_space<vmem>>, vector<6x16xf32>
    tpu.vector_store %arg18[%c28, %c32_34], %25 {strides = array<i32>} : memref<34x128xf32, #tpu.memory_space<vmem>>, vector<6x16xf32>,
    %c0_35 = arith.constant 0 : index
    %c6 = arith.constant 6 : index
    %c0_36 = arith.constant 0 : index
    %27 = vector.load %arg1[%c0_35, %c6, %c0_36] : memref<1x16x18xf32, #tpu.memory_space<vmem>>, vector<1x10x16xf32>
    %28 = vector.shape_cast %27 : vector<1x10x16xf32> to vector<10x16xf32>
    %c0_37 = arith.constant 0 : index
    %c48 = arith.constant 48 : index
    %29 = vector.load %arg18[%c0_37, %c48] : memref<34x128xf32, #tpu.memory_space<vmem>>, vector<10x16xf32>
    tpu.vector_store %arg18[%c0_37, %c48], %28 {strides = array<i32>} : memref<34x128xf32, #tpu.memory_space<vmem>>, vector<10x16xf32>,
    %c0_38 = arith.constant 0 : index
    %c0_39 = arith.constant 0 : index
    %c1_40 = arith.constant 1 : index
    %30 = vector.load %arg1[%c0_38, %c0_39, %c1_40] : memref<1x16x18xf32, #tpu.memory_space<vmem>>, vector<1x16x16xf32>
    %31 = vector.shape_cast %30 : vector<1x16x16xf32> to vector<16x16xf32>
    %c10 = arith.constant 10 : index
    %c48_41 = arith.constant 48 : index
    %32 = vector.load %arg18[%c10, %c48_41] : memref<34x128xf32, #tpu.memory_space<vmem>>, vector<16x16xf32>
    tpu.vector_store %arg18[%c10, %c48_41], %31 {strides = array<i32>} : memref<34x128xf32, #tpu.memory_space<vmem>>, vector<16x16xf32>,
    %c0_42 = arith.constant 0 : index
    %c0_43 = arith.constant 0 : index
    %c2_44 = arith.constant 2 : index
    %33 = vector.load %arg1[%c0_42, %c0_43, %c2_44] : memref<1x16x18xf32, #tpu.memory_space<vmem>>, vector<1x8x16xf32>
    %34 = vector.shape_cast %33 : vector<1x8x16xf32> to vector<8x16xf32>
    %c26 = arith.constant 26 : index
    %c48_45 = arith.constant 48 : index
    %35 = vector.load %arg18[%c26, %c48_45] : memref<34x128xf32, #tpu.memory_space<vmem>>, vector<8x16xf32>
    tpu.vector_store %arg18[%c26, %c48_45], %34 {strides = array<i32>} : memref<34x128xf32, #tpu.memory_space<vmem>>, vector<8x16xf32>,
    %c0_46 = arith.constant 0 : index
    %c8 = arith.constant 8 : index
    %c0_47 = arith.constant 0 : index
    %36 = vector.load %arg1[%c0_46, %c8, %c0_47] : memref<1x16x18xf32, #tpu.memory_space<vmem>>, vector<1x8x16xf32>
    %37 = vector.shape_cast %36 : vector<1x8x16xf32> to vector<8x16xf32>
    %c0_48 = arith.constant 0 : index
    %c64 = arith.constant 64 : index
    %38 = vector.load %arg18[%c0_48, %c64] : memref<34x128xf32, #tpu.memory_space<vmem>>, vector<8x16xf32>
    tpu.vector_store %arg18[%c0_48, %c64], %37 {strides = array<i32>} : memref<34x128xf32, #tpu.memory_space<vmem>>, vector<8x16xf32>,
    %c0_49 = arith.constant 0 : index
    %c0_50 = arith.constant 0 : index
    %c1_51 = arith.constant 1 : index
    %39 = vector.load %arg1[%c0_49, %c0_50, %c1_51] : memref<1x16x18xf32, #tpu.memory_space<vmem>>, vector<1x16x16xf32>
    %40 = vector.shape_cast %39 : vector<1x16x16xf32> to vector<16x16xf32>
    %c8_52 = arith.constant 8 : index
    %c64_53 = arith.constant 64 : index
    %41 = vector.load %arg18[%c8_52, %c64_53] : memref<34x128xf32, #tpu.memory_space<vmem>>, vector<16x16xf32>
    tpu.vector_store %arg18[%c8_52, %c64_53], %40 {strides = array<i32>} : memref<34x128xf32, #tpu.memory_space<vmem>>, vector<16x16xf32>,
    %c0_54 = arith.constant 0 : index
    %c0_55 = arith.constant 0 : index
    %c2_56 = arith.constant 2 : index
    %42 = vector.load %arg1[%c0_54, %c0_55, %c2_56] : memref<1x16x18xf32, #tpu.memory_space<vmem>>, vector<1x10x16xf32>
    %43 = vector.shape_cast %42 : vector<1x10x16xf32> to vector<10x16xf32>
    %c24 = arith.constant 24 : index
    %c64_57 = arith.constant 64 : index
    %44 = vector.load %arg18[%c24, %c64_57] : memref<34x128xf32, #tpu.memory_space<vmem>>, vector<10x16xf32>
    tpu.vector_store %arg18[%c24, %c64_57], %43 {strides = array<i32>} : memref<34x128xf32, #tpu.memory_space<vmem>>, vector<10x16xf32>,
    %c0_58 = arith.constant 0 : index
    %c10_59 = arith.constant 10 : index
    %c0_60 = arith.constant 0 : index
    %45 = vector.load %arg1[%c0_58, %c10_59, %c0_60] : memref<1x16x18xf32, #tpu.memory_space<vmem>>, vector<1x6x16xf32>
    %46 = vector.shape_cast %45 : vector<1x6x16xf32> to vector<6x16xf32>
    %c0_61 = arith.constant 0 : index
    %c80 = arith.constant 80 : index
    %47 = vector.load %arg18[%c0_61, %c80] : memref<34x128xf32, #tpu.memory_space<vmem>>, vector<6x16xf32>
    tpu.vector_store %arg18[%c0_61, %c80], %46 {strides = array<i32>} : memref<34x128xf32, #tpu.memory_space<vmem>>, vector<6x16xf32>,
    %c0_62 = arith.constant 0 : index
    %c0_63 = arith.constant 0 : index
    %c1_64 = arith.constant 1 : index
    %48 = vector.load %arg1[%c0_62, %c0_63, %c1_64] : memref<1x16x18xf32, #tpu.memory_space<vmem>>, vector<1x16x16xf32>
    %49 = vector.shape_cast %48 : vector<1x16x16xf32> to vector<16x16xf32>
    %c6_65 = arith.constant 6 : index
    %c80_66 = arith.constant 80 : index
    %50 = vector.load %arg18[%c6_65, %c80_66] : memref<34x128xf32, #tpu.memory_space<vmem>>, vector<16x16xf32>
    tpu.vector_store %arg18[%c6_65, %c80_66], %49 {strides = array<i32>} : memref<34x128xf32, #tpu.memory_space<vmem>>, vector<16x16xf32>,
    %c0_67 = arith.constant 0 : index
    %c0_68 = arith.constant 0 : index
    %c2_69 = arith.constant 2 : index
    %51 = vector.load %arg1[%c0_67, %c0_68, %c2_69] : memref<1x16x18xf32, #tpu.memory_space<vmem>>, vector<1x12x16xf32>
    %52 = vector.shape_cast %51 : vector<1x12x16xf32> to vector<12x16xf32>
    %c22 = arith.constant 22 : index
    %c80_70 = arith.constant 80 : index
    %53 = vector.load %arg18[%c22, %c80_70] : memref<34x128xf32, #tpu.memory_space<vmem>>, vector<12x16xf32>
    tpu.vector_store %arg18[%c22, %c80_70], %52 {strides = array<i32>} : memref<34x128xf32, #tpu.memory_space<vmem>>, vector<12x16xf32>,
    %c0_71 = arith.constant 0 : index
    %c12_72 = arith.constant 12 : index
    %c0_73 = arith.constant 0 : index
    %54 = vector.load %arg1[%c0_71, %c12_72, %c0_73] : memref<1x16x18xf32, #tpu.memory_space<vmem>>, vector<1x4x16xf32>
    %55 = vector.shape_cast %54 : vector<1x4x16xf32> to vector<4x16xf32>
    %c0_74 = arith.constant 0 : index
    %c96 = arith.constant 96 : index
    %56 = vector.load %arg18[%c0_74, %c96] : memref<34x128xf32, #tpu.memory_space<vmem>>, vector<4x16xf32>
    tpu.vector_store %arg18[%c0_74, %c96], %55 {strides = array<i32>} : memref<34x128xf32, #tpu.memory_space<vmem>>, vector<4x16xf32>,
    %c0_75 = arith.constant 0 : index
    %c0_76 = arith.constant 0 : index
    %c1_77 = arith.constant 1 : index
    %57 = vector.load %arg1[%c0_75, %c0_76, %c1_77] : memref<1x16x18xf32, #tpu.memory_space<vmem>>, vector<1x16x16xf32>
    %58 = vector.shape_cast %57 : vector<1x16x16xf32> to vector<16x16xf32>
    %c4_78 = arith.constant 4 : index
    %c96_79 = arith.constant 96 : index
    %59 = vector.load %arg18[%c4_78, %c96_79] : memref<34x128xf32, #tpu.memory_space<vmem>>, vector<16x16xf32>
    tpu.vector_store %arg18[%c4_78, %c96_79], %58 {strides = array<i32>} : memref<34x128xf32, #tpu.memory_space<vmem>>, vector<16x16xf32>,
    %c0_80 = arith.constant 0 : index
    %c0_81 = arith.constant 0 : index
    %c2_82 = arith.constant 2 : index
    %60 = vector.load %arg1[%c0_80, %c0_81, %c2_82] : memref<1x16x18xf32, #tpu.memory_space<vmem>>, vector<1x14x16xf32>
    %61 = vector.shape_cast %60 : vector<1x14x16xf32> to vector<14x16xf32>
    %c20 = arith.constant 20 : index
    %c96_83 = arith.constant 96 : index
    %62 = vector.load %arg18[%c20, %c96_83] : memref<34x128xf32, #tpu.memory_space<vmem>>, vector<14x16xf32>
    tpu.vector_store %arg18[%c20, %c96_83], %61 {strides = array<i32>} : memref<34x128xf32, #tpu.memory_space<vmem>>, vector<14x16xf32>,
    %c0_84 = arith.constant 0 : index
    %c14_85 = arith.constant 14 : index
    %c0_86 = arith.constant 0 : index
    %63 = vector.load %arg1[%c0_84, %c14_85, %c0_86] : memref<1x16x18xf32, #tpu.memory_space<vmem>>, vector<1x2x16xf32>
    %64 = vector.shape_cast %63 : vector<1x2x16xf32> to vector<2x16xf32>
    %c0_87 = arith.constant 0 : index
    %c112 = arith.constant 112 : index
    %65 = vector.load %arg18[%c0_87, %c112] : memref<34x128xf32, #tpu.memory_space<vmem>>, vector<2x16xf32>
    tpu.vector_store %arg18[%c0_87, %c112], %64 {strides = array<i32>} : memref<34x128xf32, #tpu.memory_space<vmem>>, vector<2x16xf32>,
    %c0_88 = arith.constant 0 : index
    %c0_89 = arith.constant 0 : index
    %c1_90 = arith.constant 1 : index
    %66 = vector.load %arg1[%c0_88, %c0_89, %c1_90] : memref<1x16x18xf32, #tpu.memory_space<vmem>>, vector<1x16x16xf32>
    %67 = vector.shape_cast %66 : vector<1x16x16xf32> to vector<16x16xf32>
    %c2_91 = arith.constant 2 : index
    %c112_92 = arith.constant 112 : index
    %68 = vector.load %arg18[%c2_91, %c112_92] : memref<34x128xf32, #tpu.memory_space<vmem>>, vector<16x16xf32>
    tpu.vector_store %arg18[%c2_91, %c112_92], %67 {strides = array<i32>} : memref<34x128xf32, #tpu.memory_space<vmem>>, vector<16x16xf32>,
    %c0_93 = arith.constant 0 : index
    %c0_94 = arith.constant 0 : index
    %c2_95 = arith.constant 2 : index
    %69 = vector.load %arg1[%c0_93, %c0_94, %c2_95] : memref<1x16x18xf32, #tpu.memory_space<vmem>>, vector<1x16x16xf32>
    %70 = vector.shape_cast %69 : vector<1x16x16xf32> to vector<16x16xf32>
    %c18 = arith.constant 18 : index
    %c112_96 = arith.constant 112 : index
    %71 = vector.load %arg18[%c18, %c112_96] : memref<34x128xf32, #tpu.memory_space<vmem>>, vector<16x16xf32>
    tpu.vector_store %arg18[%c18, %c112_96], %70 {strides = array<i32>} : memref<34x128xf32, #tpu.memory_space<vmem>>, vector<16x16xf32>,
    %c0_97 = arith.constant 0 : index
    %c0_98 = arith.constant 0 : index
    %72 = vector.load %arg2[%c0_97, %c0_98] : memref<32x34xf32, #tpu.memory_space<vmem>>, vector<32x34xf32>
    %c0_99 = arith.constant 0 : index
    %c0_100 = arith.constant 0 : index
    %73 = vector.load %arg18[%c0_99, %c0_100] : memref<34x128xf32, #tpu.memory_space<vmem>>, vector<34x128xf32>
    %cst = arith.constant dense<0.000000e+00> : vector<32x128xf32>
    %74 = tpu.matmul %72, %73, %cst {dimension_numbers = #tpu.dot_dimension_numbers<[1], [0], [0], [1], [0, 0, 1, 1], [], []>} : vector<32x34xf32>, vector<34x128xf32>, vector<32x128xf32> -> vector<32x128xf32>
    %75 = math.absf %74 : vector<32x128xf32>
    %cst_101 = arith.constant 1.000000e+00 : f32
    %76 = vector.broadcast %cst_101 : f32 to vector<32x128xf32>
    %77 = arith.addf %75, %76 : vector<32x128xf32>
    %78 = math.log %77 : vector<32x128xf32>
    %cst_102 = arith.constant 0.434294492 : f32
    %79 = vector.broadcast %cst_102 : f32 to vector<32x128xf32>
    %80 = arith.mulf %78, %79 : vector<32x128xf32>
    %c0_103 = arith.constant 0 : index
    %c0_104 = arith.constant 0 : index
    %81 = vector.load %arg3[%c0_103, %c0_104] : memref<32x1xf32, #tpu.memory_space<vmem>>, vector<32x1xf32>
    %82 = vector.broadcast %81 : vector<32x1xf32> to vector<32x128xf32>
    %83 = arith.mulf %80, %82 : vector<32x128xf32>
    %c0_105 = arith.constant 0 : index
    %c0_106 = arith.constant 0 : index
    %84 = vector.load %arg4[%c0_105, %c0_106] : memref<32x1xf32, #tpu.memory_space<vmem>>, vector<32x1xf32>
    %85 = vector.broadcast %84 : vector<32x1xf32> to vector<32x128xf32>
    %86 = arith.addf %83, %85 : vector<32x128xf32>
    %87 = vector.extract_strided_slice %86 {offsets = [0, 0], sizes = [16, 128], strides = [1, 1]} : vector<32x128xf32> to vector<16x128xf32>
    %88 = vector.extract_strided_slice %86 {offsets = [16, 0], sizes = [16, 128], strides = [1, 1]} : vector<32x128xf32> to vector<16x128xf32>
    %89 = arith.addf %87, %88 : vector<16x128xf32>
    %cst_107 = arith.constant 5.000000e-01 : f32
    %90 = vector.broadcast %cst_107 : f32 to vector<16x128xf32>
    %91 = arith.mulf %89, %90 : vector<16x128xf32>
    %c0_108 = arith.constant 0 : index
    %c0_109 = arith.constant 0 : index
    %92 = vector.load %arg19[%c0_108, %c0_109] : memref<16x128xf32, #tpu.memory_space<vmem>>, vector<16x128xf32>
    tpu.vector_store %arg19[%c0_108, %c0_109], %91 {strides = array<i32>} : memref<16x128xf32, #tpu.memory_space<vmem>>, vector<16x128xf32>,
    %cst_110 = arith.constant 0.000000e+00 : f32
    %93 = vector.broadcast %cst_110 : f32 to vector<16x15xf32>
    %c0_111 = arith.constant 0 : index
    %c0_112 = arith.constant 0 : index
    %94 = vector.load %arg5[%c0_111, %c0_112] : memref<16x9xf32, #tpu.memory_space<vmem>>, vector<16x1xf32>
    %c0_113 = arith.constant 0 : index
    %c0_114 = arith.constant 0 : index
    %95 = vector.load %arg19[%c0_113, %c0_114] : memref<16x128xf32, #tpu.memory_space<vmem>>, vector<16x15xf32>
    %96 = vector.broadcast %94 : vector<16x1xf32> to vector<16x15xf32>
    %97 = arith.mulf %96, %95 : vector<16x15xf32>
    %98 = arith.addf %93, %97 : vector<16x15xf32>
    %c0_115 = arith.constant 0 : index
    %c1_116 = arith.constant 1 : index
    %99 = vector.load %arg5[%c0_115, %c1_116] : memref<16x9xf32, #tpu.memory_space<vmem>>, vector<16x1xf32>
    %c0_117 = arith.constant 0 : index
    %c16_118 = arith.constant 16 : index
    %100 = vector.load %arg19[%c0_117, %c16_118] : memref<16x128xf32, #tpu.memory_space<vmem>>, vector<16x15xf32>
    %101 = vector.broadcast %99 : vector<16x1xf32> to vector<16x15xf32>
    %102 = arith.mulf %101, %100 : vector<16x15xf32>
    %103 = arith.addf %98, %102 : vector<16x15xf32>
    %c0_119 = arith.constant 0 : index
    %c2_120 = arith.constant 2 : index
    %104 = vector.load %arg5[%c0_119, %c2_120] : memref<16x9xf32, #tpu.memory_space<vmem>>, vector<16x1xf32>
    %c0_121 = arith.constant 0 : index
    %c32_122 = arith.constant 32 : index
    %105 = vector.load %arg19[%c0_121, %c32_122] : memref<16x128xf32, #tpu.memory_space<vmem>>, vector<16x15xf32>
    %106 = vector.broadcast %104 : vector<16x1xf32> to vector<16x15xf32>
    %107 = arith.mulf %106, %105 : vector<16x15xf32>
    %108 = arith.addf %103, %107 : vector<16x15xf32>
    %c0_123 = arith.constant 0 : index
    %c3 = arith.constant 3 : index
    %109 = vector.load %arg5[%c0_123, %c3] : memref<16x9xf32, #tpu.memory_space<vmem>>, vector<16x1xf32>
    %c0_124 = arith.constant 0 : index
    %c48_125 = arith.constant 48 : index
    %110 = vector.load %arg19[%c0_124, %c48_125] : memref<16x128xf32, #tpu.memory_space<vmem>>, vector<16x15xf32>
    %111 = vector.broadcast %109 : vector<16x1xf32> to vector<16x15xf32>
    %112 = arith.mulf %111, %110 : vector<16x15xf32>
    %113 = arith.addf %108, %112 : vector<16x15xf32>
    %c0_126 = arith.constant 0 : index
    %c4_127 = arith.constant 4 : index
    %114 = vector.load %arg5[%c0_126, %c4_127] : memref<16x9xf32, #tpu.memory_space<vmem>>, vector<16x1xf32>
    %c0_128 = arith.constant 0 : index
    %c64_129 = arith.constant 64 : index
    %115 = vector.load %arg19[%c0_128, %c64_129] : memref<16x128xf32, #tpu.memory_space<vmem>>, vector<16x15xf32>
    %116 = vector.broadcast %114 : vector<16x1xf32> to vector<16x15xf32>
    %117 = arith.mulf %116, %115 : vector<16x15xf32>
    %118 = arith.addf %113, %117 : vector<16x15xf32>
    %c0_130 = arith.constant 0 : index
    %c5 = arith.constant 5 : index
    %119 = vector.load %arg5[%c0_130, %c5] : memref<16x9xf32, #tpu.memory_space<vmem>>, vector<16x1xf32>
    %c0_131 = arith.constant 0 : index
    %c80_132 = arith.constant 80 : index
    %120 = vector.load %arg19[%c0_131, %c80_132] : memref<16x128xf32, #tpu.memory_space<vmem>>, vector<16x15xf32>
    %121 = vector.broadcast %119 : vector<16x1xf32> to vector<16x15xf32>
    %122 = arith.mulf %121, %120 : vector<16x15xf32>
    %123 = arith.addf %118, %122 : vector<16x15xf32>
    %c0_133 = arith.constant 0 : index
    %c6_134 = arith.constant 6 : index
    %124 = vector.load %arg5[%c0_133, %c6_134] : memref<16x9xf32, #tpu.memory_space<vmem>>, vector<16x1xf32>
    %c0_135 = arith.constant 0 : index
    %c96_136 = arith.constant 96 : index
    %125 = vector.load %arg19[%c0_135, %c96_136] : memref<16x128xf32, #tpu.memory_space<vmem>>, vector<16x15xf32>
    %126 = vector.broadcast %124 : vector<16x1xf32> to vector<16x15xf32>
    %127 = arith.mulf %126, %125 : vector<16x15xf32>
    %128 = arith.addf %123, %127 : vector<16x15xf32>
    %c0_137 = arith.constant 0 : index
    %c7 = arith.constant 7 : index
    %129 = vector.load %arg5[%c0_137, %c7] : memref<16x9xf32, #tpu.memory_space<vmem>>, vector<16x1xf32>
    %c0_138 = arith.constant 0 : index
    %c112_139 = arith.constant 112 : index
    %130 = vector.load %arg19[%c0_138, %c112_139] : memref<16x128xf32, #tpu.memory_space<vmem>>, vector<16x15xf32>
    %131 = vector.broadcast %129 : vector<16x1xf32> to vector<16x15xf32>
    %132 = arith.mulf %131, %130 : vector<16x15xf32>
    %133 = arith.addf %128, %132 : vector<16x15xf32>
    %c0_140 = arith.constant 0 : index
    %c8_141 = arith.constant 8 : index
    %134 = vector.load %arg5[%c0_140, %c8_141] : memref<16x9xf32, #tpu.memory_space<vmem>>, vector<16x1xf32>
    %c0_142 = arith.constant 0 : index
    %c1_143 = arith.constant 1 : index
    %135 = vector.load %arg19[%c0_142, %c1_143] : memref<16x128xf32, #tpu.memory_space<vmem>>, vector<16x15xf32>
    %136 = vector.broadcast %134 : vector<16x1xf32> to vector<16x15xf32>
    %137 = arith.mulf %136, %135 : vector<16x15xf32>
    %138 = arith.addf %133, %137 : vector<16x15xf32>
    %c0_144 = arith.constant 0 : index
    %c0_145 = arith.constant 0 : index
    %139 = vector.load %arg20[%c0_144, %c0_145] : memref<16x60xf32, #tpu.memory_space<vmem>>, vector<16x15xf32>
    tpu.vector_store %arg20[%c0_144, %c0_145], %138 {strides = array<i32>} : memref<16x60xf32, #tpu.memory_space<vmem>>, vector<16x15xf32>,
    %cst_146 = arith.constant 0.000000e+00 : f32
    %140 = vector.broadcast %cst_146 : f32 to vector<16x15xf32>
    %c0_147 = arith.constant 0 : index
    %c0_148 = arith.constant 0 : index
    %141 = vector.load %arg5[%c0_147, %c0_148] : memref<16x9xf32, #tpu.memory_space<vmem>>, vector<16x1xf32>
    %c0_149 = arith.constant 0 : index
    %c64_150 = arith.constant 64 : index
    %142 = vector.load %arg19[%c0_149, %c64_150] : memref<16x128xf32, #tpu.memory_space<vmem>>, vector<16x15xf32>
    %143 = vector.broadcast %141 : vector<16x1xf32> to vector<16x15xf32>
    %144 = arith.mulf %143, %142 : vector<16x15xf32>
    %145 = arith.addf %140, %144 : vector<16x15xf32>
    %c0_151 = arith.constant 0 : index
    %c1_152 = arith.constant 1 : index
    %146 = vector.load %arg5[%c0_151, %c1_152] : memref<16x9xf32, #tpu.memory_space<vmem>>, vector<16x1xf32>
    %c0_153 = arith.constant 0 : index
    %c80_154 = arith.constant 80 : index
    %147 = vector.load %arg19[%c0_153, %c80_154] : memref<16x128xf32, #tpu.memory_space<vmem>>, vector<16x15xf32>
    %148 = vector.broadcast %146 : vector<16x1xf32> to vector<16x15xf32>
    %149 = arith.mulf %148, %147 : vector<16x15xf32>
    %150 = arith.addf %145, %149 : vector<16x15xf32>
    %c0_155 = arith.constant 0 : index
    %c2_156 = arith.constant 2 : index
    %151 = vector.load %arg5[%c0_155, %c2_156] : memref<16x9xf32, #tpu.memory_space<vmem>>, vector<16x1xf32>
    %c0_157 = arith.constant 0 : index
    %c96_158 = arith.constant 96 : index
    %152 = vector.load %arg19[%c0_157, %c96_158] : memref<16x128xf32, #tpu.memory_space<vmem>>, vector<16x15xf32>
    %153 = vector.broadcast %151 : vector<16x1xf32> to vector<16x15xf32>
    %154 = arith.mulf %153, %152 : vector<16x15xf32>
    %155 = arith.addf %150, %154 : vector<16x15xf32>
    %c0_159 = arith.constant 0 : index
    %c3_160 = arith.constant 3 : index
    %156 = vector.load %arg5[%c0_159, %c3_160] : memref<16x9xf32, #tpu.memory_space<vmem>>, vector<16x1xf32>
    %c0_161 = arith.constant 0 : index
    %c112_162 = arith.constant 112 : index
    %157 = vector.load %arg19[%c0_161, %c112_162] : memref<16x128xf32, #tpu.memory_space<vmem>>, vector<16x15xf32>
    %158 = vector.broadcast %156 : vector<16x1xf32> to vector<16x15xf32>
    %159 = arith.mulf %158, %157 : vector<16x15xf32>
    %160 = arith.addf %155, %159 : vector<16x15xf32>
    %c0_163 = arith.constant 0 : index
    %c4_164 = arith.constant 4 : index
    %161 = vector.load %arg5[%c0_163, %c4_164] : memref<16x9xf32, #tpu.memory_space<vmem>>, vector<16x1xf32>
    %c0_165 = arith.constant 0 : index
    %c1_166 = arith.constant 1 : index
    %162 = vector.load %arg19[%c0_165, %c1_166] : memref<16x128xf32, #tpu.memory_space<vmem>>, vector<16x15xf32>
    %163 = vector.broadcast %161 : vector<16x1xf32> to vector<16x15xf32>
    %164 = arith.mulf %163, %162 : vector<16x15xf32>
    %165 = arith.addf %160, %164 : vector<16x15xf32>
    %c0_167 = arith.constant 0 : index
    %c5_168 = arith.constant 5 : index
    %166 = vector.load %arg5[%c0_167, %c5_168] : memref<16x9xf32, #tpu.memory_space<vmem>>, vector<16x1xf32>
    %c0_169 = arith.constant 0 : index
    %c17 = arith.constant 17 : index
    %167 = vector.load %arg19[%c0_169, %c17] : memref<16x128xf32, #tpu.memory_space<vmem>>, vector<16x15xf32>
    %168 = vector.broadcast %166 : vector<16x1xf32> to vector<16x15xf32>
    %169 = arith.mulf %168, %167 : vector<16x15xf32>
    %170 = arith.addf %165, %169 : vector<16x15xf32>
    %c0_170 = arith.constant 0 : index
    %c6_171 = arith.constant 6 : index
    %171 = vector.load %arg5[%c0_170, %c6_171] : memref<16x9xf32, #tpu.memory_space<vmem>>, vector<16x1xf32>
    %c0_172 = arith.constant 0 : index
    %c33 = arith.constant 33 : index
    %172 = vector.load %arg19[%c0_172, %c33] : memref<16x128xf32, #tpu.memory_space<vmem>>, vector<16x15xf32>
    %173 = vector.broadcast %171 : vector<16x1xf32> to vector<16x15xf32>
    %174 = arith.mulf %173, %172 : vector<16x15xf32>
    %175 = arith.addf %170, %174 : vector<16x15xf32>
    %c0_173 = arith.constant 0 : index
    %c7_174 = arith.constant 7 : index
    %176 = vector.load %arg5[%c0_173, %c7_174] : memref<16x9xf32, #tpu.memory_space<vmem>>, vector<16x1xf32>
    %c0_175 = arith.constant 0 : index
    %c49 = arith.constant 49 : index
    %177 = vector.load %arg19[%c0_175, %c49] : memref<16x128xf32, #tpu.memory_space<vmem>>, vector<16x15xf32>
    %178 = vector.broadcast %176 : vector<16x1xf32> to vector<16x15xf32>
    %179 = arith.mulf %178, %177 : vector<16x15xf32>
    %180 = arith.addf %175, %179 : vector<16x15xf32>
    %c0_176 = arith.constant 0 : index
    %c8_177 = arith.constant 8 : index
    %181 = vector.load %arg5[%c0_176, %c8_177] : memref<16x9xf32, #tpu.memory_space<vmem>>, vector<16x1xf32>
    %c0_178 = arith.constant 0 : index
    %c65 = arith.constant 65 : index
    %182 = vector.load %arg19[%c0_178, %c65] : memref<16x128xf32, #tpu.memory_space<vmem>>, vector<16x15xf32>
    %183 = vector.broadcast %181 : vector<16x1xf32> to vector<16x15xf32>
    %184 = arith.mulf %183, %182 : vector<16x15xf32>
    %185 = arith.addf %180, %184 : vector<16x15xf32>
    %c0_179 = arith.constant 0 : index
    %c15 = arith.constant 15 : index
    %186 = vector.load %arg20[%c0_179, %c15] : memref<16x60xf32, #tpu.memory_space<vmem>>, vector<16x15xf32>
    tpu.vector_store %arg20[%c0_179, %c15], %185 {strides = array<i32>} : memref<16x60xf32, #tpu.memory_space<vmem>>, vector<16x15xf32>,
    %cst_180 = arith.constant 0.000000e+00 : f32
    %187 = vector.broadcast %cst_180 : f32 to vector<16x15xf32>
    %c0_181 = arith.constant 0 : index
    %c0_182 = arith.constant 0 : index
    %188 = vector.load %arg5[%c0_181, %c0_182] : memref<16x9xf32, #tpu.memory_space<vmem>>, vector<16x1xf32>
    %c0_183 = arith.constant 0 : index
    %c32_184 = arith.constant 32 : index
    %189 = vector.load %arg19[%c0_183, %c32_184] : memref<16x128xf32, #tpu.memory_space<vmem>>, vector<16x15xf32>
    %190 = vector.broadcast %188 : vector<16x1xf32> to vector<16x15xf32>
    %191 = arith.mulf %190, %189 : vector<16x15xf32>
    %192 = arith.addf %187, %191 : vector<16x15xf32>
    %c0_185 = arith.constant 0 : index
    %c1_186 = arith.constant 1 : index
    %193 = vector.load %arg5[%c0_185, %c1_186] : memref<16x9xf32, #tpu.memory_space<vmem>>, vector<16x1xf32>
    %c0_187 = arith.constant 0 : index
    %c48_188 = arith.constant 48 : index
    %194 = vector.load %arg19[%c0_187, %c48_188] : memref<16x128xf32, #tpu.memory_space<vmem>>, vector<16x15xf32>
    %195 = vector.broadcast %193 : vector<16x1xf32> to vector<16x15xf32>
    %196 = arith.mulf %195, %194 : vector<16x15xf32>
    %197 = arith.addf %192, %196 : vector<16x15xf32>
    %c0_189 = arith.constant 0 : index
    %c2_190 = arith.constant 2 : index
    %198 = vector.load %arg5[%c0_189, %c2_190] : memref<16x9xf32, #tpu.memory_space<vmem>>, vector<16x1xf32>
    %c0_191 = arith.constant 0 : index
    %c64_192 = arith.constant 64 : index
    %199 = vector.load %arg19[%c0_191, %c64_192] : memref<16x128xf32, #tpu.memory_space<vmem>>, vector<16x15xf32>
    %200 = vector.broadcast %198 : vector<16x1xf32> to vector<16x15xf32>
    %201 = arith.mulf %200, %199 : vector<16x15xf32>
    %202 = arith.addf %197, %201 : vector<16x15xf32>
    %c0_193 = arith.constant 0 : index
    %c3_194 = arith.constant 3 : index
    %203 = vector.load %arg5[%c0_193, %c3_194] : memref<16x9xf32, #tpu.memory_space<vmem>>, vector<16x1xf32>
    %c0_195 = arith.constant 0 : index
    %c80_196 = arith.constant 80 : index
    %204 = vector.load %arg19[%c0_195, %c80_196] : memref<16x128xf32, #tpu.memory_space<vmem>>, vector<16x15xf32>
    %205 = vector.broadcast %203 : vector<16x1xf32> to vector<16x15xf32>
    %206 = arith.mulf %205, %204 : vector<16x15xf32>
    %207 = arith.addf %202, %206 : vector<16x15xf32>
    %c0_197 = arith.constant 0 : index
    %c4_198 = arith.constant 4 : index
    %208 = vector.load %arg5[%c0_197, %c4_198] : memref<16x9xf32, #tpu.memory_space<vmem>>, vector<16x1xf32>
    %c0_199 = arith.constant 0 : index
    %c96_200 = arith.constant 96 : index
    %209 = vector.load %arg19[%c0_199, %c96_200] : memref<16x128xf32, #tpu.memory_space<vmem>>, vector<16x15xf32>
    %210 = vector.broadcast %208 : vector<16x1xf32> to vector<16x15xf32>
    %211 = arith.mulf %210, %209 : vector<16x15xf32>
    %212 = arith.addf %207, %211 : vector<16x15xf32>
    %c0_201 = arith.constant 0 : index
    %c5_202 = arith.constant 5 : index
    %213 = vector.load %arg5[%c0_201, %c5_202] : memref<16x9xf32, #tpu.memory_space<vmem>>, vector<16x1xf32>
    %c0_203 = arith.constant 0 : index
    %c112_204 = arith.constant 112 : index
    %214 = vector.load %arg19[%c0_203, %c112_204] : memref<16x128xf32, #tpu.memory_space<vmem>>, vector<16x15xf32>
    %215 = vector.broadcast %213 : vector<16x1xf32> to vector<16x15xf32>
    %216 = arith.mulf %215, %214 : vector<16x15xf32>
    %217 = arith.addf %212, %216 : vector<16x15xf32>
    %c0_205 = arith.constant 0 : index
    %c6_206 = arith.constant 6 : index
    %218 = vector.load %arg5[%c0_205, %c6_206] : memref<16x9xf32, #tpu.memory_space<vmem>>, vector<16x1xf32>
    %c0_207 = arith.constant 0 : index
    %c1_208 = arith.constant 1 : index
    %219 = vector.load %arg19[%c0_207, %c1_208] : memref<16x128xf32, #tpu.memory_space<vmem>>, vector<16x15xf32>
    %220 = vector.broadcast %218 : vector<16x1xf32> to vector<16x15xf32>
    %221 = arith.mulf %220, %219 : vector<16x15xf32>
    %222 = arith.addf %217, %221 : vector<16x15xf32>
    %c0_209 = arith.constant 0 : index
    %c7_210 = arith.constant 7 : index
    %223 = vector.load %arg5[%c0_209, %c7_210] : memref<16x9xf32, #tpu.memory_space<vmem>>, vector<16x1xf32>
    %c0_211 = arith.constant 0 : index
    %c17_212 = arith.constant 17 : index
    %224 = vector.load %arg19[%c0_211, %c17_212] : memref<16x128xf32, #tpu.memory_space<vmem>>, vector<16x15xf32>
    %225 = vector.broadcast %223 : vector<16x1xf32> to vector<16x15xf32>
    %226 = arith.mulf %225, %224 : vector<16x15xf32>
    %227 = arith.addf %222, %226 : vector<16x15xf32>
    %c0_213 = arith.constant 0 : index
    %c8_214 = arith.constant 8 : index
    %228 = vector.load %arg5[%c0_213, %c8_214] : memref<16x9xf32, #tpu.memory_space<vmem>>, vector<16x1xf32>
    %c0_215 = arith.constant 0 : index
    %c33_216 = arith.constant 33 : index
    %229 = vector.load %arg19[%c0_215, %c33_216] : memref<16x128xf32, #tpu.memory_space<vmem>>, vector<16x15xf32>
    %230 = vector.broadcast %228 : vector<16x1xf32> to vector<16x15xf32>
    %231 = arith.mulf %230, %229 : vector<16x15xf32>
    %232 = arith.addf %227, %231 : vector<16x15xf32>
    %c0_217 = arith.constant 0 : index
    %c30_218 = arith.constant 30 : index
    %233 = vector.load %arg20[%c0_217, %c30_218] : memref<16x60xf32, #tpu.memory_space<vmem>>, vector<16x15xf32>
    tpu.vector_store %arg20[%c0_217, %c30_218], %232 {strides = array<i32>} : memref<16x60xf32, #tpu.memory_space<vmem>>, vector<16x15xf32>,
    %cst_219 = arith.constant 0.000000e+00 : f32
    %234 = vector.broadcast %cst_219 : f32 to vector<16x15xf32>
    %c0_220 = arith.constant 0 : index
    %c0_221 = arith.constant 0 : index
    %235 = vector.load %arg5[%c0_220, %c0_221] : memref<16x9xf32, #tpu.memory_space<vmem>>, vector<16x1xf32>
    %c0_222 = arith.constant 0 : index
    %c96_223 = arith.constant 96 : index
    %236 = vector.load %arg19[%c0_222, %c96_223] : memref<16x128xf32, #tpu.memory_space<vmem>>, vector<16x15xf32>
    %237 = vector.broadcast %235 : vector<16x1xf32> to vector<16x15xf32>
    %238 = arith.mulf %237, %236 : vector<16x15xf32>
    %239 = arith.addf %234, %238 : vector<16x15xf32>
    %c0_224 = arith.constant 0 : index
    %c1_225 = arith.constant 1 : index
    %240 = vector.load %arg5[%c0_224, %c1_225] : memref<16x9xf32, #tpu.memory_space<vmem>>, vector<16x1xf32>
    %c0_226 = arith.constant 0 : index
    %c112_227 = arith.constant 112 : index
    %241 = vector.load %arg19[%c0_226, %c112_227] : memref<16x128xf32, #tpu.memory_space<vmem>>, vector<16x15xf32>
    %242 = vector.broadcast %240 : vector<16x1xf32> to vector<16x15xf32>
    %243 = arith.mulf %242, %241 : vector<16x15xf32>
    %244 = arith.addf %239, %243 : vector<16x15xf32>
    %c0_228 = arith.constant 0 : index
    %c2_229 = arith.constant 2 : index
    %245 = vector.load %arg5[%c0_228, %c2_229] : memref<16x9xf32, #tpu.memory_space<vmem>>, vector<16x1xf32>
    %c0_230 = arith.constant 0 : index
    %c1_231 = arith.constant 1 : index
    %246 = vector.load %arg19[%c0_230, %c1_231] : memref<16x128xf32, #tpu.memory_space<vmem>>, vector<16x15xf32>
    %247 = vector.broadcast %245 : vector<16x1xf32> to vector<16x15xf32>
    %248 = arith.mulf %247, %246 : vector<16x15xf32>
    %249 = arith.addf %244, %248 : vector<16x15xf32>
    %c0_232 = arith.constant 0 : index
    %c3_233 = arith.constant 3 : index
    %250 = vector.load %arg5[%c0_232, %c3_233] : memref<16x9xf32, #tpu.memory_space<vmem>>, vector<16x1xf32>
    %c0_234 = arith.constant 0 : index
    %c17_235 = arith.constant 17 : index
    %251 = vector.load %arg19[%c0_234, %c17_235] : memref<16x128xf32, #tpu.memory_space<vmem>>, vector<16x15xf32>
    %252 = vector.broadcast %250 : vector<16x1xf32> to vector<16x15xf32>
    %253 = arith.mulf %252, %251 : vector<16x15xf32>
    %254 = arith.addf %249, %253 : vector<16x15xf32>
    %c0_236 = arith.constant 0 : index
    %c4_237 = arith.constant 4 : index
    %255 = vector.load %arg5[%c0_236, %c4_237] : memref<16x9xf32, #tpu.memory_space<vmem>>, vector<16x1xf32>
    %c0_238 = arith.constant 0 : index
    %c33_239 = arith.constant 33 : index
    %256 = vector.load %arg19[%c0_238, %c33_239] : memref<16x128xf32, #tpu.memory_space<vmem>>, vector<16x15xf32>
    %257 = vector.broadcast %255 : vector<16x1xf32> to vector<16x15xf32>
    %258 = arith.mulf %257, %256 : vector<16x15xf32>
    %259 = arith.addf %254, %258 : vector<16x15xf32>
    %c0_240 = arith.constant 0 : index
    %c5_241 = arith.constant 5 : index
    %260 = vector.load %arg5[%c0_240, %c5_241] : memref<16x9xf32, #tpu.memory_space<vmem>>, vector<16x1xf32>
    %c0_242 = arith.constant 0 : index
    %c49_243 = arith.constant 49 : index
    %261 = vector.load %arg19[%c0_242, %c49_243] : memref<16x128xf32, #tpu.memory_space<vmem>>, vector<16x15xf32>
    %262 = vector.broadcast %260 : vector<16x1xf32> to vector<16x15xf32>
    %263 = arith.mulf %262, %261 : vector<16x15xf32>
    %264 = arith.addf %259, %263 : vector<16x15xf32>
    %c0_244 = arith.constant 0 : index
    %c6_245 = arith.constant 6 : index
    %265 = vector.load %arg5[%c0_244, %c6_245] : memref<16x9xf32, #tpu.memory_space<vmem>>, vector<16x1xf32>
    %c0_246 = arith.constant 0 : index
    %c65_247 = arith.constant 65 : index
    %266 = vector.load %arg19[%c0_246, %c65_247] : memref<16x128xf32, #tpu.memory_space<vmem>>, vector<16x15xf32>
    %267 = vector.broadcast %265 : vector<16x1xf32> to vector<16x15xf32>
    %268 = arith.mulf %267, %266 : vector<16x15xf32>
    %269 = arith.addf %264, %268 : vector<16x15xf32>
    %c0_248 = arith.constant 0 : index
    %c7_249 = arith.constant 7 : index
    %270 = vector.load %arg5[%c0_248, %c7_249] : memref<16x9xf32, #tpu.memory_space<vmem>>, vector<16x1xf32>
    %c0_250 = arith.constant 0 : index
    %c81 = arith.constant 81 : index
    %271 = vector.load %arg19[%c0_250, %c81] : memref<16x128xf32, #tpu.memory_space<vmem>>, vector<16x15xf32>
    %272 = vector.broadcast %270 : vector<16x1xf32> to vector<16x15xf32>
    %273 = arith.mulf %272, %271 : vector<16x15xf32>
    %274 = arith.addf %269, %273 : vector<16x15xf32>
    %c0_251 = arith.constant 0 : index
    %c8_252 = arith.constant 8 : index
    %275 = vector.load %arg5[%c0_251, %c8_252] : memref<16x9xf32, #tpu.memory_space<vmem>>, vector<16x1xf32>
    %c0_253 = arith.constant 0 : index
    %c97 = arith.constant 97 : index
    %276 = vector.load %arg19[%c0_253, %c97] : memref<16x128xf32, #tpu.memory_space<vmem>>, vector<16x15xf32>
    %277 = vector.broadcast %275 : vector<16x1xf32> to vector<16x15xf32>
    %278 = arith.mulf %277, %276 : vector<16x15xf32>
    %279 = arith.addf %274, %278 : vector<16x15xf32>
    %c0_254 = arith.constant 0 : index
    %c45 = arith.constant 45 : index
    %280 = vector.load %arg20[%c0_254, %c45] : memref<16x60xf32, #tpu.memory_space<vmem>>, vector<16x15xf32>
    tpu.vector_store %arg20[%c0_254, %c45], %279 {strides = array<i32>} : memref<16x60xf32, #tpu.memory_space<vmem>>, vector<16x15xf32>,
    %c0_255 = arith.constant 0 : index
    %c0_256 = arith.constant 0 : index
    %281 = vector.load %arg20[%c0_255, %c0_256] : memref<16x60xf32, #tpu.memory_space<vmem>>, vector<16x60xf32>
    %c0_257 = arith.constant 0 : index
    %c0_258 = arith.constant 0 : index
    %282 = vector.load %arg6[%c0_257, %c0_258] : memref<16x1xf32, #tpu.memory_space<vmem>>, vector<16x1xf32>
    %283 = vector.broadcast %282 : vector<16x1xf32> to vector<16x60xf32>
    %284 = arith.addf %281, %283 : vector<16x60xf32>
    %c0_259 = arith.constant 0 : index
    %c0_260 = arith.constant 0 : index
    %285 = vector.load %arg7[%c0_259, %c0_260] : memref<32x16xf32, #tpu.memory_space<vmem>>, vector<32x16xf32>
    %cst_261 = arith.constant dense<0.000000e+00> : vector<32x60xf32>
    %286 = tpu.matmul %285, %284, %cst_261 {dimension_numbers = #tpu.dot_dimension_numbers<[1], [0], [0], [1], [0, 0, 1, 1], [], []>} : vector<32x16xf32>, vector<16x60xf32>, vector<32x60xf32> -> vector<32x60xf32>
    %c0_262 = arith.constant 0 : index
    %c0_263 = arith.constant 0 : index
    %287 = vector.load %arg8[%c0_262, %c0_263] : memref<32x1xf32, #tpu.memory_space<vmem>>, vector<32x1xf32>
    %288 = vector.broadcast %287 : vector<32x1xf32> to vector<32x60xf32>
    %289 = arith.addf %286, %288 : vector<32x60xf32>
    %cst_264 = arith.constant 0.000000e+00 : f32
    %290 = vector.broadcast %cst_264 : f32 to vector<32x60xf32>
    %291 = arith.maximumf %289, %290 : vector<32x60xf32>
    %c0_265 = arith.constant 0 : index
    %c0_266 = arith.constant 0 : index
    %292 = vector.load %arg9[%c0_265, %c0_266] : memref<32x1xf32, #tpu.memory_space<vmem>>, vector<32x1xf32>
    %293 = vector.broadcast %292 : vector<32x1xf32> to vector<32x60xf32>
    %294 = arith.mulf %291, %293 : vector<32x60xf32>
    %c0_267 = arith.constant 0 : index
    %c0_268 = arith.constant 0 : index
    %295 = vector.load %arg10[%c0_267, %c0_268] : memref<32x1xf32, #tpu.memory_space<vmem>>, vector<32x1xf32>
    %296 = vector.broadcast %295 : vector<32x1xf32> to vector<32x60xf32>
    %297 = arith.addf %294, %296 : vector<32x60xf32>
    %c0_269 = arith.constant 0 : index
    %c0_270 = arith.constant 0 : index
    %298 = vector.load %arg21[%c0_269, %c0_270] : memref<32x60xf32, #tpu.memory_space<vmem>>, vector<32x60xf32>
    tpu.vector_store %arg21[%c0_269, %c0_270], %297 {strides = array<i32>} : memref<32x60xf32, #tpu.memory_space<vmem>>, vector<32x60xf32>,
    %c0_271 = arith.constant 0 : index
    %c0_272 = arith.constant 0 : index
    %299 = vector.load %arg21[%c0_271, %c0_272] : memref<32x60xf32, #tpu.memory_space<vmem>>, vector<32x30xf32>
    %c0_273 = arith.constant 0 : index
    %c30_274 = arith.constant 30 : index
    %300 = vector.load %arg21[%c0_273, %c30_274] : memref<32x60xf32, #tpu.memory_space<vmem>>, vector<32x30xf32>
    %301 = arith.addf %299, %300 : vector<32x30xf32>
    %cst_275 = arith.constant 5.000000e-01 : f32
    %302 = vector.broadcast %cst_275 : f32 to vector<32x30xf32>
    %303 = arith.mulf %301, %302 : vector<32x30xf32>
    %c0_276 = arith.constant 0 : index
    %c0_277 = arith.constant 0 : index
    %304 = vector.load %arg22[%c0_276, %c0_277] : memref<32x30xf32, #tpu.memory_space<vmem>>, vector<32x30xf32>
    tpu.vector_store %arg22[%c0_276, %c0_277], %303 {strides = array<i32>} : memref<32x30xf32, #tpu.memory_space<vmem>>, vector<32x30xf32>,
    %cst_278 = arith.constant 0.000000e+00 : f32
    %305 = vector.broadcast %cst_278 : f32 to vector<32x13xf32>
    %c0_279 = arith.constant 0 : index
    %c0_280 = arith.constant 0 : index
    %306 = vector.load %arg11[%c0_279, %c0_280] : memref<32x5xf32, #tpu.memory_space<vmem>>, vector<32x1xf32>
    %c0_281 = arith.constant 0 : index
    %c0_282 = arith.constant 0 : index
    %307 = vector.load %arg22[%c0_281, %c0_282] : memref<32x30xf32, #tpu.memory_space<vmem>>, vector<32x13xf32>
    %308 = vector.broadcast %306 : vector<32x1xf32> to vector<32x13xf32>
    %309 = arith.mulf %308, %307 : vector<32x13xf32>
    %310 = arith.addf %305, %309 : vector<32x13xf32>
    %c0_283 = arith.constant 0 : index
    %c1_284 = arith.constant 1 : index
    %311 = vector.load %arg11[%c0_283, %c1_284] : memref<32x5xf32, #tpu.memory_space<vmem>>, vector<32x1xf32>
    %c0_285 = arith.constant 0 : index
    %c15_286 = arith.constant 15 : index
    %312 = vector.load %arg22[%c0_285, %c15_286] : memref<32x30xf32, #tpu.memory_space<vmem>>, vector<32x13xf32>
    %313 = vector.broadcast %311 : vector<32x1xf32> to vector<32x13xf32>
    %314 = arith.mulf %313, %312 : vector<32x13xf32>
    %315 = arith.addf %310, %314 : vector<32x13xf32>
    %c0_287 = arith.constant 0 : index
    %c2_288 = arith.constant 2 : index
    %316 = vector.load %arg11[%c0_287, %c2_288] : memref<32x5xf32, #tpu.memory_space<vmem>>, vector<32x1xf32>
    %c0_289 = arith.constant 0 : index
    %c1_290 = arith.constant 1 : index
    %317 = vector.load %arg22[%c0_289, %c1_290] : memref<32x30xf32, #tpu.memory_space<vmem>>, vector<32x13xf32>
    %318 = vector.broadcast %316 : vector<32x1xf32> to vector<32x13xf32>
    %319 = arith.mulf %318, %317 : vector<32x13xf32>
    %320 = arith.addf %315, %319 : vector<32x13xf32>
    %c0_291 = arith.constant 0 : index
    %c3_292 = arith.constant 3 : index
    %321 = vector.load %arg11[%c0_291, %c3_292] : memref<32x5xf32, #tpu.memory_space<vmem>>, vector<32x1xf32>
    %c0_293 = arith.constant 0 : index
    %c16_294 = arith.constant 16 : index
    %322 = vector.load %arg22[%c0_293, %c16_294] : memref<32x30xf32, #tpu.memory_space<vmem>>, vector<32x13xf32>
    %323 = vector.broadcast %321 : vector<32x1xf32> to vector<32x13xf32>
    %324 = arith.mulf %323, %322 : vector<32x13xf32>
    %325 = arith.addf %320, %324 : vector<32x13xf32>
    %c0_295 = arith.constant 0 : index
    %c4_296 = arith.constant 4 : index
    %326 = vector.load %arg11[%c0_295, %c4_296] : memref<32x5xf32, #tpu.memory_space<vmem>>, vector<32x1xf32>
    %c0_297 = arith.constant 0 : index
    %c2_298 = arith.constant 2 : index
    %327 = vector.load %arg22[%c0_297, %c2_298] : memref<32x30xf32, #tpu.memory_space<vmem>>, vector<32x13xf32>
    %328 = vector.broadcast %326 : vector<32x1xf32> to vector<32x13xf32>
    %329 = arith.mulf %328, %327 : vector<32x13xf32>
    %330 = arith.addf %325, %329 : vector<32x13xf32>
    %c0_299 = arith.constant 0 : index
    %c0_300 = arith.constant 0 : index
    %331 = vector.load %arg23[%c0_299, %c0_300] : memref<32x26xf32, #tpu.memory_space<vmem>>, vector<32x13xf32>
    tpu.vector_store %arg23[%c0_299, %c0_300], %330 {strides = array<i32>} : memref<32x26xf32, #tpu.memory_space<vmem>>, vector<32x13xf32>,
    %cst_301 = arith.constant 0.000000e+00 : f32
    %332 = vector.broadcast %cst_301 : f32 to vector<32x13xf32>
    %c0_302 = arith.constant 0 : index
    %c0_303 = arith.constant 0 : index
    %333 = vector.load %arg11[%c0_302, %c0_303] : memref<32x5xf32, #tpu.memory_space<vmem>>, vector<32x1xf32>
    %c0_304 = arith.constant 0 : index
    %c15_305 = arith.constant 15 : index
    %334 = vector.load %arg22[%c0_304, %c15_305] : memref<32x30xf32, #tpu.memory_space<vmem>>, vector<32x13xf32>
    %335 = vector.broadcast %333 : vector<32x1xf32> to vector<32x13xf32>
    %336 = arith.mulf %335, %334 : vector<32x13xf32>
    %337 = arith.addf %332, %336 : vector<32x13xf32>
    %c0_306 = arith.constant 0 : index
    %c1_307 = arith.constant 1 : index
    %338 = vector.load %arg11[%c0_306, %c1_307] : memref<32x5xf32, #tpu.memory_space<vmem>>, vector<32x1xf32>
    %c0_308 = arith.constant 0 : index
    %c1_309 = arith.constant 1 : index
    %339 = vector.load %arg22[%c0_308, %c1_309] : memref<32x30xf32, #tpu.memory_space<vmem>>, vector<32x13xf32>
    %340 = vector.broadcast %338 : vector<32x1xf32> to vector<32x13xf32>
    %341 = arith.mulf %340, %339 : vector<32x13xf32>
    %342 = arith.addf %337, %341 : vector<32x13xf32>
    %c0_310 = arith.constant 0 : index
    %c2_311 = arith.constant 2 : index
    %343 = vector.load %arg11[%c0_310, %c2_311] : memref<32x5xf32, #tpu.memory_space<vmem>>, vector<32x1xf32>
    %c0_312 = arith.constant 0 : index
    %c16_313 = arith.constant 16 : index
    %344 = vector.load %arg22[%c0_312, %c16_313] : memref<32x30xf32, #tpu.memory_space<vmem>>, vector<32x13xf32>
    %345 = vector.broadcast %343 : vector<32x1xf32> to vector<32x13xf32>
    %346 = arith.mulf %345, %344 : vector<32x13xf32>
    %347 = arith.addf %342, %346 : vector<32x13xf32>
    %c0_314 = arith.constant 0 : index
    %c3_315 = arith.constant 3 : index
    %348 = vector.load %arg11[%c0_314, %c3_315] : memref<32x5xf32, #tpu.memory_space<vmem>>, vector<32x1xf32>
    %c0_316 = arith.constant 0 : index
    %c2_317 = arith.constant 2 : index
    %349 = vector.load %arg22[%c0_316, %c2_317] : memref<32x30xf32, #tpu.memory_space<vmem>>, vector<32x13xf32>
    %350 = vector.broadcast %348 : vector<32x1xf32> to vector<32x13xf32>
    %351 = arith.mulf %350, %349 : vector<32x13xf32>
    %352 = arith.addf %347, %351 : vector<32x13xf32>
    %c0_318 = arith.constant 0 : index
    %c4_319 = arith.constant 4 : index
    %353 = vector.load %arg11[%c0_318, %c4_319] : memref<32x5xf32, #tpu.memory_space<vmem>>, vector<32x1xf32>
    %c0_320 = arith.constant 0 : index
    %c17_321 = arith.constant 17 : index
    %354 = vector.load %arg22[%c0_320, %c17_321] : memref<32x30xf32, #tpu.memory_space<vmem>>, vector<32x13xf32>
    %355 = vector.broadcast %353 : vector<32x1xf32> to vector<32x13xf32>
    %356 = arith.mulf %355, %354 : vector<32x13xf32>
    %357 = arith.addf %352, %356 : vector<32x13xf32>
    %c0_322 = arith.constant 0 : index
    %c13 = arith.constant 13 : index
    %358 = vector.load %arg23[%c0_322, %c13] : memref<32x26xf32, #tpu.memory_space<vmem>>, vector<32x13xf32>
    tpu.vector_store %arg23[%c0_322, %c13], %357 {strides = array<i32>} : memref<32x26xf32, #tpu.memory_space<vmem>>, vector<32x13xf32>,
    %c0_323 = arith.constant 0 : index
    %c0_324 = arith.constant 0 : index
    %359 = vector.load %arg23[%c0_323, %c0_324] : memref<32x26xf32, #tpu.memory_space<vmem>>, vector<32x26xf32>
    %c0_325 = arith.constant 0 : index
    %c0_326 = arith.constant 0 : index
    %360 = vector.load %arg12[%c0_325, %c0_326] : memref<32x1xf32, #tpu.memory_space<vmem>>, vector<32x1xf32>
    %361 = vector.broadcast %360 : vector<32x1xf32> to vector<32x26xf32>
    %362 = arith.addf %359, %361 : vector<32x26xf32>
    %c0_327 = arith.constant 0 : index
    %c0_328 = arith.constant 0 : index
    %363 = vector.load %arg13[%c0_327, %c0_328] : memref<32x32xf32, #tpu.memory_space<vmem>>, vector<32x32xf32>
    %cst_329 = arith.constant dense<0.000000e+00> : vector<32x26xf32>
    %364 = tpu.matmul %363, %362, %cst_329 {dimension_numbers = #tpu.dot_dimension_numbers<[1], [0], [0], [1], [0, 0, 1, 1], [], []>} : vector<32x32xf32>, vector<32x26xf32>, vector<32x26xf32> -> vector<32x26xf32>
    %c0_330 = arith.constant 0 : index
    %c0_331 = arith.constant 0 : index
    %365 = vector.load %arg14[%c0_330, %c0_331] : memref<32x1xf32, #tpu.memory_space<vmem>>, vector<32x1xf32>
    %366 = vector.broadcast %365 : vector<32x1xf32> to vector<32x26xf32>
    %367 = arith.addf %364, %366 : vector<32x26xf32>
    %cst_332 = arith.constant 0.000000e+00 : f32
    %368 = vector.broadcast %cst_332 : f32 to vector<32x26xf32>
    %369 = arith.maximumf %367, %368 : vector<32x26xf32>
    %c0_333 = arith.constant 0 : index
    %c0_334 = arith.constant 0 : index
    %370 = vector.load %arg15[%c0_333, %c0_334] : memref<32x1xf32, #tpu.memory_space<vmem>>, vector<32x1xf32>
    %371 = vector.broadcast %370 : vector<32x1xf32> to vector<32x26xf32>
    %372 = arith.mulf %369, %371 : vector<32x26xf32>
    %c0_335 = arith.constant 0 : index
    %c0_336 = arith.constant 0 : index
    %373 = vector.load %arg16[%c0_335, %c0_336] : memref<32x1xf32, #tpu.memory_space<vmem>>, vector<32x1xf32>
    %374 = vector.broadcast %373 : vector<32x1xf32> to vector<32x26xf32>
    %375 = arith.addf %372, %374 : vector<32x26xf32>
    %c0_337 = arith.constant 0 : index
    %c0_338 = arith.constant 0 : index
    %376 = vector.load %arg24[%c0_337, %c0_338] : memref<32x26xf32, #tpu.memory_space<vmem>>, vector<32x26xf32>
    tpu.vector_store %arg24[%c0_337, %c0_338], %375 {strides = array<i32>} : memref<32x26xf32, #tpu.memory_space<vmem>>, vector<32x26xf32>,
    %c0_339 = arith.constant 0 : index
    %c0_340 = arith.constant 0 : index
    %377 = vector.load %arg24[%c0_339, %c0_340] : memref<32x26xf32, #tpu.memory_space<vmem>>, vector<32x13xf32>
    %c0_341 = arith.constant 0 : index
    %c13_342 = arith.constant 13 : index
    %378 = vector.load %arg24[%c0_341, %c13_342] : memref<32x26xf32, #tpu.memory_space<vmem>>, vector<32x13xf32>
    %379 = arith.addf %377, %378 : vector<32x13xf32>
    %cst_343 = arith.constant 5.000000e-01 : f32
    %380 = vector.broadcast %cst_343 : f32 to vector<32x13xf32>
    %381 = arith.mulf %379, %380 : vector<32x13xf32>
    %c0_344 = arith.constant 0 : index
    %c0_345 = arith.constant 0 : index
    %c0_346 = arith.constant 0 : index
    %382 = vector.load %arg17[%c0_344, %c0_345, %c0_346] : memref<1x32x13xf32, #tpu.memory_space<vmem>>, vector<1x32x13xf32>
    %383 = vector.shape_cast %382 : vector<1x32x13xf32> to vector<32x13xf32>
    %384 = vector.shape_cast %381 : vector<32x13xf32> to vector<1x32x13xf32>
    tpu.vector_store %arg17[%c0_344, %c0_345, %c0_346], %384 {strides = array<i32>} : memref<1x32x13xf32, #tpu.memory_space<vmem>>, vector<1x32x13xf32>,
    return
  }
  func.func @transform_0(%arg0: i32) -> (i32, i32, i32) {
    %c0_i32 = arith.constant 0 : i32
    %c0_i32_0 = arith.constant 0 : i32
    %c0_i32_1 = arith.constant 0 : i32
    return %arg0, %c0_i32, %c0_i32_0 : i32, i32, i32
  }
  func.func @transform_1(%arg0: i32) -> (i32, i32) {
    %c0_i32 = arith.constant 0 : i32
    %c0_i32_0 = arith.constant 0 : i32
    %c0_i32_1 = arith.constant 0 : i32
    return %c0_i32, %c0_i32_0 : i32, i32
  }
  func.func @transform_2(%arg0: i32) -> (i32, i32) {
    %c0_i32 = arith.constant 0 : i32
    %c0_i32_0 = arith.constant 0 : i32
    %c0_i32_1 = arith.constant 0 : i32
    return %c0_i32, %c0_i32_0 : i32, i32
  }
  func.func @transform_3(%arg0: i32) -> (i32, i32) {
    %c0_i32 = arith.constant 0 : i32
    %c0_i32_0 = arith.constant 0 : i32
    %c0_i32_1 = arith.constant 0 : i32
    return %c0_i32, %c0_i32_0 : i32, i32
  }
  func.func @transform_4(%arg0: i32) -> (i32, i32) {
    %c0_i32 = arith.constant 0 : i32
    %c0_i32_0 = arith.constant 0 : i32
    %c0_i32_1 = arith.constant 0 : i32
    return %c0_i32, %c0_i32_0 : i32, i32
  }
  func.func @transform_5(%arg0: i32) -> (i32, i32) {
    %c0_i32 = arith.constant 0 : i32
    %c0_i32_0 = arith.constant 0 : i32
    %c0_i32_1 = arith.constant 0 : i32
    return %c0_i32, %c0_i32_0 : i32, i32
  }
  func.func @transform_6(%arg0: i32) -> (i32, i32) {
    %c0_i32 = arith.constant 0 : i32
    %c0_i32_0 = arith.constant 0 : i32
    %c0_i32_1 = arith.constant 0 : i32
    return %c0_i32, %c0_i32_0 : i32, i32
  }
  func.func @transform_7(%arg0: i32) -> (i32, i32) {
    %c0_i32 = arith.constant 0 : i32
    %c0_i32_0 = arith.constant 0 : i32
    %c0_i32_1 = arith.constant 0 : i32
    return %c0_i32, %c0_i32_0 : i32, i32
  }
  func.func @transform_8(%arg0: i32) -> (i32, i32) {
    %c0_i32 = arith.constant 0 : i32
    %c0_i32_0 = arith.constant 0 : i32
    %c0_i32_1 = arith.constant 0 : i32
    return %c0_i32, %c0_i32_0 : i32, i32
  }
  func.func @transform_9(%arg0: i32) -> (i32, i32) {
    %c0_i32 = arith.constant 0 : i32
    %c0_i32_0 = arith.constant 0 : i32
    %c0_i32_1 = arith.constant 0 : i32
    return %c0_i32, %c0_i32_0 : i32, i32
  }
  func.func @transform_10(%arg0: i32) -> (i32, i32) {
    %c0_i32 = arith.constant 0 : i32
    %c0_i32_0 = arith.constant 0 : i32
    %c0_i32_1 = arith.constant 0 : i32
    return %c0_i32, %c0_i32_0 : i32, i32
  }
  func.func @transform_11(%arg0: i32) -> (i32, i32) {
    %c0_i32 = arith.constant 0 : i32
    %c0_i32_0 = arith.constant 0 : i32
    %c0_i32_1 = arith.constant 0 : i32
    return %c0_i32, %c0_i32_0 : i32, i32
  }
  func.func @transform_12(%arg0: i32) -> (i32, i32) {
    %c0_i32 = arith.constant 0 : i32
    %c0_i32_0 = arith.constant 0 : i32
    %c0_i32_1 = arith.constant 0 : i32
    return %c0_i32, %c0_i32_0 : i32, i32
  }
  func.func @transform_13(%arg0: i32) -> (i32, i32) {
    %c0_i32 = arith.constant 0 : i32
    %c0_i32_0 = arith.constant 0 : i32
    %c0_i32_1 = arith.constant 0 : i32
    return %c0_i32, %c0_i32_0 : i32, i32
  }
  func.func @transform_14(%arg0: i32) -> (i32, i32) {
    %c0_i32 = arith.constant 0 : i32
    %c0_i32_0 = arith.constant 0 : i32
    %c0_i32_1 = arith.constant 0 : i32
    return %c0_i32, %c0_i32_0 : i32, i32
  }
  func.func @transform_15(%arg0: i32) -> (i32, i32) {
    %c0_i32 = arith.constant 0 : i32
    %c0_i32_0 = arith.constant 0 : i32
    %c0_i32_1 = arith.constant 0 : i32
    return %c0_i32, %c0_i32_0 : i32, i32
  }
  func.func @transform_16(%arg0: i32) -> (i32, i32, i32) {
    %c0_i32 = arith.constant 0 : i32
    %c0_i32_0 = arith.constant 0 : i32
    %c0_i32_1 = arith.constant 0 : i32
    return %arg0, %c0_i32, %c0_i32_0 : i32, i32, i32
  }
}

</mosaic_0001>

<llo_original>
// kernel: tpu_custom_call.1
$region0: #{tpu_custom_call.1}
  #allocation0 [shape = 'u32[]', space=smem, size = 0x4, offset = 0x4, fixed_abs, tag = 'smem constant byte address 0x4 - core index']
  #allocation1 [shape = 'u32[72,128]{1,0:T(1,128)}', space=vmem, size = 0x9000, scoped, tag = 'internal scratch']
  #allocation2 [shape = 'f32[34,128]{1,0:T(8,128)}', space=vmem, size = 0x5000, scoped, tag = 'scratch operand']
  #allocation3 [shape = 'f32[16,128]{1,0:T(8,128)}', space=vmem, size = 0x2000, scoped, tag = 'scratch operand']
  #allocation4 [shape = 'f32[16,60]{1,0:T(8,128)}', space=vmem, size = 0x2000, scoped, tag = 'scratch operand']
  #allocation5 [shape = 'f32[32,60]{1,0:T(8,128)}', space=vmem, size = 0x4000, scoped, tag = 'scratch operand']
  #allocation6 [shape = 'f32[32,30]{1,0:T(8,128)}', space=vmem, size = 0x4000, scoped, tag = 'scratch operand']
  #allocation7 [shape = 'f32[32,26]{1,0:T(8,128)}', space=vmem, size = 0x4000, scoped, tag = 'scratch operand']
  #allocation8 [shape = 'f32[32,26]{1,0:T(8,128)}', space=vmem, size = 0x4000, scoped, tag = 'scratch operand']
  %s0 = inlined_call_operand.vmem [shape: f32[2,16,18], index: 0, kind: input, shape index: {}]
  %s1 = inlined_call_operand.vmem [shape: f32[32,34], index: 1, kind: input, shape index: {}]
  %s2 = inlined_call_operand.vmem [shape: f32[32,1], index: 2, kind: input, shape index: {}]
  %s3 = inlined_call_operand.vmem [shape: f32[32,1], index: 3, kind: input, shape index: {}]
  %s4 = inlined_call_operand.vmem [shape: f32[16,9], index: 4, kind: input, shape index: {}]
  %s5 = inlined_call_operand.vmem [shape: f32[16,1], index: 5, kind: input, shape index: {}]
  %s6 = inlined_call_operand.vmem [shape: f32[32,16], index: 6, kind: input, shape index: {}]
  %s7 = inlined_call_operand.vmem [shape: f32[32,1], index: 7, kind: input, shape index: {}]
  %s8 = inlined_call_operand.vmem [shape: f32[32,1], index: 8, kind: input, shape index: {}]
  %s9 = inlined_call_operand.vmem [shape: f32[32,1], index: 9, kind: input, shape index: {}]
  %s10 = inlined_call_operand.vmem [shape: f32[32,5], index: 10, kind: input, shape index: {}]
  %s11 = inlined_call_operand.vmem [shape: f32[32,1], index: 11, kind: input, shape index: {}]
  %s12 = inlined_call_operand.vmem [shape: f32[32,32], index: 12, kind: input, shape index: {}]
  %s13 = inlined_call_operand.vmem [shape: f32[32,1], index: 13, kind: input, shape index: {}]
  %s14 = inlined_call_operand.vmem [shape: f32[32,1], index: 14, kind: input, shape index: {}]
  %s15 = inlined_call_operand.vmem [shape: f32[32,1], index: 15, kind: input, shape index: {}]
  %s16 = inlined_call_operand.vmem [shape: f32[2,32,13], index: 16, kind: output, shape index: {}]
  %s17 = sld [smem:[#allocation0]]
  $region97: #{tpu_custom_call.1} parent=0
    _
  %s19 = ssub.s32 1, %s17
  %s20 = scalar_select 0, %s19, %s17
  loop: start=0, step=1, limit=4
  $region2: #{tpu_custom_call.1} parent=0 // loop_pre_header
    _
  $region3: #{tpu_custom_call.1} parent=0 // loop_header
    %s22 = sphi 0, %s26
    %p23 = scmp.ge.s32.totalorder %s22, 4
    %s32 = sphi 0, %s34
    %s35 = sphi 0, %s32
    %s36 = sphi 0, %s35
    %s52 = sphi 0, %s36
    %s56 = sphi 0, %s56
    %s58 = sphi 0, %s56
    %s59 = sphi 0, %s58
    %s73 = sphi 0, %s59
    %s77 = sphi 0, %s77
    %s79 = sphi 0, %s77
    %s80 = sphi 0, %s79
    %s94 = sphi 0, %s80
    %s98 = sphi 0, %s98
    %s100 = sphi 0, %s98
    %s101 = sphi 0, %s100
    %s115 = sphi 0, %s101
    %s119 = sphi 0, %s119
    %s121 = sphi 0, %s119
    %s122 = sphi 0, %s121
    %s136 = sphi 0, %s122
    %s140 = sphi 0, %s140
    %s142 = sphi 0, %s140
    %s143 = sphi 0, %s142
    %s157 = sphi 0, %s143
    %s161 = sphi 0, %s161
    %s163 = sphi 0, %s161
    %s164 = sphi 0, %s163
    %s178 = sphi 0, %s164
    %s182 = sphi 0, %s182
    %s184 = sphi 0, %s182
    %s185 = sphi 0, %s184
    %s199 = sphi 0, %s185
    %s203 = sphi 0, %s203
    %s205 = sphi 0, %s203
    %s206 = sphi 0, %s205
    %s220 = sphi 0, %s206
    %s224 = sphi 0, %s224
    %s226 = sphi 0, %s224
    %s227 = sphi 0, %s226
    %s241 = sphi 0, %s227
    %s245 = sphi 0, %s245
    %s247 = sphi 0, %s245
    %s248 = sphi 0, %s247
    %s262 = sphi 0, %s248
    %s266 = sphi 0, %s266
    %s268 = sphi 0, %s266
    %s269 = sphi 0, %s268
    %s283 = sphi 0, %s269
    %s287 = sphi 0, %s287
    %s289 = sphi 0, %s287
    %s290 = sphi 0, %s289
    %s304 = sphi 0, %s290
    %s308 = sphi 0, %s308
    %s310 = sphi 0, %s308
    %s311 = sphi 0, %s310
    %s325 = sphi 0, %s311
    %s329 = sphi 0, %s329
    %s331 = sphi 0, %s329
    %s332 = sphi 0, %s331
    %s346 = sphi 0, %s332
    %s350 = sphi 0, %s350
    %s352 = sphi 0, %s350
    %s353 = sphi 0, %s352
    %s367 = sphi 0, %s353
    %s373 = sphi 0, %s375
    %s376 = sphi 0, %s373
    %s377 = sphi 0, %s376
    %s393 = sphi 0, %s377
  $region4: #{tpu_custom_call.1} parent=0 // loop_header_branch
    %25 = sbr.rel (%p23) target = $region8
  $region5: #{tpu_custom_call.1} parent=0 // loop_body
    %s27 = ssub.s32 %s22, 1
    %s28 = ssub.s32 %s22, 2
    %s29 = sadd.s32 %s22, 1
    %s30 = ssub.s32 %s22, %s29
    %p31 = scmp.eq.s32.totalorder %s30, 0
    %s33 = sadd.s32 %s32, 1
    %s34 = scalar_select %p31, %s32, %s33
    %p37 = pneg %p31
    %p38 = scmp.eq.s32.totalorder %s22, 1
    %p39 = por %p37, %p38
    %p40 = scmp.ne.s32.totalorder %s32, %s35
    %p41 = scmp.eq.s32.totalorder %s22, 0
    %p42 = por %p40, %p41
    %p43 = scmp.ne.s32.totalorder %s32, %s35
    %p44 = scmp.eq.s32.totalorder %s27, 1
    %p45 = por %p43, %p44
    %p46 = scmp.ne.s32.totalorder %s35, %s36
    %p47 = scmp.eq.s32.totalorder %s27, 0
    %p48 = por %p46, %p47
    %p49 = scmp.ne.s32.totalorder %s35, %s36
    %p50 = scmp.eq.s32.totalorder %s28, 1
    %p51 = por %p49, %p50
    %p53 = scmp.ne.s32.totalorder %s36, %s52
    %p54 = scmp.eq.s32.totalorder %s28, 0
    %p55 = por %p53, %p54
    %s57 = sadd.s32 %s56, 1
    %p60 = scmp.eq.s32.totalorder %s22, 1
    %p61 = scmp.ne.s32.totalorder %s56, %s58
    %p62 = scmp.eq.s32.totalorder %s22, 0
    %p63 = por %p61, %p62
    %p64 = scmp.ne.s32.totalorder %s56, %s58
    %p65 = scmp.eq.s32.totalorder %s27, 1
    %p66 = por %p64, %p65
    %p67 = scmp.ne.s32.totalorder %s58, %s59
    %p68 = scmp.eq.s32.totalorder %s27, 0
    %p69 = por %p67, %p68
    %p70 = scmp.ne.s32.totalorder %s58, %s59
    %p71 = scmp.eq.s32.totalorder %s28, 1
    %p72 = por %p70, %p71
    %p74 = scmp.ne.s32.totalorder %s59, %s73
    %p75 = scmp.eq.s32.totalorder %s28, 0
    %p76 = por %p74, %p75
    %s78 = sadd.s32 %s77, 1
    %p81 = scmp.eq.s32.totalorder %s22, 1
    %p82 = scmp.ne.s32.totalorder %s77, %s79
    %p83 = scmp.eq.s32.totalorder %s22, 0
    %p84 = por %p82, %p83
    %p85 = scmp.ne.s32.totalorder %s77, %s79
    %p86 = scmp.eq.s32.totalorder %s27, 1
    %p87 = por %p85, %p86
    %p88 = scmp.ne.s32.totalorder %s79, %s80
    %p89 = scmp.eq.s32.totalorder %s27, 0
    %p90 = por %p88, %p89
    %p91 = scmp.ne.s32.totalorder %s79, %s80
    %p92 = scmp.eq.s32.totalorder %s28, 1
    %p93 = por %p91, %p92
    %p95 = scmp.ne.s32.totalorder %s80, %s94
    %p96 = scmp.eq.s32.totalorder %s28, 0
    %p97 = por %p95, %p96
    %s99 = sadd.s32 %s98, 1
    %p102 = scmp.eq.s32.totalorder %s22, 1
    %p103 = scmp.ne.s32.totalorder %s98, %s100
    %p104 = scmp.eq.s32.totalorder %s22, 0
    %p105 = por %p103, %p104
    %p106 = scmp.ne.s32.totalorder %s98, %s100
    %p107 = scmp.eq.s32.totalorder %s27, 1
    %p108 = por %p106, %p107
    %p109 = scmp.ne.s32.totalorder %s100, %s101
    %p110 = scmp.eq.s32.totalorder %s27, 0
    %p111 = por %p109, %p110
    %p112 = scmp.ne.s32.totalorder %s100, %s101
    %p113 = scmp.eq.s32.totalorder %s28, 1
    %p114 = por %p112, %p113
    %p116 = scmp.ne.s32.totalorder %s101, %s115
    %p117 = scmp.eq.s32.totalorder %s28, 0
    %p118 = por %p116, %p117
    %s120 = sadd.s32 %s119, 1
    %p123 = scmp.eq.s32.totalorder %s22, 1
    %p124 = scmp.ne.s32.totalorder %s119, %s121
    %p125 = scmp.eq.s32.totalorder %s22, 0
    %p126 = por %p124, %p125
    %p127 = scmp.ne.s32.totalorder %s119, %s121
    %p128 = scmp.eq.s32.totalorder %s27, 1
    %p129 = por %p127, %p128
    %p130 = scmp.ne.s32.totalorder %s121, %s122
    %p131 = scmp.eq.s32.totalorder %s27, 0
    %p132 = por %p130, %p131
    %p133 = scmp.ne.s32.totalorder %s121, %s122
    %p134 = scmp.eq.s32.totalorder %s28, 1
    %p135 = por %p133, %p134
    %p137 = scmp.ne.s32.totalorder %s122, %s136
    %p138 = scmp.eq.s32.totalorder %s28, 0
    %p139 = por %p137, %p138
    %s141 = sadd.s32 %s140, 1
    %p144 = scmp.eq.s32.totalorder %s22, 1
    %p145 = scmp.ne.s32.totalorder %s140, %s142
    %p146 = scmp.eq.s32.totalorder %s22, 0
    %p147 = por %p145, %p146
    %p148 = scmp.ne.s32.totalorder %s140, %s142
    %p149 = scmp.eq.s32.totalorder %s27, 1
    %p150 = por %p148, %p149
    %p151 = scmp.ne.s32.totalorder %s142, %s143
    %p152 = scmp.eq.s32.totalorder %s27, 0
    %p153 = por %p151, %p152
    %p154 = scmp.ne.s32.totalorder %s142, %s143
    %p155 = scmp.eq.s32.totalorder %s28, 1
    %p156 = por %p154, %p155
    %p158 = scmp.ne.s32.totalorder %s143, %s157
    %p159 = scmp.eq.s32.totalorder %s28, 0
    %p160 = por %p158, %p159
    %s162 = sadd.s32 %s161, 1
    %p165 = scmp.eq.s32.totalorder %s22, 1
    %p166 = scmp.ne.s32.totalorder %s161, %s163
    %p167 = scmp.eq.s32.totalorder %s22, 0
    %p168 = por %p166, %p167
    %p169 = scmp.ne.s32.totalorder %s161, %s163
    %p170 = scmp.eq.s32.totalorder %s27, 1
    %p171 = por %p169, %p170
    %p172 = scmp.ne.s32.totalorder %s163, %s164
    %p173 = scmp.eq.s32.totalorder %s27, 0
    %p174 = por %p172, %p173
    %p175 = scmp.ne.s32.totalorder %s163, %s164
    %p176 = scmp.eq.s32.totalorder %s28, 1
    %p177 = por %p175, %p176
    %p179 = scmp.ne.s32.totalorder %s164, %s178
    %p180 = scmp.eq.s32.totalorder %s28, 0
    %p181 = por %p179, %p180
    %s183 = sadd.s32 %s182, 1
    %p186 = scmp.eq.s32.totalorder %s22, 1
    %p187 = scmp.ne.s32.totalorder %s182, %s184
    %p188 = scmp.eq.s32.totalorder %s22, 0
    %p189 = por %p187, %p188
    %p190 = scmp.ne.s32.totalorder %s182, %s184
    %p191 = scmp.eq.s32.totalorder %s27, 1
    %p192 = por %p190, %p191
    %p193 = scmp.ne.s32.totalorder %s184, %s185
    %p194 = scmp.eq.s32.totalorder %s27, 0
    %p195 = por %p193, %p194
    %p196 = scmp.ne.s32.totalorder %s184, %s185
    %p197 = scmp.eq.s32.totalorder %s28, 1
    %p198 = por %p196, %p197
    %p200 = scmp.ne.s32.totalorder %s185, %s199
    %p201 = scmp.eq.s32.totalorder %s28, 0
    %p202 = por %p200, %p201
    %s204 = sadd.s32 %s203, 1
    %p207 = scmp.eq.s32.totalorder %s22, 1
    %p208 = scmp.ne.s32.totalorder %s203, %s205
    %p209 = scmp.eq.s32.totalorder %s22, 0
    %p210 = por %p208, %p209
    %p211 = scmp.ne.s32.totalorder %s203, %s205
    %p212 = scmp.eq.s32.totalorder %s27, 1
    %p213 = por %p211, %p212
    %p214 = scmp.ne.s32.totalorder %s205, %s206
    %p215 = scmp.eq.s32.totalorder %s27, 0
    %p216 = por %p214, %p215
    %p217 = scmp.ne.s32.totalorder %s205, %s206
    %p218 = scmp.eq.s32.totalorder %s28, 1
    %p219 = por %p217, %p218
    %p221 = scmp.ne.s32.totalorder %s206, %s220
    %p222 = scmp.eq.s32.totalorder %s28, 0
    %p223 = por %p221, %p222
    %s225 = sadd.s32 %s224, 1
    %p228 = scmp.eq.s32.totalorder %s22, 1
    %p229 = scmp.ne.s32.totalorder %s224, %s226
    %p230 = scmp.eq.s32.totalorder %s22, 0
    %p231 = por %p229, %p230
    %p232 = scmp.ne.s32.totalorder %s224, %s226
    %p233 = scmp.eq.s32.totalorder %s27, 1
    %p234 = por %p232, %p233
    %p235 = scmp.ne.s32.totalorder %s226, %s227
    %p236 = scmp.eq.s32.totalorder %s27, 0
    %p237 = por %p235, %p236
    %p238 = scmp.ne.s32.totalorder %s226, %s227
    %p239 = scmp.eq.s32.totalorder %s28, 1
    %p240 = por %p238, %p239
    %p242 = scmp.ne.s32.totalorder %s227, %s241
    %p243 = scmp.eq.s32.totalorder %s28, 0
    %p244 = por %p242, %p243
    %s246 = sadd.s32 %s245, 1
    %p249 = scmp.eq.s32.totalorder %s22, 1
    %p250 = scmp.ne.s32.totalorder %s245, %s247
    %p251 = scmp.eq.s32.totalorder %s22, 0
    %p252 = por %p250, %p251
    %p253 = scmp.ne.s32.totalorder %s245, %s247
    %p254 = scmp.eq.s32.totalorder %s27, 1
    %p255 = por %p253, %p254
    %p256 = scmp.ne.s32.totalorder %s247, %s248
    %p257 = scmp.eq.s32.totalorder %s27, 0
    %p258 = por %p256, %p257
    %p259 = scmp.ne.s32.totalorder %s247, %s248
    %p260 = scmp.eq.s32.totalorder %s28, 1
    %p261 = por %p259, %p260
    %p263 = scmp.ne.s32.totalorder %s248, %s262
    %p264 = scmp.eq.s32.totalorder %s28, 0
    %p265 = por %p263, %p264
    %s267 = sadd.s32 %s266, 1
    %p270 = scmp.eq.s32.totalorder %s22, 1
    %p271 = scmp.ne.s32.totalorder %s266, %s268
    %p272 = scmp.eq.s32.totalorder %s22, 0
    %p273 = por %p271, %p272
    %p274 = scmp.ne.s32.totalorder %s266, %s268
    %p275 = scmp.eq.s32.totalorder %s27, 1
    %p276 = por %p274, %p275
    %p277 = scmp.ne.s32.totalorder %s268, %s269
    %p278 = scmp.eq.s32.totalorder %s27, 0
    %p279 = por %p277, %p278
    %p280 = scmp.ne.s32.totalorder %s268, %s269
    %p281 = scmp.eq.s32.totalorder %s28, 1
    %p282 = por %p280, %p281
    %p284 = scmp.ne.s32.totalorder %s269, %s283
    %p285 = scmp.eq.s32.totalorder %s28, 0
    %p286 = por %p284, %p285
    %s288 = sadd.s32 %s287, 1
    %p291 = scmp.eq.s32.totalorder %s22, 1
    %p292 = scmp.ne.s32.totalorder %s287, %s289
    %p293 = scmp.eq.s32.totalorder %s22, 0
    %p294 = por %p292, %p293
    %p295 = scmp.ne.s32.totalorder %s287, %s289
    %p296 = scmp.eq.s32.totalorder %s27, 1
    %p297 = por %p295, %p296
    %p298 = scmp.ne.s32.totalorder %s289, %s290
    %p299 = scmp.eq.s32.totalorder %s27, 0
    %p300 = por %p298, %p299
    %p301 = scmp.ne.s32.totalorder %s289, %s290
    %p302 = scmp.eq.s32.totalorder %s28, 1
    %p303 = por %p301, %p302
    %p305 = scmp.ne.s32.totalorder %s290, %s304
    %p306 = scmp.eq.s32.totalorder %s28, 0
    %p307 = por %p305, %p306
    %s309 = sadd.s32 %s308, 1
    %p312 = scmp.eq.s32.totalorder %s22, 1
    %p313 = scmp.ne.s32.totalorder %s308, %s310
    %p314 = scmp.eq.s32.totalorder %s22, 0
    %p315 = por %p313, %p314
    %p316 = scmp.ne.s32.totalorder %s308, %s310
    %p317 = scmp.eq.s32.totalorder %s27, 1
    %p318 = por %p316, %p317
    %p319 = scmp.ne.s32.totalorder %s310, %s311
    %p320 = scmp.eq.s32.totalorder %s27, 0
    %p321 = por %p319, %p320
    %p322 = scmp.ne.s32.totalorder %s310, %s311
    %p323 = scmp.eq.s32.totalorder %s28, 1
    %p324 = por %p322, %p323
    %p326 = scmp.ne.s32.totalorder %s311, %s325
    %p327 = scmp.eq.s32.totalorder %s28, 0
    %p328 = por %p326, %p327
    %s330 = sadd.s32 %s329, 1
    %p333 = scmp.eq.s32.totalorder %s22, 1
    %p334 = scmp.ne.s32.totalorder %s329, %s331
    %p335 = scmp.eq.s32.totalorder %s22, 0
    %p336 = por %p334, %p335
    %p337 = scmp.ne.s32.totalorder %s329, %s331
    %p338 = scmp.eq.s32.totalorder %s27, 1
    %p339 = por %p337, %p338
    %p340 = scmp.ne.s32.totalorder %s331, %s332
    %p341 = scmp.eq.s32.totalorder %s27, 0
    %p342 = por %p340, %p341
    %p343 = scmp.ne.s32.totalorder %s331, %s332
    %p344 = scmp.eq.s32.totalorder %s28, 1
    %p345 = por %p343, %p344
    %p347 = scmp.ne.s32.totalorder %s332, %s346
    %p348 = scmp.eq.s32.totalorder %s28, 0
    %p349 = por %p347, %p348
    %s351 = sadd.s32 %s350, 1
    %p354 = scmp.eq.s32.totalorder %s22, 1
    %p355 = scmp.ne.s32.totalorder %s350, %s352
    %p356 = scmp.eq.s32.totalorder %s22, 0
    %p357 = por %p355, %p356
    %p358 = scmp.ne.s32.totalorder %s350, %s352
    %p359 = scmp.eq.s32.totalorder %s27, 1
    %p360 = por %p358, %p359
    %p361 = scmp.ne.s32.totalorder %s352, %s353
    %p362 = scmp.eq.s32.totalorder %s27, 0
    %p363 = por %p361, %p362
    %p364 = scmp.ne.s32.totalorder %s352, %s353
    %p365 = scmp.eq.s32.totalorder %s28, 1
    %p366 = por %p364, %p365
    %p368 = scmp.ne.s32.totalorder %s353, %s367
    %p369 = scmp.eq.s32.totalorder %s28, 0
    %p370 = por %p368, %p369
    %s371 = ssub.s32 %s22, %s29
    %p372 = scmp.eq.s32.totalorder %s371, 0
    %s374 = sadd.s32 %s373, 1
    %s375 = scalar_select %p372, %s373, %s374
    %p378 = pneg %p372
    %p379 = scmp.eq.s32.totalorder %s22, 1
    %p380 = por %p378, %p379
    %p381 = scmp.ne.s32.totalorder %s373, %s376
    %p382 = scmp.eq.s32.totalorder %s22, 0
    %p383 = por %p381, %p382
    %p384 = scmp.ne.s32.totalorder %s373, %s376
    %p385 = scmp.eq.s32.totalorder %s27, 1
    %p386 = por %p384, %p385
    %p387 = scmp.ne.s32.totalorder %s376, %s377
    %p388 = scmp.eq.s32.totalorder %s27, 0
    %p389 = por %p387, %p388
    %p390 = scmp.ne.s32.totalorder %s376, %s377
    %p391 = scmp.eq.s32.totalorder %s28, 1
    %p392 = por %p390, %p391
    %p394 = scmp.ne.s32.totalorder %s377, %s393
    %p395 = scmp.eq.s32.totalorder %s28, 0
    %p396 = por %p394, %p395
    %p397 = scmp.le.s32.totalorder 1, %s22
    %p398 = scmp.lt.s32.totalorder %s22, 3
    %p399 = pnand %p397, %p398
    %p400 = pneg %p399
    // Predicated region
    $region9: #{tpu_custom_call.1} parent=5 // pred_check
      _
    $region10: #{tpu_custom_call.1} parent=5 // pred_check_branch
      %402 = sbr.rel (%p399) target = $region12
    $region11: #{tpu_custom_call.1} parent=5 // pred_region
      %s403 = ssub.s32 %s22, 1
      // Predicated region
      $region13: #{tpu_custom_call.1} parent=11 // pred_check
        %p404 = pneg %p69
      $region14: #{tpu_custom_call.1} parent=11 // pred_check_branch
        %406 = sbr.rel (%p404) target = $region16
      $region15: #{tpu_custom_call.1} parent=11 // pred_region
        _
      $region16: #{tpu_custom_call.1} parent=11 // pred_fallthru
        _
      // Predicated region
      $region17: #{tpu_custom_call.1} parent=11 // pred_check
        %p407 = pneg %p90
      $region18: #{tpu_custom_call.1} parent=11 // pred_check_branch
        %409 = sbr.rel (%p407) target = $region20
      $region19: #{tpu_custom_call.1} parent=11 // pred_region
        _
      $region20: #{tpu_custom_call.1} parent=11 // pred_fallthru
        _
      // Predicated region
      $region21: #{tpu_custom_call.1} parent=11 // pred_check
        %p410 = pneg %p111
      $region22: #{tpu_custom_call.1} parent=11 // pred_check_branch
        %412 = sbr.rel (%p410) target = $region24
      $region23: #{tpu_custom_call.1} parent=11 // pred_region
        _
      $region24: #{tpu_custom_call.1} parent=11 // pred_fallthru
        _
      // Predicated region
      $region25: #{tpu_custom_call.1} parent=11 // pred_check
        %p413 = pneg %p132
      $region26: #{tpu_custom_call.1} parent=11 // pred_check_branch
        %415 = sbr.rel (%p413) target = $region28
      $region27: #{tpu_custom_call.1} parent=11 // pred_region
        _
      $region28: #{tpu_custom_call.1} parent=11 // pred_fallthru
        _
      // Predicated region
      $region29: #{tpu_custom_call.1} parent=11 // pred_check
        %p416 = pneg %p153
      $region30: #{tpu_custom_call.1} parent=11 // pred_check_branch
        %418 = sbr.rel (%p416) target = $region32
      $region31: #{tpu_custom_call.1} parent=11 // pred_region
        _
      $region32: #{tpu_custom_call.1} parent=11 // pred_fallthru
        _
      // Predicated region
      $region33: #{tpu_custom_call.1} parent=11 // pred_check
        %p419 = pneg %p174
      $region34: #{tpu_custom_call.1} parent=11 // pred_check_branch
        %421 = sbr.rel (%p419) target = $region36
      $region35: #{tpu_custom_call.1} parent=11 // pred_region
        _
      $region36: #{tpu_custom_call.1} parent=11 // pred_fallthru
        _
      // Predicated region
      $region37: #{tpu_custom_call.1} parent=11 // pred_check
        %p422 = pneg %p195
      $region38: #{tpu_custom_call.1} parent=11 // pred_check_branch
        %424 = sbr.rel (%p422) target = $region40
      $region39: #{tpu_custom_call.1} parent=11 // pred_region
        _
      $region40: #{tpu_custom_call.1} parent=11 // pred_fallthru
        _
      // Predicated region
      $region41: #{tpu_custom_call.1} parent=11 // pred_check
        %p425 = pneg %p216
      $region42: #{tpu_custom_call.1} parent=11 // pred_check_branch
        %427 = sbr.rel (%p425) target = $region44
      $region43: #{tpu_custom_call.1} parent=11 // pred_region
        _
      $region44: #{tpu_custom_call.1} parent=11 // pred_fallthru
        _
      // Predicated region
      $region45: #{tpu_custom_call.1} parent=11 // pred_check
        %p428 = pneg %p237
      $region46: #{tpu_custom_call.1} parent=11 // pred_check_branch
        %430 = sbr.rel (%p428) target = $region48
      $region47: #{tpu_custom_call.1} parent=11 // pred_region
        _
      $region48: #{tpu_custom_call.1} parent=11 // pred_fallthru
        _
      // Predicated region
      $region49: #{tpu_custom_call.1} parent=11 // pred_check
        %p431 = pneg %p258
      $region50: #{tpu_custom_call.1} parent=11 // pred_check_branch
        %433 = sbr.rel (%p431) target = $region52
      $region51: #{tpu_custom_call.1} parent=11 // pred_region
        _
      $region52: #{tpu_custom_call.1} parent=11 // pred_fallthru
        _
      // Predicated region
      $region53: #{tpu_custom_call.1} parent=11 // pred_check
        %p434 = pneg %p279
      $region54: #{tpu_custom_call.1} parent=11 // pred_check_branch
        %436 = sbr.rel (%p434) target = $region56
      $region55: #{tpu_custom_call.1} parent=11 // pred_region
        _
      $region56: #{tpu_custom_call.1} parent=11 // pred_fallthru
        _
      // Predicated region
      $region57: #{tpu_custom_call.1} parent=11 // pred_check
        %p437 = pneg %p300
      $region58: #{tpu_custom_call.1} parent=11 // pred_check_branch
        %439 = sbr.rel (%p437) target = $region60
      $region59: #{tpu_custom_call.1} parent=11 // pred_region
        _
      $region60: #{tpu_custom_call.1} parent=11 // pred_fallthru
        _
      // Predicated region
      $region61: #{tpu_custom_call.1} parent=11 // pred_check
        %p440 = pneg %p321
      $region62: #{tpu_custom_call.1} parent=11 // pred_check_branch
        %442 = sbr.rel (%p440) target = $region64
      $region63: #{tpu_custom_call.1} parent=11 // pred_region
        _
      $region64: #{tpu_custom_call.1} parent=11 // pred_fallthru
        _
      // Predicated region
      $region65: #{tpu_custom_call.1} parent=11 // pred_check
        %p443 = pneg %p342
      $region66: #{tpu_custom_call.1} parent=11 // pred_check_branch
        %445 = sbr.rel (%p443) target = $region68
      $region67: #{tpu_custom_call.1} parent=11 // pred_region
        _
      $region68: #{tpu_custom_call.1} parent=11 // pred_fallthru
        _
      // Predicated region
      $region69: #{tpu_custom_call.1} parent=11 // pred_check
        %p446 = pneg %p363
      $region70: #{tpu_custom_call.1} parent=11 // pred_check_branch
        %448 = sbr.rel (%p446) target = $region72
      $region71: #{tpu_custom_call.1} parent=11 // pred_region
        _
      $region72: #{tpu_custom_call.1} parent=11 // pred_fallthru
        _
    $region12: #{tpu_custom_call.1} parent=5 // pred_fallthru
      _
    %p449 = scmp.lt.s32.totalorder %s22, 2
    // Predicated region
    $region73: #{tpu_custom_call.1} parent=5 // pred_check
      %p450 = pneg %p449
    $region74: #{tpu_custom_call.1} parent=5 // pred_check_branch
      %452 = sbr.rel (%p450) target = $region76
    $region75: #{tpu_custom_call.1} parent=5 // pred_region
      // Predicated region
      $region77: #{tpu_custom_call.1} parent=75 // pred_check
        %p453 = pneg %p42
      $region78: #{tpu_custom_call.1} parent=75 // pred_check_branch
        %455 = sbr.rel (%p453) target = $region80
      $region79: #{tpu_custom_call.1} parent=75 // pred_region
        %p456 = scmp.lt.s32.totalorder %s22, 1
        %s457 = scalar_select %p456, %s22, 1
        %s458 = smul.addr %s457, 2
        %s459 = smul.addr %s458, 8
        %s460 = scalar_lea.vmem %s0, %s459
      $region80: #{tpu_custom_call.1} parent=75 // pred_fallthru
        _
    $region76: #{tpu_custom_call.1} parent=5 // pred_fallthru
      _
    %p461 = scmp.le.s32.totalorder 1, %s22
    %p462 = scmp.lt.s32.totalorder %s22, 3
    %p463 = pnand %p461, %p462
    %p464 = pneg %p463
    // Predicated region
    $region81: #{tpu_custom_call.1} parent=5 // pred_check
      _
    $region82: #{tpu_custom_call.1} parent=5 // pred_check_branch
      %466 = sbr.rel (%p463) target = $region84
    $region83: #{tpu_custom_call.1} parent=5 // pred_region
      %s467 = ssub.s32 %s22, 1
      %p468 = scmp.lt.s32.totalorder %s27, 1
      %s469 = scalar_select %p468, %s27, 1
      %s470 = smul.addr %s469, 2
      %s471 = smul.addr %s470, 8
      %s472 = scalar_lea.vmem %s0, %s471
      %p473 = pneg %p48
      %p474 = pneg %p45
      %p475 = pneg %p69
      %p476 = pneg %p66
      %p477 = pneg %p90
      %p478 = pneg %p87
      %p479 = pneg %p111
      %p480 = pneg %p108
      %p481 = pneg %p132
      %p482 = pneg %p129
      %p483 = pneg %p153
      %p484 = pneg %p150
      %p485 = pneg %p174
      %p486 = pneg %p171
      %p487 = pneg %p195
      %p488 = pneg %p192
      %p489 = pneg %p216
      %p490 = pneg %p213
      %p491 = pneg %p237
      %p492 = pneg %p234
      %p493 = pneg %p258
      %p494 = pneg %p255
      %p495 = pneg %p279
      %p496 = pneg %p276
      %p497 = pneg %p300
      %p498 = pneg %p297
      %p499 = pneg %p321
      %p500 = pneg %p318
      %p501 = pneg %p342
      %p502 = pneg %p339
      %p503 = pneg %p363
      %p504 = pneg %p360
      %p505 = pneg %p389
      %p506 = pneg %p386
      %p507 = scmp.lt.s32.totalorder %s27, 1
      %s508 = scalar_select %p507, %s27, 1
      %s509 = smul.addr %s508, 4
      %s510 = smul.addr %s509, 8
      %s511 = scalar_lea.vmem %s16, %s510
      %p512 = scmp.lt.s32.totalorder %s27, 1
      %s513 = scalar_select %p512, %s27, 1
      %s514 = smul.addr %s513, 2
      %s515 = smul.addr %s514, 8
      %s516 = scalar_lea.vmem %s0, %s515
      %p517 = scmp.lt.s32.totalorder %s27, 1
      %s518 = scalar_select %p517, %s27, 1
      %s519 = smul.addr %s518, 4
      %s520 = smul.addr %s519, 8
      %s521 = scalar_lea.vmem %s16, %s520
      %v522 = vld [vmem:[%s516] sm:$0xff]
      %v523 = vld [vmem:[%s516 + $0x8] sm:$0xff]
      %vm524 = vcmask 130048
      %525 = vst.msk [vmem:[#allocation2] sm:$0xff] %vm524, %v522
      %526 = vst.msk [vmem:[#allocation2 + $0x8] sm:$0xff] %vm524, %v523
      %v527 = vld [vmem:[%s516] sm:$0xff]
      %v528 = vld [vmem:[%s516 + $0x8] sm:$0xff]
      %531 = vrot.lane.b32.xlu0 %v527, 127
      %v532 = vpop.permute.xlu0 %531
      %533 = vrot.lane.b32.xlu0 %v528, 127
      %v534 = vpop.permute.xlu0 %533
      %537 = vst.msk [vmem:[#allocation2 + $0x10] sm:$0xff] %vm524, %v532
      %538 = vst.msk [vmem:[#allocation2 + $0x18] sm:$0xff] %vm524, %v534
      %v539 = vld [vmem:[%s516] sm:$0x3]
      %541 = vrot.lane.b32.xlu0 %v539, 126
      %v542 = vpop.permute.xlu0 %541
      %vm544 = vcmask 123904
      %545 = vst.msk [vmem:[#allocation2 + $0x20] sm:$0x3] %vm544, %v542
      %v546 = vld [vmem:[%s516 + $0x2] sm:$0xff]
      %v547 = vld [vmem:[%s516 + $0xa] sm:$0x3f]
      %550 = vrot.lane.b32.xlu0 %v546, 16
      %v551 = vpop.permute.xlu0 %550
      %552 = vrot.lane.b32.xlu0 %v547, 16
      %v553 = vpop.permute.xlu0 %552
      %vm556 = vcmask 261248
      %557 = vst.msk [vmem:[#allocation2] sm:$0xff] %vm556, %v551
      %vm558 = vcmask 259200
      %559 = vst.msk [vmem:[#allocation2 + $0x8] sm:$0x3f] %vm558, %v553
      %v560 = vld [vmem:[%s516] sm:$0xff]
      %v561 = vld [vmem:[%s516 + $0x8] sm:$0xff]
      %564 = vrot.lane.b32.xlu0 %v560, 15
      %v565 = vpop.permute.xlu0 %564
      %566 = vrot.lane.b32.xlu0 %v561, 15
      %v567 = vpop.permute.xlu0 %566
      %570 = vst.msk [vmem:[#allocation2 + $0xe] sm:$0xff] %vm556, %v565
      %571 = vst.msk [vmem:[#allocation2 + $0x16] sm:$0xff] %vm556, %v567
      %v572 = vld [vmem:[%s516] sm:$0xf]
      %574 = vrot.lane.b32.xlu0 %v572, 14
      %v575 = vpop.permute.xlu0 %574
      %vm577 = vcmask 257152
      %578 = vst.msk [vmem:[#allocation2 + $0x1e] sm:$0xf] %vm577, %v575
      %v579 = vld [vmem:[%s516 + $0x4] sm:$0xff]
      %v580 = vld [vmem:[%s516 + $0xc] sm:$0xf]
      %583 = vrot.lane.b32.xlu0 %v579, 32
      %v584 = vpop.permute.xlu0 %583
      %585 = vrot.lane.b32.xlu0 %v580, 32
      %v586 = vpop.permute.xlu0 %585
      %vm589 = vcmask 392448
      %590 = vst.msk [vmem:[#allocation2] sm:$0xff] %vm589, %v584
      %vm591 = vcmask 388352
      %592 = vst.msk [vmem:[#allocation2 + $0x8] sm:$0xf] %vm591, %v586
      %v593 = vld [vmem:[%s516] sm:$0xff]
      %v594 = vld [vmem:[%s516 + $0x8] sm:$0xff]
      %597 = vrot.lane.b32.xlu0 %v593, 31
      %v598 = vpop.permute.xlu0 %597
      %599 = vrot.lane.b32.xlu0 %v594, 31
      %v600 = vpop.permute.xlu0 %599
      %603 = vst.msk [vmem:[#allocation2 + $0xc] sm:$0xff] %vm589, %v598
      %604 = vst.msk [vmem:[#allocation2 + $0x14] sm:$0xff] %vm589, %v600
      %v605 = vld [vmem:[%s516] sm:$0x3f]
      %607 = vrot.lane.b32.xlu0 %v605, 30
      %v608 = vpop.permute.xlu0 %607
      %vm610 = vcmask 390400
      %611 = vst.msk [vmem:[#allocation2 + $0x1c] sm:$0x3f] %vm610, %v608
      %v612 = vld [vmem:[%s516 + $0x6] sm:$0xff]
      %v613 = vld [vmem:[%s516 + $0xe] sm:$0x3]
      %616 = vrot.lane.b32.xlu0 %v612, 48
      %v617 = vpop.permute.xlu0 %616
      %618 = vrot.lane.b32.xlu0 %v613, 48
      %v619 = vpop.permute.xlu0 %618
      %vm622 = vcmask 523648
      %623 = vst.msk [vmem:[#allocation2] sm:$0xff] %vm622, %v617
      %vm624 = vcmask 517504
      %625 = vst.msk [vmem:[#allocation2 + $0x8] sm:$0x3] %vm624, %v619
      %v626 = vld [vmem:[%s516] sm:$0xff]
      %v627 = vld [vmem:[%s516 + $0x8] sm:$0xff]
      %630 = vrot.lane.b32.xlu0 %v626, 47
      %v631 = vpop.permute.xlu0 %630
      %632 = vrot.lane.b32.xlu0 %v627, 47
      %v633 = vpop.permute.xlu0 %632
      %636 = vst.msk [vmem:[#allocation2 + $0xa] sm:$0xff] %vm622, %v631
      %637 = vst.msk [vmem:[#allocation2 + $0x12] sm:$0xff] %vm622, %v633
      %v638 = vld [vmem:[%s516] sm:$0xff]
      %640 = vrot.lane.b32.xlu0 %v638, 46
      %v641 = vpop.permute.xlu0 %640
      %643 = vst.msk [vmem:[#allocation2 + $0x1a] sm:$0xff] %vm622, %v641
      %v644 = vld [vmem:[%s516 + $0x8] sm:$0xff]
      %646 = vrot.lane.b32.xlu0 %v644, 64
      %v647 = vpop.permute.xlu0 %646
      %vm649 = vcmask 654848
      %650 = vst.msk [vmem:[#allocation2] sm:$0xff] %vm649, %v647
      %v651 = vld [vmem:[%s516] sm:$0xff]
      %v652 = vld [vmem:[%s516 + $0x8] sm:$0xff]
      %655 = vrot.lane.b32.xlu0 %v651, 63
      %v656 = vpop.permute.xlu0 %655
      %657 = vrot.lane.b32.xlu0 %v652, 63
      %v658 = vpop.permute.xlu0 %657
      %661 = vst.msk [vmem:[#allocation2 + $0x8] sm:$0xff] %vm649, %v656
      %662 = vst.msk [vmem:[#allocation2 + $0x10] sm:$0xff] %vm649, %v658
      %v663 = vld [vmem:[%s516] sm:$0xff]
      %v664 = vld [vmem:[%s516 + $0x8] sm:$0x3]
      %667 = vrot.lane.b32.xlu0 %v663, 62
      %v668 = vpop.permute.xlu0 %667
      %669 = vrot.lane.b32.xlu0 %v664, 62
      %v670 = vpop.permute.xlu0 %669
      %673 = vst.msk [vmem:[#allocation2 + $0x18] sm:$0xff] %vm649, %v668
      %vm674 = vcmask 648704
      %675 = vst.msk [vmem:[#allocation2 + $0x20] sm:$0x3] %vm674, %v670
      %v676 = vld [vmem:[%s516 + $0xa] sm:$0x3f]
      %678 = vrot.lane.b32.xlu0 %v676, 80
      %v679 = vpop.permute.xlu0 %678
      %vm681 = vcmask 784000
      %682 = vst.msk [vmem:[#allocation2] sm:$0x3f] %vm681, %v679
      %v683 = vld [vmem:[%s516] sm:$0xff]
      %v684 = vld [vmem:[%s516 + $0x8] sm:$0xff]
      %687 = vrot.lane.b32.xlu0 %v683, 79
      %v688 = vpop.permute.xlu0 %687
      %689 = vrot.lane.b32.xlu0 %v684, 79
      %v690 = vpop.permute.xlu0 %689
      %vm693 = vcmask 786048
      %694 = vst.msk [vmem:[#allocation2 + $0x6] sm:$0xff] %vm693, %v688
      %695 = vst.msk [vmem:[#allocation2 + $0xe] sm:$0xff] %vm693, %v690
      %v696 = vld [vmem:[%s516] sm:$0xff]
      %v697 = vld [vmem:[%s516 + $0x8] sm:$0xf]
      %700 = vrot.lane.b32.xlu0 %v696, 78
      %v701 = vpop.permute.xlu0 %700
      %702 = vrot.lane.b32.xlu0 %v697, 78
      %v703 = vpop.permute.xlu0 %702
      %706 = vst.msk [vmem:[#allocation2 + $0x16] sm:$0xff] %vm693, %v701
      %vm707 = vcmask 781952
      %708 = vst.msk [vmem:[#allocation2 + $0x1e] sm:$0xf] %vm707, %v703
      %v709 = vld [vmem:[%s516 + $0xc] sm:$0xf]
      %711 = vrot.lane.b32.xlu0 %v709, 96
      %v712 = vpop.permute.xlu0 %711
      %vm714 = vcmask 913152
      %715 = vst.msk [vmem:[#allocation2] sm:$0xf] %vm714, %v712
      %v716 = vld [vmem:[%s516] sm:$0xff]
      %v717 = vld [vmem:[%s516 + $0x8] sm:$0xff]
      %720 = vrot.lane.b32.xlu0 %v716, 95
      %v721 = vpop.permute.xlu0 %720
      %722 = vrot.lane.b32.xlu0 %v717, 95
      %v723 = vpop.permute.xlu0 %722
      %vm726 = vcmask 917248
      %727 = vst.msk [vmem:[#allocation2 + $0x4] sm:$0xff] %vm726, %v721
      %728 = vst.msk [vmem:[#allocation2 + $0xc] sm:$0xff] %vm726, %v723
      %v729 = vld [vmem:[%s516] sm:$0xff]
      %v730 = vld [vmem:[%s516 + $0x8] sm:$0x3f]
      %733 = vrot.lane.b32.xlu0 %v729, 94
      %v734 = vpop.permute.xlu0 %733
      %735 = vrot.lane.b32.xlu0 %v730, 94
      %v736 = vpop.permute.xlu0 %735
      %739 = vst.msk [vmem:[#allocation2 + $0x14] sm:$0xff] %vm726, %v734
      %vm740 = vcmask 915200
      %741 = vst.msk [vmem:[#allocation2 + $0x1c] sm:$0x3f] %vm740, %v736
      %v742 = vld [vmem:[%s516 + $0xe] sm:$0x3]
      %744 = vrot.lane.b32.xlu0 %v742, 112
      %v745 = vpop.permute.xlu0 %744
      %vm747 = vcmask 1042304
      %748 = vst.msk [vmem:[#allocation2] sm:$0x3] %vm747, %v745
      %v749 = vld [vmem:[%s516] sm:$0xff]
      %v750 = vld [vmem:[%s516 + $0x8] sm:$0xff]
      %753 = vrot.lane.b32.xlu0 %v749, 111
      %v754 = vpop.permute.xlu0 %753
      %755 = vrot.lane.b32.xlu0 %v750, 111
      %v756 = vpop.permute.xlu0 %755
      %vm759 = vcmask 1048448
      %760 = vst.msk [vmem:[#allocation2 + $0x2] sm:$0xff] %vm759, %v754
      %761 = vst.msk [vmem:[#allocation2 + $0xa] sm:$0xff] %vm759, %v756
      %v762 = vld [vmem:[%s516] sm:$0xff]
      %v763 = vld [vmem:[%s516 + $0x8] sm:$0xff]
      %766 = vrot.lane.b32.xlu0 %v762, 110
      %v767 = vpop.permute.xlu0 %766
      %768 = vrot.lane.b32.xlu0 %v763, 110
      %v769 = vpop.permute.xlu0 %768
      %772 = vst.msk [vmem:[#allocation2 + $0x12] sm:$0xff] %vm759, %v767
      %773 = vst.msk [vmem:[#allocation2 + $0x1a] sm:$0xff] %vm759, %v769
      %v774 = vld [vmem:[%s1] sm:$0xff]
      %v775 = vld [vmem:[%s1 + $0x8] sm:$0xff]
      %v776 = vld [vmem:[%s1 + $0x10] sm:$0xff]
      %v777 = vld [vmem:[%s1 + $0x18] sm:$0xff]
      %v778 = vld [vmem:[#allocation2] sm:$0xff]
      %v779 = vld [vmem:[#allocation2 + $0x8] sm:$0xff]
      %v780 = vld [vmem:[#allocation2 + $0x10] sm:$0xff]
      %v781 = vld [vmem:[#allocation2 + $0x18] sm:$0xff]
      %v782 = vld [vmem:[#allocation2 + $0x20] sm:$0x3]
      %vm783 = vcmask 277504
      %v785 = vsel %vm783, %v774, 0
      %v788 = vsel %vm783, %v775, 0
      %v791 = vsel %vm783, %v776, 0
      %v794 = vsel %vm783, %v777, 0
      %vm796 = vcmask 1041408
      %v798 = vsel %vm796, %v782, 0
      %800 = vmatpush.msra.mxu0 0.0
      %801 = vmatpush.msra.mxu0 0.0
      %802 = vmatpush.msra.mxu0 0.0
      %803 = vmatpush.msra.mxu0 0.0
      %804 = vmatpush.msra.mxu0 0.0
      %805 = vmatpush.msra.mxu0 0.0
      %806 = vmatpush.msra.mxu0 0.0
      %807 = vmatpush.msra.mxu0 0.0
      %808 = vmatpush.msra.mxu0 0.0
      %809 = vmatpush.msra.mxu0 0.0
      %810 = vmatpush.msra.mxu0 0.0
      %811 = vmatpush.msra.mxu0 %v798
      %812 = vmatpush.msra.mxu0 %v781
      %813 = vmatpush.msra.mxu0 %v780
      %814 = vmatpush.msra.mxu0 %v779
      %815 = vmatpush.msra.mxu0 %v778
      %816 = vmatmul.f32.gmra.mxu0 %v785
      %v817 = vpop.f32.mrf.mxu0
      %v818 = vadd.f32 0.0, %v817
      %819 = vmatmul.f32.gmra.mxu0 %v788
      %v820 = vpop.f32.mrf.mxu0
      %v821 = vadd.f32 0.0, %v820
      %822 = vmatmul.f32.gmra.mxu0 %v791
      %v823 = vpop.f32.mrf.mxu0
      %v824 = vadd.f32 0.0, %v823
      %825 = vmatmul.f32.gmra.mxu0 %v794
      %v826 = vpop.f32.mrf.mxu0
      %v827 = vadd.f32 0.0, %v826
      %828 = vdwg.mxu0
      %v829 = vand.u32 2147483647, %v818
      %v830 = vand.u32 2147483647, %v821
      %v831 = vand.u32 2147483647, %v824
      %v832 = vand.u32 2147483647, %v827
      %v833 = vadd.f32 %v829, 1.0
      %v834 = vadd.f32 %v830, 1.0
      %v835 = vadd.f32 %v831, 1.0
      %v836 = vadd.f32 %v832, 1.0
      %v837 = vlog2.pop %v833
      %v838 = vmul.f32 %v837, 0.6931472
      %v839 = vlog2.pop %v834
      %v840 = vmul.f32 %v839, 0.6931472
      %v841 = vlog2.pop %v835
      %v842 = vmul.f32 %v841, 0.6931472
      %v843 = vlog2.pop %v836
      %v844 = vmul.f32 %v843, 0.6931472
      %v845 = vmul.f32 %v838, 0.4342945
      %v846 = vmul.f32 %v840, 0.4342945
      %v847 = vmul.f32 %v842, 0.4342945
      %v848 = vmul.f32 %v844, 0.4342945
      %v849 = vld [vmem:[%s2] sm:$0xff]
      %v850 = vld [vmem:[%s2 + $0x8] sm:$0xff]
      %v851 = vld [vmem:[%s2 + $0x10] sm:$0xff]
      %v852 = vld [vmem:[%s2 + $0x18] sm:$0xff]
      %854 = vset.pattern.permute.xlu0 0
      %855 = vperm.xlu0 %854, %v849
      %v856 = vpop.permute.xlu0 %855
      %859 = vset.pattern.permute.xlu0 0
      %860 = vperm.xlu0 %859, %v850
      %v861 = vpop.permute.xlu0 %860
      %864 = vset.pattern.permute.xlu0 0
      %865 = vperm.xlu0 %864, %v851
      %v866 = vpop.permute.xlu0 %865
      %869 = vset.pattern.permute.xlu0 0
      %870 = vperm.xlu0 %869, %v852
      %v871 = vpop.permute.xlu0 %870
      %v873 = vmul.f32 %v845, %v856
      %v874 = vmul.f32 %v846, %v861
      %v875 = vmul.f32 %v847, %v866
      %v876 = vmul.f32 %v848, %v871
      %v877 = vld [vmem:[%s3] sm:$0xff]
      %v878 = vld [vmem:[%s3 + $0x8] sm:$0xff]
      %v879 = vld [vmem:[%s3 + $0x10] sm:$0xff]
      %v880 = vld [vmem:[%s3 + $0x18] sm:$0xff]
      %882 = vset.pattern.permute.xlu0 0
      %883 = vperm.xlu0 %882, %v877
      %v884 = vpop.permute.xlu0 %883
      %887 = vset.pattern.permute.xlu0 0
      %888 = vperm.xlu0 %887, %v878
      %v889 = vpop.permute.xlu0 %888
      %892 = vset.pattern.permute.xlu0 0
      %893 = vperm.xlu0 %892, %v879
      %v894 = vpop.permute.xlu0 %893
      %897 = vset.pattern.permute.xlu0 0
      %898 = vperm.xlu0 %897, %v880
      %v899 = vpop.permute.xlu0 %898
      %v901 = vadd.f32 %v873, %v884
      %v902 = vadd.f32 %v874, %v889
      %v903 = vadd.f32 %v875, %v894
      %v904 = vadd.f32 %v876, %v899
      %v905 = vadd.f32 %v901, %v903
      %v906 = vadd.f32 %v902, %v904
      %v907 = vmul.f32 %v905, 0.5
      %v908 = vmul.f32 %v906, 0.5
      %909 = vst [vmem:[#allocation3] sm:$0xff] %v907
      %910 = vst [vmem:[#allocation3 + $0x8] sm:$0xff] %v908
      %v911 = vld [vmem:[%s4] sm:$0xff]
      %v912 = vld [vmem:[%s4 + $0x8] sm:$0xff]
      %v913 = vld [vmem:[#allocation3] sm:$0xff]
      %v914 = vld [vmem:[#allocation3 + $0x8] sm:$0xff]
      %916 = vset.pattern.permute.xlu0 0
      %917 = vperm.xlu0 %916, %v911
      %v918 = vpop.permute.xlu0 %917
      %921 = vset.pattern.permute.xlu0 0
      %922 = vperm.xlu0 %921, %v912
      %v923 = vpop.permute.xlu0 %922
      %v925 = vmul.f32 %v918, %v913
      %v926 = vmul.f32 %v923, %v914
      %v927 = vadd.f32 %v925, 0.0
      %v928 = vadd.f32 %v926, 0.0
      %929 = vset.pattern.permute.xlu0 1
      %930 = vperm.xlu0 %929, %v911
      %v931 = vpop.permute.xlu0 %930
      %933 = vset.pattern.permute.xlu0 1
      %934 = vperm.xlu0 %933, %v912
      %v935 = vpop.permute.xlu0 %934
      %v937 = vmul.f32 %v931, %v913
      %v938 = vmul.f32 %v935, %v914
      %941 = vrot.lane.b32.xlu0 %v937, 112
      %v942 = vpop.permute.xlu0 %941
      %943 = vrot.lane.b32.xlu0 %v938, 112
      %v944 = vpop.permute.xlu0 %943
      %v947 = vadd.f32 %v927, %v942
      %v948 = vadd.f32 %v928, %v944
      %949 = vset.pattern.permute.xlu0 2
      %950 = vperm.xlu0 %949, %v911
      %v951 = vpop.permute.xlu0 %950
      %953 = vset.pattern.permute.xlu0 2
      %954 = vperm.xlu0 %953, %v912
      %v955 = vpop.permute.xlu0 %954
      %v957 = vmul.f32 %v951, %v913
      %v958 = vmul.f32 %v955, %v914
      %961 = vrot.lane.b32.xlu0 %v957, 96
      %v962 = vpop.permute.xlu0 %961
      %963 = vrot.lane.b32.xlu0 %v958, 96
      %v964 = vpop.permute.xlu0 %963
      %v967 = vadd.f32 %v947, %v962
      %v968 = vadd.f32 %v948, %v964
      %969 = vset.pattern.permute.xlu0 3
      %970 = vperm.xlu0 %969, %v911
      %v971 = vpop.permute.xlu0 %970
      %973 = vset.pattern.permute.xlu0 3
      %974 = vperm.xlu0 %973, %v912
      %v975 = vpop.permute.xlu0 %974
      %v977 = vmul.f32 %v971, %v913
      %v978 = vmul.f32 %v975, %v914
      %981 = vrot.lane.b32.xlu0 %v977, 80
      %v982 = vpop.permute.xlu0 %981
      %983 = vrot.lane.b32.xlu0 %v978, 80
      %v984 = vpop.permute.xlu0 %983
      %v987 = vadd.f32 %v967, %v982
      %v988 = vadd.f32 %v968, %v984
      %989 = vset.pattern.permute.xlu0 4
      %990 = vperm.xlu0 %989, %v911
      %v991 = vpop.permute.xlu0 %990
      %993 = vset.pattern.permute.xlu0 4
      %994 = vperm.xlu0 %993, %v912
      %v995 = vpop.permute.xlu0 %994
      %v997 = vmul.f32 %v991, %v913
      %v998 = vmul.f32 %v995, %v914
      %1001 = vrot.lane.b32.xlu0 %v997, 64
      %v1002 = vpop.permute.xlu0 %1001
      %1003 = vrot.lane.b32.xlu0 %v998, 64
      %v1004 = vpop.permute.xlu0 %1003
      %v1007 = vadd.f32 %v987, %v1002
      %v1008 = vadd.f32 %v988, %v1004
      %1009 = vset.pattern.permute.xlu0 5
      %1010 = vperm.xlu0 %1009, %v911
      %v1011 = vpop.permute.xlu0 %1010
      %1013 = vset.pattern.permute.xlu0 5
      %1014 = vperm.xlu0 %1013, %v912
      %v1015 = vpop.permute.xlu0 %1014
      %v1017 = vmul.f32 %v1011, %v913
      %v1018 = vmul.f32 %v1015, %v914
      %1021 = vrot.lane.b32.xlu0 %v1017, 48
      %v1022 = vpop.permute.xlu0 %1021
      %1023 = vrot.lane.b32.xlu0 %v1018, 48
      %v1024 = vpop.permute.xlu0 %1023
      %v1027 = vadd.f32 %v1007, %v1022
      %v1028 = vadd.f32 %v1008, %v1024
      %1029 = vset.pattern.permute.xlu0 6
      %1030 = vperm.xlu0 %1029, %v911
      %v1031 = vpop.permute.xlu0 %1030
      %1033 = vset.pattern.permute.xlu0 6
      %1034 = vperm.xlu0 %1033, %v912
      %v1035 = vpop.permute.xlu0 %1034
      %v1037 = vmul.f32 %v1031, %v913
      %v1038 = vmul.f32 %v1035, %v914
      %1041 = vrot.lane.b32.xlu0 %v1037, 32
      %v1042 = vpop.permute.xlu0 %1041
      %1043 = vrot.lane.b32.xlu0 %v1038, 32
      %v1044 = vpop.permute.xlu0 %1043
      %v1047 = vadd.f32 %v1027, %v1042
      %v1048 = vadd.f32 %v1028, %v1044
      %1049 = vset.pattern.permute.xlu0 7
      %1050 = vperm.xlu0 %1049, %v911
      %v1051 = vpop.permute.xlu0 %1050
      %1053 = vset.pattern.permute.xlu0 7
      %1054 = vperm.xlu0 %1053, %v912
      %v1055 = vpop.permute.xlu0 %1054
      %v1057 = vmul.f32 %v1051, %v913
      %v1058 = vmul.f32 %v1055, %v914
      %1061 = vrot.lane.b32.xlu0 %v1057, 16
      %v1062 = vpop.permute.xlu0 %1061
      %1063 = vrot.lane.b32.xlu0 %v1058, 16
      %v1064 = vpop.permute.xlu0 %1063
      %v1067 = vadd.f32 %v1047, %v1062
      %v1068 = vadd.f32 %v1048, %v1064
      %1069 = vset.pattern.permute.xlu0 8
      %1070 = vperm.xlu0 %1069, %v911
      %v1071 = vpop.permute.xlu0 %1070
      %1073 = vset.pattern.permute.xlu0 8
      %1074 = vperm.xlu0 %1073, %v912
      %v1075 = vpop.permute.xlu0 %1074
      %v1077 = vmul.f32 %v1071, %v913
      %v1078 = vmul.f32 %v1075, %v914
      %1081 = vrot.lane.b32.xlu0 %v1077, 127
      %v1082 = vpop.permute.xlu0 %1081
      %1083 = vrot.lane.b32.xlu0 %v1078, 127
      %v1084 = vpop.permute.xlu0 %1083
      %v1087 = vadd.f32 %v1067, %v1082
      %v1088 = vadd.f32 %v1068, %v1084
      %vm1089 = vcmask 121856
      %1090 = vst.msk [vmem:[#allocation4] sm:$0xff] %vm1089, %v1087
      %1091 = vst.msk [vmem:[#allocation4 + $0x8] sm:$0xff] %vm1089, %v1088
      %v1092 = vld [vmem:[%s4] sm:$0xff]
      %v1093 = vld [vmem:[%s4 + $0x8] sm:$0xff]
      %v1094 = vld [vmem:[#allocation3] sm:$0xff]
      %v1095 = vld [vmem:[#allocation3 + $0x8] sm:$0xff]
      %1097 = vset.pattern.permute.xlu0 0
      %1098 = vperm.xlu0 %1097, %v1092
      %v1099 = vpop.permute.xlu0 %1098
      %1102 = vset.pattern.permute.xlu0 0
      %1103 = vperm.xlu0 %1102, %v1093
      %v1104 = vpop.permute.xlu0 %1103
      %v1106 = vmul.f32 %v1099, %v1094
      %v1107 = vmul.f32 %v1104, %v1095
      %v1108 = vadd.f32 %v1106, 0.0
      %v1109 = vadd.f32 %v1107, 0.0
      %1110 = vset.pattern.permute.xlu0 1
      %1111 = vperm.xlu0 %1110, %v1092
      %v1112 = vpop.permute.xlu0 %1111
      %1114 = vset.pattern.permute.xlu0 1
      %1115 = vperm.xlu0 %1114, %v1093
      %v1116 = vpop.permute.xlu0 %1115
      %v1118 = vmul.f32 %v1112, %v1094
      %v1119 = vmul.f32 %v1116, %v1095
      %1122 = vrot.lane.b32.xlu0 %v1118, 112
      %v1123 = vpop.permute.xlu0 %1122
      %1124 = vrot.lane.b32.xlu0 %v1119, 112
      %v1125 = vpop.permute.xlu0 %1124
      %v1128 = vadd.f32 %v1108, %v1123
      %v1129 = vadd.f32 %v1109, %v1125
      %1130 = vset.pattern.permute.xlu0 2
      %1131 = vperm.xlu0 %1130, %v1092
      %v1132 = vpop.permute.xlu0 %1131
      %1134 = vset.pattern.permute.xlu0 2
      %1135 = vperm.xlu0 %1134, %v1093
      %v1136 = vpop.permute.xlu0 %1135
      %v1138 = vmul.f32 %v1132, %v1094
      %v1139 = vmul.f32 %v1136, %v1095
      %1142 = vrot.lane.b32.xlu0 %v1138, 96
      %v1143 = vpop.permute.xlu0 %1142
      %1144 = vrot.lane.b32.xlu0 %v1139, 96
      %v1145 = vpop.permute.xlu0 %1144
      %v1148 = vadd.f32 %v1128, %v1143
      %v1149 = vadd.f32 %v1129, %v1145
      %1150 = vset.pattern.permute.xlu0 3
      %1151 = vperm.xlu0 %1150, %v1092
      %v1152 = vpop.permute.xlu0 %1151
      %1154 = vset.pattern.permute.xlu0 3
      %1155 = vperm.xlu0 %1154, %v1093
      %v1156 = vpop.permute.xlu0 %1155
      %v1158 = vmul.f32 %v1152, %v1094
      %v1159 = vmul.f32 %v1156, %v1095
      %1162 = vrot.lane.b32.xlu0 %v1158, 80
      %v1163 = vpop.permute.xlu0 %1162
      %1164 = vrot.lane.b32.xlu0 %v1159, 80
      %v1165 = vpop.permute.xlu0 %1164
      %v1168 = vadd.f32 %v1148, %v1163
      %v1169 = vadd.f32 %v1149, %v1165
      %1170 = vset.pattern.permute.xlu0 4
      %1171 = vperm.xlu0 %1170, %v1092
      %v1172 = vpop.permute.xlu0 %1171
      %1174 = vset.pattern.permute.xlu0 4
      %1175 = vperm.xlu0 %1174, %v1093
      %v1176 = vpop.permute.xlu0 %1175
      %v1178 = vmul.f32 %v1172, %v1094
      %v1179 = vmul.f32 %v1176, %v1095
      %1182 = vrot.lane.b32.xlu0 %v1178, 63
      %v1183 = vpop.permute.xlu0 %1182
      %1184 = vrot.lane.b32.xlu0 %v1179, 63
      %v1185 = vpop.permute.xlu0 %1184
      %v1188 = vadd.f32 %v1168, %v1183
      %v1189 = vadd.f32 %v1169, %v1185
      %1190 = vset.pattern.permute.xlu0 5
      %1191 = vperm.xlu0 %1190, %v1092
      %v1192 = vpop.permute.xlu0 %1191
      %1194 = vset.pattern.permute.xlu0 5
      %1195 = vperm.xlu0 %1194, %v1093
      %v1196 = vpop.permute.xlu0 %1195
      %v1198 = vmul.f32 %v1192, %v1094
      %v1199 = vmul.f32 %v1196, %v1095
      %1202 = vrot.lane.b32.xlu0 %v1198, 47
      %v1203 = vpop.permute.xlu0 %1202
      %1204 = vrot.lane.b32.xlu0 %v1199, 47
      %v1205 = vpop.permute.xlu0 %1204
      %v1208 = vadd.f32 %v1188, %v1203
      %v1209 = vadd.f32 %v1189, %v1205
      %1210 = vset.pattern.permute.xlu0 6
      %1211 = vperm.xlu0 %1210, %v1092
      %v1212 = vpop.permute.xlu0 %1211
      %1214 = vset.pattern.permute.xlu0 6
      %1215 = vperm.xlu0 %1214, %v1093
      %v1216 = vpop.permute.xlu0 %1215
      %v1218 = vmul.f32 %v1212, %v1094
      %v1219 = vmul.f32 %v1216, %v1095
      %1222 = vrot.lane.b32.xlu0 %v1218, 31
      %v1223 = vpop.permute.xlu0 %1222
      %1224 = vrot.lane.b32.xlu0 %v1219, 31
      %v1225 = vpop.permute.xlu0 %1224
      %v1228 = vadd.f32 %v1208, %v1223
      %v1229 = vadd.f32 %v1209, %v1225
      %1230 = vset.pattern.permute.xlu0 7
      %1231 = vperm.xlu0 %1230, %v1092
      %v1232 = vpop.permute.xlu0 %1231
      %1234 = vset.pattern.permute.xlu0 7
      %1235 = vperm.xlu0 %1234, %v1093
      %v1236 = vpop.permute.xlu0 %1235
      %v1238 = vmul.f32 %v1232, %v1094
      %v1239 = vmul.f32 %v1236, %v1095
      %1242 = vrot.lane.b32.xlu0 %v1238, 15
      %v1243 = vpop.permute.xlu0 %1242
      %1244 = vrot.lane.b32.xlu0 %v1239, 15
      %v1245 = vpop.permute.xlu0 %1244
      %v1248 = vadd.f32 %v1228, %v1243
      %v1249 = vadd.f32 %v1229, %v1245
      %1250 = vset.pattern.permute.xlu0 8
      %1251 = vperm.xlu0 %1250, %v1092
      %v1252 = vpop.permute.xlu0 %1251
      %1254 = vset.pattern.permute.xlu0 8
      %1255 = vperm.xlu0 %1254, %v1093
      %v1256 = vpop.permute.xlu0 %1255
      %v1258 = vmul.f32 %v1252, %v1094
      %v1259 = vmul.f32 %v1256, %v1095
      %1262 = vrot.lane.b32.xlu0 %v1258, 127
      %v1263 = vpop.permute.xlu0 %1262
      %1264 = vrot.lane.b32.xlu0 %v1259, 127
      %v1265 = vpop.permute.xlu0 %1264
      %v1268 = vadd.f32 %v1248, %v1263
      %v1269 = vadd.f32 %v1249, %v1265
      %1272 = vrot.lane.b32.xlu0 %v1268, 79
      %v1273 = vpop.permute.xlu0 %1272
      %1274 = vrot.lane.b32.xlu0 %v1269, 79
      %v1275 = vpop.permute.xlu0 %1274
      %vm1278 = vcmask 244856
      %1279 = vst.msk [vmem:[#allocation4] sm:$0xff] %vm1278, %v1273
      %1280 = vst.msk [vmem:[#allocation4 + $0x8] sm:$0xff] %vm1278, %v1275
      %v1281 = vld [vmem:[%s4] sm:$0xff]
      %v1282 = vld [vmem:[%s4 + $0x8] sm:$0xff]
      %v1283 = vld [vmem:[#allocation3] sm:$0xff]
      %v1284 = vld [vmem:[#allocation3 + $0x8] sm:$0xff]
      %1286 = vset.pattern.permute.xlu0 0
      %1287 = vperm.xlu0 %1286, %v1281
      %v1288 = vpop.permute.xlu0 %1287
      %1291 = vset.pattern.permute.xlu0 0
      %1292 = vperm.xlu0 %1291, %v1282
      %v1293 = vpop.permute.xlu0 %1292
      %v1295 = vmul.f32 %v1288, %v1283
      %v1296 = vmul.f32 %v1293, %v1284
      %v1297 = vadd.f32 %v1295, 0.0
      %v1298 = vadd.f32 %v1296, 0.0
      %1299 = vset.pattern.permute.xlu0 1
      %1300 = vperm.xlu0 %1299, %v1281
      %v1301 = vpop.permute.xlu0 %1300
      %1303 = vset.pattern.permute.xlu0 1
      %1304 = vperm.xlu0 %1303, %v1282
      %v1305 = vpop.permute.xlu0 %1304
      %v1307 = vmul.f32 %v1301, %v1283
      %v1308 = vmul.f32 %v1305, %v1284
      %1311 = vrot.lane.b32.xlu0 %v1307, 112
      %v1312 = vpop.permute.xlu0 %1311
      %1313 = vrot.lane.b32.xlu0 %v1308, 112
      %v1314 = vpop.permute.xlu0 %1313
      %v1317 = vadd.f32 %v1297, %v1312
      %v1318 = vadd.f32 %v1298, %v1314
      %1319 = vset.pattern.permute.xlu0 2
      %1320 = vperm.xlu0 %1319, %v1281
      %v1321 = vpop.permute.xlu0 %1320
      %1323 = vset.pattern.permute.xlu0 2
      %1324 = vperm.xlu0 %1323, %v1282
      %v1325 = vpop.permute.xlu0 %1324
      %v1327 = vmul.f32 %v1321, %v1283
      %v1328 = vmul.f32 %v1325, %v1284
      %1331 = vrot.lane.b32.xlu0 %v1327, 96
      %v1332 = vpop.permute.xlu0 %1331
      %1333 = vrot.lane.b32.xlu0 %v1328, 96
      %v1334 = vpop.permute.xlu0 %1333
      %v1337 = vadd.f32 %v1317, %v1332
      %v1338 = vadd.f32 %v1318, %v1334
      %1339 = vset.pattern.permute.xlu0 3
      %1340 = vperm.xlu0 %1339, %v1281
      %v1341 = vpop.permute.xlu0 %1340
      %1343 = vset.pattern.permute.xlu0 3
      %1344 = vperm.xlu0 %1343, %v1282
      %v1345 = vpop.permute.xlu0 %1344
      %v1347 = vmul.f32 %v1341, %v1283
      %v1348 = vmul.f32 %v1345, %v1284
      %1351 = vrot.lane.b32.xlu0 %v1347, 80
      %v1352 = vpop.permute.xlu0 %1351
      %1353 = vrot.lane.b32.xlu0 %v1348, 80
      %v1354 = vpop.permute.xlu0 %1353
      %v1357 = vadd.f32 %v1337, %v1352
      %v1358 = vadd.f32 %v1338, %v1354
      %1359 = vset.pattern.permute.xlu0 4
      %1360 = vperm.xlu0 %1359, %v1281
      %v1361 = vpop.permute.xlu0 %1360
      %1363 = vset.pattern.permute.xlu0 4
      %1364 = vperm.xlu0 %1363, %v1282
      %v1365 = vpop.permute.xlu0 %1364
      %v1367 = vmul.f32 %v1361, %v1283
      %v1368 = vmul.f32 %v1365, %v1284
      %1371 = vrot.lane.b32.xlu0 %v1367, 64
      %v1372 = vpop.permute.xlu0 %1371
      %1373 = vrot.lane.b32.xlu0 %v1368, 64
      %v1374 = vpop.permute.xlu0 %1373
      %v1377 = vadd.f32 %v1357, %v1372
      %v1378 = vadd.f32 %v1358, %v1374
      %1379 = vset.pattern.permute.xlu0 5
      %1380 = vperm.xlu0 %1379, %v1281
      %v1381 = vpop.permute.xlu0 %1380
      %1383 = vset.pattern.permute.xlu0 5
      %1384 = vperm.xlu0 %1383, %v1282
      %v1385 = vpop.permute.xlu0 %1384
      %v1387 = vmul.f32 %v1381, %v1283
      %v1388 = vmul.f32 %v1385, %v1284
      %1391 = vrot.lane.b32.xlu0 %v1387, 48
      %v1392 = vpop.permute.xlu0 %1391
      %1393 = vrot.lane.b32.xlu0 %v1388, 48
      %v1394 = vpop.permute.xlu0 %1393
      %v1397 = vadd.f32 %v1377, %v1392
      %v1398 = vadd.f32 %v1378, %v1394
      %1399 = vset.pattern.permute.xlu0 6
      %1400 = vperm.xlu0 %1399, %v1281
      %v1401 = vpop.permute.xlu0 %1400
      %1403 = vset.pattern.permute.xlu0 6
      %1404 = vperm.xlu0 %1403, %v1282
      %v1405 = vpop.permute.xlu0 %1404
      %v1407 = vmul.f32 %v1401, %v1283
      %v1408 = vmul.f32 %v1405, %v1284
      %1411 = vrot.lane.b32.xlu0 %v1407, 31
      %v1412 = vpop.permute.xlu0 %1411
      %1413 = vrot.lane.b32.xlu0 %v1408, 31
      %v1414 = vpop.permute.xlu0 %1413
      %v1417 = vadd.f32 %v1397, %v1412
      %v1418 = vadd.f32 %v1398, %v1414
      %1419 = vset.pattern.permute.xlu0 7
      %1420 = vperm.xlu0 %1419, %v1281
      %v1421 = vpop.permute.xlu0 %1420
      %1423 = vset.pattern.permute.xlu0 7
      %1424 = vperm.xlu0 %1423, %v1282
      %v1425 = vpop.permute.xlu0 %1424
      %v1427 = vmul.f32 %v1421, %v1283
      %v1428 = vmul.f32 %v1425, %v1284
      %1431 = vrot.lane.b32.xlu0 %v1427, 15
      %v1432 = vpop.permute.xlu0 %1431
      %1433 = vrot.lane.b32.xlu0 %v1428, 15
      %v1434 = vpop.permute.xlu0 %1433
      %v1437 = vadd.f32 %v1417, %v1432
      %v1438 = vadd.f32 %v1418, %v1434
      %1439 = vset.pattern.permute.xlu0 8
      %1440 = vperm.xlu0 %1439, %v1281
      %v1441 = vpop.permute.xlu0 %1440
      %1443 = vset.pattern.permute.xlu0 8
      %1444 = vperm.xlu0 %1443, %v1282
      %v1445 = vpop.permute.xlu0 %1444
      %v1447 = vmul.f32 %v1441, %v1283
      %v1448 = vmul.f32 %v1445, %v1284
      %1451 = vrot.lane.b32.xlu0 %v1447, 127
      %v1452 = vpop.permute.xlu0 %1451
      %1453 = vrot.lane.b32.xlu0 %v1448, 127
      %v1454 = vpop.permute.xlu0 %1453
      %v1457 = vadd.f32 %v1437, %v1452
      %v1458 = vadd.f32 %v1438, %v1454
      %1461 = vrot.lane.b32.xlu0 %v1457, 126
      %v1462 = vpop.permute.xlu0 %1461
      %1463 = vrot.lane.b32.xlu0 %v1458, 126
      %v1464 = vpop.permute.xlu0 %1463
      %vm1467 = vcmask 367856
      %1468 = vst.msk [vmem:[#allocation4] sm:$0xff] %vm1467, %v1462
      %1469 = vst.msk [vmem:[#allocation4 + $0x8] sm:$0xff] %vm1467, %v1464
      %v1470 = vld [vmem:[%s4] sm:$0xff]
      %v1471 = vld [vmem:[%s4 + $0x8] sm:$0xff]
      %v1472 = vld [vmem:[#allocation3] sm:$0xff]
      %v1473 = vld [vmem:[#allocation3 + $0x8] sm:$0xff]
      %1475 = vset.pattern.permute.xlu0 0
      %1476 = vperm.xlu0 %1475, %v1470
      %v1477 = vpop.permute.xlu0 %1476
      %1480 = vset.pattern.permute.xlu0 0
      %1481 = vperm.xlu0 %1480, %v1471
      %v1482 = vpop.permute.xlu0 %1481
      %v1484 = vmul.f32 %v1477, %v1472
      %v1485 = vmul.f32 %v1482, %v1473
      %v1486 = vadd.f32 %v1484, 0.0
      %v1487 = vadd.f32 %v1485, 0.0
      %1488 = vset.pattern.permute.xlu0 1
      %1489 = vperm.xlu0 %1488, %v1470
      %v1490 = vpop.permute.xlu0 %1489
      %1492 = vset.pattern.permute.xlu0 1
      %1493 = vperm.xlu0 %1492, %v1471
      %v1494 = vpop.permute.xlu0 %1493
      %v1496 = vmul.f32 %v1490, %v1472
      %v1497 = vmul.f32 %v1494, %v1473
      %1500 = vrot.lane.b32.xlu0 %v1496, 112
      %v1501 = vpop.permute.xlu0 %1500
      %1502 = vrot.lane.b32.xlu0 %v1497, 112
      %v1503 = vpop.permute.xlu0 %1502
      %v1506 = vadd.f32 %v1486, %v1501
      %v1507 = vadd.f32 %v1487, %v1503
      %1508 = vset.pattern.permute.xlu0 2
      %1509 = vperm.xlu0 %1508, %v1470
      %v1510 = vpop.permute.xlu0 %1509
      %1512 = vset.pattern.permute.xlu0 2
      %1513 = vperm.xlu0 %1512, %v1471
      %v1514 = vpop.permute.xlu0 %1513
      %v1516 = vmul.f32 %v1510, %v1472
      %v1517 = vmul.f32 %v1514, %v1473
      %1520 = vrot.lane.b32.xlu0 %v1516, 95
      %v1521 = vpop.permute.xlu0 %1520
      %1522 = vrot.lane.b32.xlu0 %v1517, 95
      %v1523 = vpop.permute.xlu0 %1522
      %v1526 = vadd.f32 %v1506, %v1521
      %v1527 = vadd.f32 %v1507, %v1523
      %1528 = vset.pattern.permute.xlu0 3
      %1529 = vperm.xlu0 %1528, %v1470
      %v1530 = vpop.permute.xlu0 %1529
      %1532 = vset.pattern.permute.xlu0 3
      %1533 = vperm.xlu0 %1532, %v1471
      %v1534 = vpop.permute.xlu0 %1533
      %v1536 = vmul.f32 %v1530, %v1472
      %v1537 = vmul.f32 %v1534, %v1473
      %1540 = vrot.lane.b32.xlu0 %v1536, 79
      %v1541 = vpop.permute.xlu0 %1540
      %1542 = vrot.lane.b32.xlu0 %v1537, 79
      %v1543 = vpop.permute.xlu0 %1542
      %v1546 = vadd.f32 %v1526, %v1541
      %v1547 = vadd.f32 %v1527, %v1543
      %1548 = vset.pattern.permute.xlu0 4
      %1549 = vperm.xlu0 %1548, %v1470
      %v1550 = vpop.permute.xlu0 %1549
      %1552 = vset.pattern.permute.xlu0 4
      %1553 = vperm.xlu0 %1552, %v1471
      %v1554 = vpop.permute.xlu0 %1553
      %v1556 = vmul.f32 %v1550, %v1472
      %v1557 = vmul.f32 %v1554, %v1473
      %1560 = vrot.lane.b32.xlu0 %v1556, 63
      %v1561 = vpop.permute.xlu0 %1560
      %1562 = vrot.lane.b32.xlu0 %v1557, 63
      %v1563 = vpop.permute.xlu0 %1562
      %v1566 = vadd.f32 %v1546, %v1561
      %v1567 = vadd.f32 %v1547, %v1563
      %1568 = vset.pattern.permute.xlu0 5
      %1569 = vperm.xlu0 %1568, %v1470
      %v1570 = vpop.permute.xlu0 %1569
      %1572 = vset.pattern.permute.xlu0 5
      %1573 = vperm.xlu0 %1572, %v1471
      %v1574 = vpop.permute.xlu0 %1573
      %v1576 = vmul.f32 %v1570, %v1472
      %v1577 = vmul.f32 %v1574, %v1473
      %1580 = vrot.lane.b32.xlu0 %v1576, 47
      %v1581 = vpop.permute.xlu0 %1580
      %1582 = vrot.lane.b32.xlu0 %v1577, 47
      %v1583 = vpop.permute.xlu0 %1582
      %v1586 = vadd.f32 %v1566, %v1581
      %v1587 = vadd.f32 %v1567, %v1583
      %1588 = vset.pattern.permute.xlu0 6
      %1589 = vperm.xlu0 %1588, %v1470
      %v1590 = vpop.permute.xlu0 %1589
      %1592 = vset.pattern.permute.xlu0 6
      %1593 = vperm.xlu0 %1592, %v1471
      %v1594 = vpop.permute.xlu0 %1593
      %v1596 = vmul.f32 %v1590, %v1472
      %v1597 = vmul.f32 %v1594, %v1473
      %1600 = vrot.lane.b32.xlu0 %v1596, 31
      %v1601 = vpop.permute.xlu0 %1600
      %1602 = vrot.lane.b32.xlu0 %v1597, 31
      %v1603 = vpop.permute.xlu0 %1602
      %v1606 = vadd.f32 %v1586, %v1601
      %v1607 = vadd.f32 %v1587, %v1603
      %1608 = vset.pattern.permute.xlu0 7
      %1609 = vperm.xlu0 %1608, %v1470
      %v1610 = vpop.permute.xlu0 %1609
      %1612 = vset.pattern.permute.xlu0 7
      %1613 = vperm.xlu0 %1612, %v1471
      %v1614 = vpop.permute.xlu0 %1613
      %v1616 = vmul.f32 %v1610, %v1472
      %v1617 = vmul.f32 %v1614, %v1473
      %1620 = vrot.lane.b32.xlu0 %v1616, 15
      %v1621 = vpop.permute.xlu0 %1620
      %1622 = vrot.lane.b32.xlu0 %v1617, 15
      %v1623 = vpop.permute.xlu0 %1622
      %v1626 = vadd.f32 %v1606, %v1621
      %v1627 = vadd.f32 %v1607, %v1623
      %1628 = vset.pattern.permute.xlu0 8
      %1629 = vperm.xlu0 %1628, %v1470
      %v1630 = vpop.permute.xlu0 %1629
      %1632 = vset.pattern.permute.xlu0 8
      %1633 = vperm.xlu0 %1632, %v1471
      %v1634 = vpop.permute.xlu0 %1633
      %v1636 = vmul.f32 %v1630, %v1472
      %v1637 = vmul.f32 %v1634, %v1473
      %1640 = vrot.lane.b32.xlu0 %v1636, 127
      %v1641 = vpop.permute.xlu0 %1640
      %1642 = vrot.lane.b32.xlu0 %v1637, 127
      %v1643 = vpop.permute.xlu0 %1642
      %v1646 = vadd.f32 %v1626, %v1641
      %v1647 = vadd.f32 %v1627, %v1643
      %1650 = vrot.lane.b32.xlu0 %v1646, 77
      %v1651 = vpop.permute.xlu0 %1650
      %1652 = vrot.lane.b32.xlu0 %v1647, 77
      %v1653 = vpop.permute.xlu0 %1652
      %vm1656 = vcmask 490856
      %1657 = vst.msk [vmem:[#allocation4] sm:$0xff] %vm1656, %v1651
      %1658 = vst.msk [vmem:[#allocation4 + $0x8] sm:$0xff] %vm1656, %v1653
      %v1659 = vld [vmem:[#allocation4] sm:$0xff]
      %v1660 = vld [vmem:[#allocation4 + $0x8] sm:$0xff]
      %v1661 = vld [vmem:[%s5] sm:$0xff]
      %v1662 = vld [vmem:[%s5 + $0x8] sm:$0xff]
      %1664 = vset.pattern.permute.xlu0 0
      %1665 = vperm.xlu0 %1664, %v1661
      %v1666 = vpop.permute.xlu0 %1665
      %1669 = vset.pattern.permute.xlu0 0
      %1670 = vperm.xlu0 %1669, %v1662
      %v1671 = vpop.permute.xlu0 %1670
      %v1673 = vadd.f32 %v1659, %v1666
      %v1674 = vadd.f32 %v1660, %v1671
      %v1675 = vld [vmem:[%s6] sm:$0xff]
      %v1676 = vld [vmem:[%s6 + $0x8] sm:$0xff]
      %v1677 = vld [vmem:[%s6 + $0x10] sm:$0xff]
      %v1678 = vld [vmem:[%s6 + $0x18] sm:$0xff]
      %v1679 = vld [vmem:[%s7] sm:$0xff]
      %v1680 = vld [vmem:[%s7 + $0x8] sm:$0xff]
      %v1681 = vld [vmem:[%s7 + $0x10] sm:$0xff]
      %v1682 = vld [vmem:[%s7 + $0x18] sm:$0xff]
      %1684 = vset.pattern.permute.xlu0 0
      %1685 = vperm.xlu0 %1684, %v1679
      %v1686 = vpop.permute.xlu0 %1685
      %1689 = vset.pattern.permute.xlu0 0
      %1690 = vperm.xlu0 %1689, %v1680
      %v1691 = vpop.permute.xlu0 %1690
      %1694 = vset.pattern.permute.xlu0 0
      %1695 = vperm.xlu0 %1694, %v1681
      %v1696 = vpop.permute.xlu0 %1695
      %1699 = vset.pattern.permute.xlu0 0
      %1700 = vperm.xlu0 %1699, %v1682
      %v1701 = vpop.permute.xlu0 %1700
      %v1704 = vsel %vm524, %v1675, 0
      %v1707 = vsel %vm524, %v1676, 0
      %v1710 = vsel %vm524, %v1677, 0
      %v1713 = vsel %vm524, %v1678, 0
      %1715 = vmatpush.msra.mxu0 0.0
      %1716 = vmatpush.msra.mxu0 0.0
      %1717 = vmatpush.msra.mxu0 0.0
      %1718 = vmatpush.msra.mxu0 0.0
      %1719 = vmatpush.msra.mxu0 0.0
      %1720 = vmatpush.msra.mxu0 0.0
      %1721 = vmatpush.msra.mxu0 0.0
      %1722 = vmatpush.msra.mxu0 0.0
      %1723 = vmatpush.msra.mxu0 0.0
      %1724 = vmatpush.msra.mxu0 0.0
      %1725 = vmatpush.msra.mxu0 0.0
      %1726 = vmatpush.msra.mxu0 0.0
      %1727 = vmatpush.msra.mxu0 0.0
      %1728 = vmatpush.msra.mxu0 0.0
      %1729 = vmatpush.msra.mxu0 %v1674
      %1730 = vmatpush.msra.mxu0 %v1673
      %1731 = vmatmul.f32.gmra.mxu0 %v1704
      %v1732 = vpop.f32.mrf.mxu0
      %v1733 = vadd.f32 %v1686, %v1732
      %1734 = vmatmul.f32.gmra.mxu0 %v1707
      %v1735 = vpop.f32.mrf.mxu0
      %v1736 = vadd.f32 %v1691, %v1735
      %1737 = vmatmul.f32.gmra.mxu0 %v1710
      %v1738 = vpop.f32.mrf.mxu0
      %v1739 = vadd.f32 %v1696, %v1738
      %1740 = vmatmul.f32.gmra.mxu0 %v1713
      %v1741 = vpop.f32.mrf.mxu0
      %v1742 = vadd.f32 %v1701, %v1741
      %1743 = vdwg.mxu0
      %v1744 = vmax.f32 %v1733, 0.0
      %v1745 = vmax.f32 %v1736, 0.0
      %v1746 = vmax.f32 %v1739, 0.0
      %v1747 = vmax.f32 %v1742, 0.0
      %v1748 = vld [vmem:[%s8] sm:$0xff]
      %v1749 = vld [vmem:[%s8 + $0x8] sm:$0xff]
      %v1750 = vld [vmem:[%s8 + $0x10] sm:$0xff]
      %v1751 = vld [vmem:[%s8 + $0x18] sm:$0xff]
      %1753 = vset.pattern.permute.xlu0 0
      %1754 = vperm.xlu0 %1753, %v1748
      %v1755 = vpop.permute.xlu0 %1754
      %1758 = vset.pattern.permute.xlu0 0
      %1759 = vperm.xlu0 %1758, %v1749
      %v1760 = vpop.permute.xlu0 %1759
      %1763 = vset.pattern.permute.xlu0 0
      %1764 = vperm.xlu0 %1763, %v1750
      %v1765 = vpop.permute.xlu0 %1764
      %1768 = vset.pattern.permute.xlu0 0
      %1769 = vperm.xlu0 %1768, %v1751
      %v1770 = vpop.permute.xlu0 %1769
      %v1772 = vmul.f32 %v1744, %v1755
      %v1773 = vmul.f32 %v1745, %v1760
      %v1774 = vmul.f32 %v1746, %v1765
      %v1775 = vmul.f32 %v1747, %v1770
      %v1776 = vld [vmem:[%s9] sm:$0xff]
      %v1777 = vld [vmem:[%s9 + $0x8] sm:$0xff]
      %v1778 = vld [vmem:[%s9 + $0x10] sm:$0xff]
      %v1779 = vld [vmem:[%s9 + $0x18] sm:$0xff]
      %1781 = vset.pattern.permute.xlu0 0
      %1782 = vperm.xlu0 %1781, %v1776
      %v1783 = vpop.permute.xlu0 %1782
      %1786 = vset.pattern.permute.xlu0 0
      %1787 = vperm.xlu0 %1786, %v1777
      %v1788 = vpop.permute.xlu0 %1787
      %1791 = vset.pattern.permute.xlu0 0
      %1792 = vperm.xlu0 %1791, %v1778
      %v1793 = vpop.permute.xlu0 %1792
      %1796 = vset.pattern.permute.xlu0 0
      %1797 = vperm.xlu0 %1796, %v1779
      %v1798 = vpop.permute.xlu0 %1797
      %v1800 = vadd.f32 %v1772, %v1783
      %v1801 = vadd.f32 %v1773, %v1788
      %v1802 = vadd.f32 %v1774, %v1793
      %v1803 = vadd.f32 %v1775, %v1798
      %vm1804 = vcmask 490496
      %1805 = vst.msk [vmem:[#allocation5] sm:$0xff] %vm1804, %v1800
      %1806 = vst.msk [vmem:[#allocation5 + $0x8] sm:$0xff] %vm1804, %v1801
      %1807 = vst.msk [vmem:[#allocation5 + $0x10] sm:$0xff] %vm1804, %v1802
      %1808 = vst.msk [vmem:[#allocation5 + $0x18] sm:$0xff] %vm1804, %v1803
      %v1809 = vld [vmem:[#allocation5] sm:$0xff]
      %v1810 = vld [vmem:[#allocation5 + $0x8] sm:$0xff]
      %v1811 = vld [vmem:[#allocation5 + $0x10] sm:$0xff]
      %v1812 = vld [vmem:[#allocation5 + $0x18] sm:$0xff]
      %1817 = vrot.lane.b32.xlu0 %v1809, 98
      %v1818 = vpop.permute.xlu0 %1817
      %1819 = vrot.lane.b32.xlu0 %v1810, 98
      %v1820 = vpop.permute.xlu0 %1819
      %1821 = vrot.lane.b32.xlu0 %v1811, 98
      %v1822 = vpop.permute.xlu0 %1821
      %1823 = vrot.lane.b32.xlu0 %v1812, 98
      %v1824 = vpop.permute.xlu0 %1823
      %v1829 = vadd.f32 %v1809, %v1818
      %v1830 = vadd.f32 %v1810, %v1820
      %v1831 = vadd.f32 %v1811, %v1822
      %v1832 = vadd.f32 %v1812, %v1824
      %v1833 = vmul.f32 %v1829, 0.5
      %v1834 = vmul.f32 %v1830, 0.5
      %v1835 = vmul.f32 %v1831, 0.5
      %v1836 = vmul.f32 %v1832, 0.5
      %vm1837 = vcmask 244736
      %1838 = vst.msk [vmem:[#allocation6] sm:$0xff] %vm1837, %v1833
      %1839 = vst.msk [vmem:[#allocation6 + $0x8] sm:$0xff] %vm1837, %v1834
      %1840 = vst.msk [vmem:[#allocation6 + $0x10] sm:$0xff] %vm1837, %v1835
      %1841 = vst.msk [vmem:[#allocation6 + $0x18] sm:$0xff] %vm1837, %v1836
      %v1842 = vld [vmem:[%s10] sm:$0xff]
      %v1843 = vld [vmem:[%s10 + $0x8] sm:$0xff]
      %v1844 = vld [vmem:[%s10 + $0x10] sm:$0xff]
      %v1845 = vld [vmem:[%s10 + $0x18] sm:$0xff]
      %v1846 = vld [vmem:[#allocation6] sm:$0xff]
      %v1847 = vld [vmem:[#allocation6 + $0x8] sm:$0xff]
      %v1848 = vld [vmem:[#allocation6 + $0x10] sm:$0xff]
      %v1849 = vld [vmem:[#allocation6 + $0x18] sm:$0xff]
      %1851 = vset.pattern.permute.xlu0 0
      %1852 = vperm.xlu0 %1851, %v1842
      %v1853 = vpop.permute.xlu0 %1852
      %1856 = vset.pattern.permute.xlu0 0
      %1857 = vperm.xlu0 %1856, %v1843
      %v1858 = vpop.permute.xlu0 %1857
      %1861 = vset.pattern.permute.xlu0 0
      %1862 = vperm.xlu0 %1861, %v1844
      %v1863 = vpop.permute.xlu0 %1862
      %1866 = vset.pattern.permute.xlu0 0
      %1867 = vperm.xlu0 %1866, %v1845
      %v1868 = vpop.permute.xlu0 %1867
      %v1870 = vmul.f32 %v1853, %v1846
      %v1871 = vmul.f32 %v1858, %v1847
      %v1872 = vmul.f32 %v1863, %v1848
      %v1873 = vmul.f32 %v1868, %v1849
      %v1874 = vadd.f32 %v1870, 0.0
      %v1875 = vadd.f32 %v1871, 0.0
      %v1876 = vadd.f32 %v1872, 0.0
      %v1877 = vadd.f32 %v1873, 0.0
      %1878 = vset.pattern.permute.xlu0 1
      %1879 = vperm.xlu0 %1878, %v1842
      %v1880 = vpop.permute.xlu0 %1879
      %1882 = vset.pattern.permute.xlu0 1
      %1883 = vperm.xlu0 %1882, %v1843
      %v1884 = vpop.permute.xlu0 %1883
      %1886 = vset.pattern.permute.xlu0 1
      %1887 = vperm.xlu0 %1886, %v1844
      %v1888 = vpop.permute.xlu0 %1887
      %1890 = vset.pattern.permute.xlu0 1
      %1891 = vperm.xlu0 %1890, %v1845
      %v1892 = vpop.permute.xlu0 %1891
      %v1894 = vmul.f32 %v1880, %v1846
      %v1895 = vmul.f32 %v1884, %v1847
      %v1896 = vmul.f32 %v1888, %v1848
      %v1897 = vmul.f32 %v1892, %v1849
      %1902 = vrot.lane.b32.xlu0 %v1894, 113
      %v1903 = vpop.permute.xlu0 %1902
      %1904 = vrot.lane.b32.xlu0 %v1895, 113
      %v1905 = vpop.permute.xlu0 %1904
      %1906 = vrot.lane.b32.xlu0 %v1896, 113
      %v1907 = vpop.permute.xlu0 %1906
      %1908 = vrot.lane.b32.xlu0 %v1897, 113
      %v1909 = vpop.permute.xlu0 %1908
      %v1914 = vadd.f32 %v1874, %v1903
      %v1915 = vadd.f32 %v1875, %v1905
      %v1916 = vadd.f32 %v1876, %v1907
      %v1917 = vadd.f32 %v1877, %v1909
      %1918 = vset.pattern.permute.xlu0 2
      %1919 = vperm.xlu0 %1918, %v1842
      %v1920 = vpop.permute.xlu0 %1919
      %1922 = vset.pattern.permute.xlu0 2
      %1923 = vperm.xlu0 %1922, %v1843
      %v1924 = vpop.permute.xlu0 %1923
      %1926 = vset.pattern.permute.xlu0 2
      %1927 = vperm.xlu0 %1926, %v1844
      %v1928 = vpop.permute.xlu0 %1927
      %1930 = vset.pattern.permute.xlu0 2
      %1931 = vperm.xlu0 %1930, %v1845
      %v1932 = vpop.permute.xlu0 %1931
      %v1934 = vmul.f32 %v1920, %v1846
      %v1935 = vmul.f32 %v1924, %v1847
      %v1936 = vmul.f32 %v1928, %v1848
      %v1937 = vmul.f32 %v1932, %v1849
      %1942 = vrot.lane.b32.xlu0 %v1934, 127
      %v1943 = vpop.permute.xlu0 %1942
      %1944 = vrot.lane.b32.xlu0 %v1935, 127
      %v1945 = vpop.permute.xlu0 %1944
      %1946 = vrot.lane.b32.xlu0 %v1936, 127
      %v1947 = vpop.permute.xlu0 %1946
      %1948 = vrot.lane.b32.xlu0 %v1937, 127
      %v1949 = vpop.permute.xlu0 %1948
      %v1954 = vadd.f32 %v1914, %v1943
      %v1955 = vadd.f32 %v1915, %v1945
      %v1956 = vadd.f32 %v1916, %v1947
      %v1957 = vadd.f32 %v1917, %v1949
      %1958 = vset.pattern.permute.xlu0 3
      %1959 = vperm.xlu0 %1958, %v1842
      %v1960 = vpop.permute.xlu0 %1959
      %1962 = vset.pattern.permute.xlu0 3
      %1963 = vperm.xlu0 %1962, %v1843
      %v1964 = vpop.permute.xlu0 %1963
      %1966 = vset.pattern.permute.xlu0 3
      %1967 = vperm.xlu0 %1966, %v1844
      %v1968 = vpop.permute.xlu0 %1967
      %1970 = vset.pattern.permute.xlu0 3
      %1971 = vperm.xlu0 %1970, %v1845
      %v1972 = vpop.permute.xlu0 %1971
      %v1974 = vmul.f32 %v1960, %v1846
      %v1975 = vmul.f32 %v1964, %v1847
      %v1976 = vmul.f32 %v1968, %v1848
      %v1977 = vmul.f32 %v1972, %v1849
      %1982 = vrot.lane.b32.xlu0 %v1974, 112
      %v1983 = vpop.permute.xlu0 %1982
      %1984 = vrot.lane.b32.xlu0 %v1975, 112
      %v1985 = vpop.permute.xlu0 %1984
      %1986 = vrot.lane.b32.xlu0 %v1976, 112
      %v1987 = vpop.permute.xlu0 %1986
      %1988 = vrot.lane.b32.xlu0 %v1977, 112
      %v1989 = vpop.permute.xlu0 %1988
      %v1994 = vadd.f32 %v1954, %v1983
      %v1995 = vadd.f32 %v1955, %v1985
      %v1996 = vadd.f32 %v1956, %v1987
      %v1997 = vadd.f32 %v1957, %v1989
      %1998 = vset.pattern.permute.xlu0 4
      %1999 = vperm.xlu0 %1998, %v1842
      %v2000 = vpop.permute.xlu0 %1999
      %2002 = vset.pattern.permute.xlu0 4
      %2003 = vperm.xlu0 %2002, %v1843
      %v2004 = vpop.permute.xlu0 %2003
      %2006 = vset.pattern.permute.xlu0 4
      %2007 = vperm.xlu0 %2006, %v1844
      %v2008 = vpop.permute.xlu0 %2007
      %2010 = vset.pattern.permute.xlu0 4
      %2011 = vperm.xlu0 %2010, %v1845
      %v2012 = vpop.permute.xlu0 %2011
      %v2014 = vmul.f32 %v2000, %v1846
      %v2015 = vmul.f32 %v2004, %v1847
      %v2016 = vmul.f32 %v2008, %v1848
      %v2017 = vmul.f32 %v2012, %v1849
      %2022 = vrot.lane.b32.xlu0 %v2014, 126
      %v2023 = vpop.permute.xlu0 %2022
      %2024 = vrot.lane.b32.xlu0 %v2015, 126
      %v2025 = vpop.permute.xlu0 %2024
      %2026 = vrot.lane.b32.xlu0 %v2016, 126
      %v2027 = vpop.permute.xlu0 %2026
      %2028 = vrot.lane.b32.xlu0 %v2017, 126
      %v2029 = vpop.permute.xlu0 %2028
      %v2034 = vadd.f32 %v1994, %v2023
      %v2035 = vadd.f32 %v1995, %v2025
      %v2036 = vadd.f32 %v1996, %v2027
      %v2037 = vadd.f32 %v1997, %v2029
      %vm2038 = vcmask 105472
      %2039 = vst.msk [vmem:[#allocation7] sm:$0xff] %vm2038, %v2034
      %2040 = vst.msk [vmem:[#allocation7 + $0x8] sm:$0xff] %vm2038, %v2035
      %2041 = vst.msk [vmem:[#allocation7 + $0x10] sm:$0xff] %vm2038, %v2036
      %2042 = vst.msk [vmem:[#allocation7 + $0x18] sm:$0xff] %vm2038, %v2037
      %v2043 = vld [vmem:[%s10] sm:$0xff]
      %v2044 = vld [vmem:[%s10 + $0x8] sm:$0xff]
      %v2045 = vld [vmem:[%s10 + $0x10] sm:$0xff]
      %v2046 = vld [vmem:[%s10 + $0x18] sm:$0xff]
      %v2047 = vld [vmem:[#allocation6] sm:$0xff]
      %v2048 = vld [vmem:[#allocation6 + $0x8] sm:$0xff]
      %v2049 = vld [vmem:[#allocation6 + $0x10] sm:$0xff]
      %v2050 = vld [vmem:[#allocation6 + $0x18] sm:$0xff]
      %2052 = vset.pattern.permute.xlu0 0
      %2053 = vperm.xlu0 %2052, %v2043
      %v2054 = vpop.permute.xlu0 %2053
      %2057 = vset.pattern.permute.xlu0 0
      %2058 = vperm.xlu0 %2057, %v2044
      %v2059 = vpop.permute.xlu0 %2058
      %2062 = vset.pattern.permute.xlu0 0
      %2063 = vperm.xlu0 %2062, %v2045
      %v2064 = vpop.permute.xlu0 %2063
      %2067 = vset.pattern.permute.xlu0 0
      %2068 = vperm.xlu0 %2067, %v2046
      %v2069 = vpop.permute.xlu0 %2068
      %v2071 = vmul.f32 %v2054, %v2047
      %v2072 = vmul.f32 %v2059, %v2048
      %v2073 = vmul.f32 %v2064, %v2049
      %v2074 = vmul.f32 %v2069, %v2050
      %v2075 = vadd.f32 %v2071, 0.0
      %v2076 = vadd.f32 %v2072, 0.0
      %v2077 = vadd.f32 %v2073, 0.0
      %v2078 = vadd.f32 %v2074, 0.0
      %2079 = vset.pattern.permute.xlu0 1
      %2080 = vperm.xlu0 %2079, %v2043
      %v2081 = vpop.permute.xlu0 %2080
      %2083 = vset.pattern.permute.xlu0 1
      %2084 = vperm.xlu0 %2083, %v2044
      %v2085 = vpop.permute.xlu0 %2084
      %2087 = vset.pattern.permute.xlu0 1
      %2088 = vperm.xlu0 %2087, %v2045
      %v2089 = vpop.permute.xlu0 %2088
      %2091 = vset.pattern.permute.xlu0 1
      %2092 = vperm.xlu0 %2091, %v2046
      %v2093 = vpop.permute.xlu0 %2092
      %v2095 = vmul.f32 %v2081, %v2047
      %v2096 = vmul.f32 %v2085, %v2048
      %v2097 = vmul.f32 %v2089, %v2049
      %v2098 = vmul.f32 %v2093, %v2050
      %2103 = vrot.lane.b32.xlu0 %v2095, 14
      %v2104 = vpop.permute.xlu0 %2103
      %2105 = vrot.lane.b32.xlu0 %v2096, 14
      %v2106 = vpop.permute.xlu0 %2105
      %2107 = vrot.lane.b32.xlu0 %v2097, 14
      %v2108 = vpop.permute.xlu0 %2107
      %2109 = vrot.lane.b32.xlu0 %v2098, 14
      %v2110 = vpop.permute.xlu0 %2109
      %v2115 = vadd.f32 %v2075, %v2104
      %v2116 = vadd.f32 %v2076, %v2106
      %v2117 = vadd.f32 %v2077, %v2108
      %v2118 = vadd.f32 %v2078, %v2110
      %2119 = vset.pattern.permute.xlu0 2
      %2120 = vperm.xlu0 %2119, %v2043
      %v2121 = vpop.permute.xlu0 %2120
      %2123 = vset.pattern.permute.xlu0 2
      %2124 = vperm.xlu0 %2123, %v2044
      %v2125 = vpop.permute.xlu0 %2124
      %2127 = vset.pattern.permute.xlu0 2
      %2128 = vperm.xlu0 %2127, %v2045
      %v2129 = vpop.permute.xlu0 %2128
      %2131 = vset.pattern.permute.xlu0 2
      %2132 = vperm.xlu0 %2131, %v2046
      %v2133 = vpop.permute.xlu0 %2132
      %v2135 = vmul.f32 %v2121, %v2047
      %v2136 = vmul.f32 %v2125, %v2048
      %v2137 = vmul.f32 %v2129, %v2049
      %v2138 = vmul.f32 %v2133, %v2050
      %2143 = vrot.lane.b32.xlu0 %v2135, 127
      %v2144 = vpop.permute.xlu0 %2143
      %2145 = vrot.lane.b32.xlu0 %v2136, 127
      %v2146 = vpop.permute.xlu0 %2145
      %2147 = vrot.lane.b32.xlu0 %v2137, 127
      %v2148 = vpop.permute.xlu0 %2147
      %2149 = vrot.lane.b32.xlu0 %v2138, 127
      %v2150 = vpop.permute.xlu0 %2149
      %v2155 = vadd.f32 %v2115, %v2144
      %v2156 = vadd.f32 %v2116, %v2146
      %v2157 = vadd.f32 %v2117, %v2148
      %v2158 = vadd.f32 %v2118, %v2150
      %2159 = vset.pattern.permute.xlu0 3
      %2160 = vperm.xlu0 %2159, %v2043
      %v2161 = vpop.permute.xlu0 %2160
      %2163 = vset.pattern.permute.xlu0 3
      %2164 = vperm.xlu0 %2163, %v2044
      %v2165 = vpop.permute.xlu0 %2164
      %2167 = vset.pattern.permute.xlu0 3
      %2168 = vperm.xlu0 %2167, %v2045
      %v2169 = vpop.permute.xlu0 %2168
      %2171 = vset.pattern.permute.xlu0 3
      %2172 = vperm.xlu0 %2171, %v2046
      %v2173 = vpop.permute.xlu0 %2172
      %v2175 = vmul.f32 %v2161, %v2047
      %v2176 = vmul.f32 %v2165, %v2048
      %v2177 = vmul.f32 %v2169, %v2049
      %v2178 = vmul.f32 %v2173, %v2050
      %2183 = vrot.lane.b32.xlu0 %v2175, 13
      %v2184 = vpop.permute.xlu0 %2183
      %2185 = vrot.lane.b32.xlu0 %v2176, 13
      %v2186 = vpop.permute.xlu0 %2185
      %2187 = vrot.lane.b32.xlu0 %v2177, 13
      %v2188 = vpop.permute.xlu0 %2187
      %2189 = vrot.lane.b32.xlu0 %v2178, 13
      %v2190 = vpop.permute.xlu0 %2189
      %v2195 = vadd.f32 %v2155, %v2184
      %v2196 = vadd.f32 %v2156, %v2186
      %v2197 = vadd.f32 %v2157, %v2188
      %v2198 = vadd.f32 %v2158, %v2190
      %2199 = vset.pattern.permute.xlu0 4
      %2200 = vperm.xlu0 %2199, %v2043
      %v2201 = vpop.permute.xlu0 %2200
      %2203 = vset.pattern.permute.xlu0 4
      %2204 = vperm.xlu0 %2203, %v2044
      %v2205 = vpop.permute.xlu0 %2204
      %2207 = vset.pattern.permute.xlu0 4
      %2208 = vperm.xlu0 %2207, %v2045
      %v2209 = vpop.permute.xlu0 %2208
      %2211 = vset.pattern.permute.xlu0 4
      %2212 = vperm.xlu0 %2211, %v2046
      %v2213 = vpop.permute.xlu0 %2212
      %v2215 = vmul.f32 %v2201, %v2047
      %v2216 = vmul.f32 %v2205, %v2048
      %v2217 = vmul.f32 %v2209, %v2049
      %v2218 = vmul.f32 %v2213, %v2050
      %2223 = vrot.lane.b32.xlu0 %v2215, 126
      %v2224 = vpop.permute.xlu0 %2223
      %2225 = vrot.lane.b32.xlu0 %v2216, 126
      %v2226 = vpop.permute.xlu0 %2225
      %2227 = vrot.lane.b32.xlu0 %v2217, 126
      %v2228 = vpop.permute.xlu0 %2227
      %2229 = vrot.lane.b32.xlu0 %v2218, 126
      %v2230 = vpop.permute.xlu0 %2229
      %v2235 = vadd.f32 %v2195, %v2224
      %v2236 = vadd.f32 %v2196, %v2226
      %v2237 = vadd.f32 %v2197, %v2228
      %v2238 = vadd.f32 %v2198, %v2230
      %2243 = vrot.lane.b32.xlu0 %v2235, 126
      %v2244 = vpop.permute.xlu0 %2243
      %2245 = vrot.lane.b32.xlu0 %v2236, 126
      %v2246 = vpop.permute.xlu0 %2245
      %2247 = vrot.lane.b32.xlu0 %v2237, 126
      %v2248 = vpop.permute.xlu0 %2247
      %2249 = vrot.lane.b32.xlu0 %v2238, 126
      %v2250 = vpop.permute.xlu0 %2249
      %vm2255 = vcmask 212072
      %2256 = vst.msk [vmem:[#allocation7] sm:$0xff] %vm2255, %v2244
      %2257 = vst.msk [vmem:[#allocation7 + $0x8] sm:$0xff] %vm2255, %v2246
      %2258 = vst.msk [vmem:[#allocation7 + $0x10] sm:$0xff] %vm2255, %v2248
      %2259 = vst.msk [vmem:[#allocation7 + $0x18] sm:$0xff] %vm2255, %v2250
      %v2260 = vld [vmem:[#allocation7] sm:$0xff]
      %v2261 = vld [vmem:[#allocation7 + $0x8] sm:$0xff]
      %v2262 = vld [vmem:[#allocation7 + $0x10] sm:$0xff]
      %v2263 = vld [vmem:[#allocation7 + $0x18] sm:$0xff]
      %v2264 = vld [vmem:[%s11] sm:$0xff]
      %v2265 = vld [vmem:[%s11 + $0x8] sm:$0xff]
      %v2266 = vld [vmem:[%s11 + $0x10] sm:$0xff]
      %v2267 = vld [vmem:[%s11 + $0x18] sm:$0xff]
      %2269 = vset.pattern.permute.xlu0 0
      %2270 = vperm.xlu0 %2269, %v2264
      %v2271 = vpop.permute.xlu0 %2270
      %2274 = vset.pattern.permute.xlu0 0
      %2275 = vperm.xlu0 %2274, %v2265
      %v2276 = vpop.permute.xlu0 %2275
      %2279 = vset.pattern.permute.xlu0 0
      %2280 = vperm.xlu0 %2279, %v2266
      %v2281 = vpop.permute.xlu0 %2280
      %2284 = vset.pattern.permute.xlu0 0
      %2285 = vperm.xlu0 %2284, %v2267
      %v2286 = vpop.permute.xlu0 %2285
      %v2288 = vadd.f32 %v2260, %v2271
      %v2289 = vadd.f32 %v2261, %v2276
      %v2290 = vadd.f32 %v2262, %v2281
      %v2291 = vadd.f32 %v2263, %v2286
      %v2292 = vld [vmem:[%s12] sm:$0xff]
      %v2293 = vld [vmem:[%s12 + $0x8] sm:$0xff]
      %v2294 = vld [vmem:[%s12 + $0x10] sm:$0xff]
      %v2295 = vld [vmem:[%s12 + $0x18] sm:$0xff]
      %v2296 = vld [vmem:[%s13] sm:$0xff]
      %v2297 = vld [vmem:[%s13 + $0x8] sm:$0xff]
      %v2298 = vld [vmem:[%s13 + $0x10] sm:$0xff]
      %v2299 = vld [vmem:[%s13 + $0x18] sm:$0xff]
      %2301 = vset.pattern.permute.xlu0 0
      %2302 = vperm.xlu0 %2301, %v2296
      %v2303 = vpop.permute.xlu0 %2302
      %2306 = vset.pattern.permute.xlu0 0
      %2307 = vperm.xlu0 %2306, %v2297
      %v2308 = vpop.permute.xlu0 %2307
      %2311 = vset.pattern.permute.xlu0 0
      %2312 = vperm.xlu0 %2311, %v2298
      %v2313 = vpop.permute.xlu0 %2312
      %2316 = vset.pattern.permute.xlu0 0
      %2317 = vperm.xlu0 %2316, %v2299
      %v2318 = vpop.permute.xlu0 %2317
      %vm2320 = vcmask 261120
      %v2322 = vsel %vm2320, %v2292, 0
      %v2325 = vsel %vm2320, %v2293, 0
      %v2328 = vsel %vm2320, %v2294, 0
      %v2331 = vsel %vm2320, %v2295, 0
      %2333 = vmatpush.msra.mxu0 0.0
      %2334 = vmatpush.msra.mxu0 0.0
      %2335 = vmatpush.msra.mxu0 0.0
      %2336 = vmatpush.msra.mxu0 0.0
      %2337 = vmatpush.msra.mxu0 0.0
      %2338 = vmatpush.msra.mxu0 0.0
      %2339 = vmatpush.msra.mxu0 0.0
      %2340 = vmatpush.msra.mxu0 0.0
      %2341 = vmatpush.msra.mxu0 0.0
      %2342 = vmatpush.msra.mxu0 0.0
      %2343 = vmatpush.msra.mxu0 0.0
      %2344 = vmatpush.msra.mxu0 0.0
      %2345 = vmatpush.msra.mxu0 %v2291
      %2346 = vmatpush.msra.mxu0 %v2290
      %2347 = vmatpush.msra.mxu0 %v2289
      %2348 = vmatpush.msra.mxu0 %v2288
      %2349 = vmatmul.f32.gmra.mxu0 %v2322
      %v2350 = vpop.f32.mrf.mxu0
      %v2351 = vadd.f32 %v2303, %v2350
      %2352 = vmatmul.f32.gmra.mxu0 %v2325
      %v2353 = vpop.f32.mrf.mxu0
      %v2354 = vadd.f32 %v2308, %v2353
      %2355 = vmatmul.f32.gmra.mxu0 %v2328
      %v2356 = vpop.f32.mrf.mxu0
      %v2357 = vadd.f32 %v2313, %v2356
      %2358 = vmatmul.f32.gmra.mxu0 %v2331
      %v2359 = vpop.f32.mrf.mxu0
      %v2360 = vadd.f32 %v2318, %v2359
      %2361 = vdwg.mxu0
      %v2362 = vmax.f32 %v2351, 0.0
      %v2363 = vmax.f32 %v2354, 0.0
      %v2364 = vmax.f32 %v2357, 0.0
      %v2365 = vmax.f32 %v2360, 0.0
      %v2366 = vld [vmem:[%s14] sm:$0xff]
      %v2367 = vld [vmem:[%s14 + $0x8] sm:$0xff]
      %v2368 = vld [vmem:[%s14 + $0x10] sm:$0xff]
      %v2369 = vld [vmem:[%s14 + $0x18] sm:$0xff]
      %2371 = vset.pattern.permute.xlu0 0
      %2372 = vperm.xlu0 %2371, %v2366
      %v2373 = vpop.permute.xlu0 %2372
      %2376 = vset.pattern.permute.xlu0 0
      %2377 = vperm.xlu0 %2376, %v2367
      %v2378 = vpop.permute.xlu0 %2377
      %2381 = vset.pattern.permute.xlu0 0
      %2382 = vperm.xlu0 %2381, %v2368
      %v2383 = vpop.permute.xlu0 %2382
      %2386 = vset.pattern.permute.xlu0 0
      %2387 = vperm.xlu0 %2386, %v2369
      %v2388 = vpop.permute.xlu0 %2387
      %v2390 = vmul.f32 %v2362, %v2373
      %v2391 = vmul.f32 %v2363, %v2378
      %v2392 = vmul.f32 %v2364, %v2383
      %v2393 = vmul.f32 %v2365, %v2388
      %v2394 = vld [vmem:[%s15] sm:$0xff]
      %v2395 = vld [vmem:[%s15 + $0x8] sm:$0xff]
      %v2396 = vld [vmem:[%s15 + $0x10] sm:$0xff]
      %v2397 = vld [vmem:[%s15 + $0x18] sm:$0xff]
      %2399 = vset.pattern.permute.xlu0 0
      %2400 = vperm.xlu0 %2399, %v2394
      %v2401 = vpop.permute.xlu0 %2400
      %2404 = vset.pattern.permute.xlu0 0
      %2405 = vperm.xlu0 %2404, %v2395
      %v2406 = vpop.permute.xlu0 %2405
      %2409 = vset.pattern.permute.xlu0 0
      %2410 = vperm.xlu0 %2409, %v2396
      %v2411 = vpop.permute.xlu0 %2410
      %2414 = vset.pattern.permute.xlu0 0
      %2415 = vperm.xlu0 %2414, %v2397
      %v2416 = vpop.permute.xlu0 %2415
      %v2418 = vadd.f32 %v2390, %v2401
      %v2419 = vadd.f32 %v2391, %v2406
      %v2420 = vadd.f32 %v2392, %v2411
      %v2421 = vadd.f32 %v2393, %v2416
      %vm2422 = vcmask 211968
      %2423 = vst.msk [vmem:[#allocation8] sm:$0xff] %vm2422, %v2418
      %2424 = vst.msk [vmem:[#allocation8 + $0x8] sm:$0xff] %vm2422, %v2419
      %2425 = vst.msk [vmem:[#allocation8 + $0x10] sm:$0xff] %vm2422, %v2420
      %2426 = vst.msk [vmem:[#allocation8 + $0x18] sm:$0xff] %vm2422, %v2421
      %v2427 = vld [vmem:[#allocation8] sm:$0xff]
      %v2428 = vld [vmem:[#allocation8 + $0x8] sm:$0xff]
      %v2429 = vld [vmem:[#allocation8 + $0x10] sm:$0xff]
      %v2430 = vld [vmem:[#allocation8 + $0x18] sm:$0xff]
      %2435 = vrot.lane.b32.xlu0 %v2427, 115
      %v2436 = vpop.permute.xlu0 %2435
      %2437 = vrot.lane.b32.xlu0 %v2428, 115
      %v2438 = vpop.permute.xlu0 %2437
      %2439 = vrot.lane.b32.xlu0 %v2429, 115
      %v2440 = vpop.permute.xlu0 %2439
      %2441 = vrot.lane.b32.xlu0 %v2430, 115
      %v2442 = vpop.permute.xlu0 %2441
      %v2447 = vadd.f32 %v2427, %v2436
      %v2448 = vadd.f32 %v2428, %v2438
      %v2449 = vadd.f32 %v2429, %v2440
      %v2450 = vadd.f32 %v2430, %v2442
      %v2451 = vmul.f32 %v2447, 0.5
      %v2452 = vmul.f32 %v2448, 0.5
      %v2453 = vmul.f32 %v2449, 0.5
      %v2454 = vmul.f32 %v2450, 0.5
      %2455 = vst.msk [vmem:[%s521] sm:$0xff] %vm2038, %v2451
      %2456 = vst.msk [vmem:[%s521 + $0x8] sm:$0xff] %vm2038, %v2452
      %2457 = vst.msk [vmem:[%s521 + $0x10] sm:$0xff] %vm2038, %v2453
      %2458 = vst.msk [vmem:[%s521 + $0x18] sm:$0xff] %vm2038, %v2454
      %p2459 = scmp.lt.s32.totalorder %s27, 1
      %s2460 = scalar_select %p2459, %s27, 1
      %s2461 = smul.addr %s2460, 4
      %s2462 = smul.addr %s2461, 8
      %s2463 = scalar_lea.vmem %s16, %s2462
      // Predicated region
      $region85: #{tpu_custom_call.1} parent=83 // pred_check
        %p2464 = pneg %p386
      $region86: #{tpu_custom_call.1} parent=83 // pred_check_branch
        %2466 = sbr.rel (%p2464) target = $region88
      $region87: #{tpu_custom_call.1} parent=83 // pred_region
        _
      $region88: #{tpu_custom_call.1} parent=83 // pred_fallthru
        _
    $region84: #{tpu_custom_call.1} parent=5 // pred_fallthru
      _
    %p2467 = scmp.le.s32.totalorder 2, %s22
    // Predicated region
    $region89: #{tpu_custom_call.1} parent=5 // pred_check
      %p2468 = pneg %p2467
    $region90: #{tpu_custom_call.1} parent=5 // pred_check_branch
      %2470 = sbr.rel (%p2468) target = $region92
    $region91: #{tpu_custom_call.1} parent=5 // pred_region
      %s2471 = ssub.s32 %s22, 2
      // Predicated region
      $region93: #{tpu_custom_call.1} parent=91 // pred_check
        %p2472 = pneg %p392
      $region94: #{tpu_custom_call.1} parent=91 // pred_check_branch
        %2474 = sbr.rel (%p2472) target = $region96
      $region95: #{tpu_custom_call.1} parent=91 // pred_region
        %p2475 = scmp.lt.s32.totalorder %s28, 1
        %s2476 = scalar_select %p2475, %s28, 1
        %s2477 = smul.addr %s2476, 4
        %s2478 = smul.addr %s2477, 8
        %s2479 = scalar_lea.vmem %s16, %s2478
      $region96: #{tpu_custom_call.1} parent=91 // pred_fallthru
        _
    $region92: #{tpu_custom_call.1} parent=5 // pred_fallthru
      _
  $region6: #{tpu_custom_call.1} parent=0 // loop_footer
    %s26 = sadd.s32 1, %s22
  $region7: #{tpu_custom_call.1} parent=0 // loop_footer_branch
    %21 = sbr.rel target = $region3
  $region8: #{tpu_custom_call.1} parent=0 // loop_exit
    _

</llo_original>
